<compile_context>
chip_gen: v6e
topology: v6e:2x2x1
jax: 0.10.0
libtpu: 0.0.40
codegen_flags: <defaults>
</compile_context>

<pallas_src>
import functools
import math

import jax
import jax.numpy as jnp
from jax.experimental import pallas as pl
from jax.experimental.pallas import tpu as pltpu

EPS = 1e-5
MATMUL_DTYPE = jnp.bfloat16   # MXU operand dtype; accumulation stays float32.


# ---------------------------------------------------------------------------
# Fully fused BasicBlock kernel
# ---------------------------------------------------------------------------
def _basic_block_kernel(*refs, n_phases, tap_specs, n, oh, ow, cin, planes,
                        has_ds, eps):
    phases = [refs[i][...] for i in range(n_phases)]   # bf16 padded/phase-split x
    i = n_phases
    w1_ref, g1_ref, b1_ref, w2_ref, g2_ref, b2_ref = refs[i:i + 6]
    i += 6
    if has_ds:
        xs_ref, wd_ref, gd_ref, bd_ref = refs[i:i + 4]
        i += 4
    else:
        res_ref = refs[i]
        i += 1
    out_ref = refs[i]                                  # (M, planes) float32

    m = n * oh * ow
    n_taps = len(tap_specs)

    def batchnorm(acc, g, b):
        # Training-mode BN (biased variance), f32 throughout, var clamped >= 0.
        mu = jnp.mean(acc, axis=0, keepdims=True)
        xc = acc - mu
        var = jnp.maximum(jnp.mean(xc * xc, axis=0, keepdims=True), 0.0)
        return xc * (g * jax.lax.rsqrt(var + eps)) + b

    # ---- conv1: build lane-dense im2col (M, 9*Cin) once in VMEM, one MXU
    # matmul -- tap accumulation happens inside the MXU, not on the VPU. ----
    wins = [jax.lax.slice(phases[p], (0, h0, w0, 0),
                          (n, h0 + oh, w0 + ow, cin))
            for (p, h0, w0) in tap_specs]
    lhs1 = jnp.concatenate(wins, axis=-1).reshape(m, n_taps * cin)
    acc1 = jnp.dot(lhs1, w1_ref[...], preferred_element_type=jnp.float32)
    h1 = jnp.maximum(batchnorm(acc1, g1_ref[...], b1_ref[...]), 0.0)

    # ---- conv2 (3x3, stride 1, pad 1) on the in-VMEM intermediate: zero-pad
    # spatially by concatenation, then the same im2col + single matmul. ----
    h4 = h1.reshape(n, oh, ow, planes).astype(w2_ref.dtype)   # bf16 MXU operand
    zw = jnp.zeros((n, oh, 1, planes), h4.dtype)
    zh = jnp.zeros((n, 1, ow + 2, planes), h4.dtype)
    hp = jnp.concatenate([zh, jnp.concatenate([zw, h4, zw], axis=2), zh],
                         axis=1)                              # (n, oh+2, ow+2, planes)
    wins2 = [jax.lax.slice(hp, (0, di, dj, 0), (n, di + oh, dj + ow, planes))
             for di in range(3) for dj in range(3)]
    lhs2 = jnp.concatenate(wins2, axis=-1).reshape(m, 9 * planes)
    acc2 = jnp.dot(lhs2, w2_ref[...], preferred_element_type=jnp.float32)
    y = batchnorm(acc2, g2_ref[...], b2_ref[...])

    # ---- residual path (shares the same kernel invocation) ----
    if has_ds:
        accd = jnp.dot(xs_ref[...], wd_ref[...],
                       preferred_element_type=jnp.float32)
        r = batchnorm(accd, gd_ref[...], bd_ref[...])
    else:
        r = res_ref[...]                                      # identity (f32 x)

    # out += residual; relu(out)
    out_ref[...] = jnp.maximum(y + r, 0.0)


def basic_block_encoder(x, p):
    """x: (N, H, W, Cin) float32 NHWC -> (N, OH, OW, planes) float32 NHWC."""
    n, h, w_, cin = x.shape
    planes = p['bn1_g'].shape[0]
    s = p['stride']
    k, pad = 3, 1

    # Stage activations in bf16 once (halves pad/phase-split HBM traffic and
    # removes all per-tap in-kernel casts).
    xb = x.astype(MATMUL_DTYPE)
    xp = jnp.pad(xb, ((0, 0), (pad, pad), (pad, pad), (0, 0)))
    hp_, wp_ = h + 2 * pad, w_ + 2 * pad
    oh = (hp_ - k) // s + 1
    ow = (wp_ - k) // s + 1
    m = n * oh * ow

    # Phase decomposition handles the conv stride with plain slices whose total
    # size equals the padded input; every in-kernel window read then becomes a
    # contiguous static slice.
    used = sorted({(di % s, dj % s) for di in range(k) for dj in range(k)})
    pid = {ph: i for i, ph in enumerate(used)}
    phases = [xp[:, a::s, b::s, :] for (a, b) in used]
    tap_specs = tuple((pid[(di % s, dj % s)], di // s, dj // s)
                      for di in range(k) for dj in range(k))

    has_ds = p['downsample'] is not None

    inputs = list(phases)
    inputs += [
        p['conv1_w'].reshape(k * k * cin, planes).astype(MATMUL_DTYPE),
        p['bn1_g'].reshape(1, planes).astype(jnp.float32),
        p['bn1_b'].reshape(1, planes).astype(jnp.float32),
        p['conv2_w'].reshape(k * k * planes, planes).astype(MATMUL_DTYPE),
        p['bn2_g'].reshape(1, planes).astype(jnp.float32),
        p['bn2_b'].reshape(1, planes).astype(jnp.float32),
    ]
    if has_ds:
        dw, dg, db = p['downsample']
        xs = xb[:, ::s, ::s, :][:, :oh, :ow, :].reshape(m, cin)  # 1x1-conv input
        inputs += [xs,
                   dw.reshape(cin, planes).astype(MATMUL_DTYPE),
                   dg.reshape(1, planes).astype(jnp.float32),
                   db.reshape(1, planes).astype(jnp.float32)]
    else:
        assert s == 1 and cin == planes
        inputs.append(x.reshape(m, planes))   # identity residual in f32

    kernel = functools.partial(
        _basic_block_kernel,
        n_phases=len(phases), tap_specs=tap_specs,
        n=n, oh=oh, ow=ow, cin=cin, planes=planes,
        has_ds=has_ds, eps=EPS)

    # Whole-array VMEM blocks: total VMEM footprint here is ~1-2 MiB, well
    # under the default scoped limit on v5e/v6e/v7x.
    out2d = pl.pallas_call(
        kernel,
        out_shape=jax.ShapeDtypeStruct((m, planes), jnp.float32),
        in_specs=[pl.BlockSpec(memory_space=pltpu.MemorySpace.VMEM)
                  for _ in inputs],
        out_specs=pl.BlockSpec(memory_space=pltpu.MemorySpace.VMEM),
    )(*inputs)
    return out2d.reshape(n, oh, ow, planes)


def make_block_params(key, inplanes, planes, stride=1):
    """Downsample (1x1 conv + BN) is created exactly when the standard ResNet
    _make_layer would create it (stride != 1 or inplanes != planes)."""
    k1, k2, k3 = jax.random.split(key, 3)

    def conv_w(k, ksize, cin, cout):
        fan_out = ksize * ksize * cout
        return (jax.random.normal(k, (ksize * ksize, cin, cout), jnp.float32)
                * math.sqrt(2.0 / fan_out))

    p = {
        'stride': stride,
        'conv1_w': conv_w(k1, 3, inplanes, planes),
        'bn1_g': jnp.ones((planes,), jnp.float32),
        'bn1_b': jnp.zeros((planes,), jnp.float32),
        'conv2_w': conv_w(k2, 3, planes, planes),
        'bn2_g': jnp.ones((planes,), jnp.float32),
        'bn2_b': jnp.zeros((planes,), jnp.float32),
    }
    if stride != 1 or inplanes != planes:
        p['downsample'] = (conv_w(k3, 1, inplanes, planes),
                           jnp.ones((planes,), jnp.float32),
                           jnp.zeros((planes,), jnp.float32))
    else:
        p['downsample'] = None
    return p


# ---------------------------------------------------------------------------
# Pure-XLA reference (same bf16-operand / f32-accumulate policy) for checking
# ---------------------------------------------------------------------------
def _ref_conv(x, w, ksize, stride, pad):
    whwio = w.reshape(ksize, ksize, w.shape[1], w.shape[2]).astype(MATMUL_DTYPE)
    return jax.lax.conv_general_dilated(
        x.astype(MATMUL_DTYPE), whwio,
        window_strides=(stride, stride),
        padding=((pad, pad), (pad, pad)),
        dimension_numbers=('NHWC', 'HWIO', 'NHWC'),
        preferred_element_type=jnp.float32)


def _ref_bn(y, g, b):
    mu = jnp.mean(y, axis=(0, 1, 2), keepdims=True)
    var = jnp.mean((y - mu) ** 2, axis=(0, 1, 2), keepdims=True)
    return (y - mu) * jax.lax.rsqrt(var + EPS) * g + b


def _ref_block(x, p):
    s = p['stride']
    out = jax.nn.relu(_ref_bn(_ref_conv(x, p['conv1_w'], 3, s, 1),
                              p['bn1_g'], p['bn1_b']))
    if p['downsample'] is not None:
        dw, dg, db = p['downsample']
        residual = _ref_bn(_ref_conv(x, dw, 1, s, 0), dg, db)
    else:
        residual = x
    out = _ref_bn(_ref_conv(out, p['conv2_w'], 3, 1, 1),
                  p['bn2_g'], p['bn2_b']) + residual
    return jax.nn.relu(out)


if __name__ == "__main__":
    key = jax.random.PRNGKey(0)
    k_x, k_b1, k_b2 = jax.random.split(key, 3)

    N, C_IN, H, W = 2, 64, 16, 16
    PLANES = 128

    x_nchw = jax.random.normal(k_x, (N, C_IN, H, W), jnp.float32)
    blk1 = make_block_params(k_b1, C_IN, PLANES, stride=2)    # downsample path
    blk2 = make_block_params(k_b2, PLANES, PLANES, stride=1)  # identity path

    @jax.jit
    def forward(x):
        xh = jnp.transpose(x, (0, 2, 3, 1))      # NCHW -> NHWC (once)
        xh = basic_block_encoder(xh, blk1)       # one fused pallas_call
        xh = basic_block_encoder(xh, blk2)       # one fused pallas_call
        return jnp.transpose(xh, (0, 3, 1, 2))   # back to NCHW

    out = jax.block_until_ready(forward(x_nchw))
    assert out.shape == (N, PLANES, H // 2, W // 2)
    assert bool(jnp.all(jnp.isfinite(out)))
    assert bool(jnp.all(out >= 0.0))             # final ReLU

    # Structural correctness check against a pure-XLA reference using the same
    # bf16-operand / f32-accumulate matmul policy.
    @jax.jit
    def ref_forward(x):
        xh = jnp.transpose(x, (0, 2, 3, 1))
        xh = _ref_block(xh, blk1)
        xh = _ref_block(xh, blk2)
        return jnp.transpose(xh, (0, 3, 1, 2))

    ref = jax.block_until_ready(ref_forward(x_nchw))
    err = float(jnp.max(jnp.abs(out - ref)))
    assert err < 5e-2, f"mismatch vs reference: max abs err {err}"

    print("KERNEL_OK")
</pallas_src>

<mosaic_0001>
module attributes {stable_mosaic.version = 11 : i64} {
  func.func @_basic_block_kernel(%arg0: memref<2x9x9x64xbf16, #tpu.memory_space<vmem>>, %arg1: memref<2x9x9x64xbf16, #tpu.memory_space<vmem>>, %arg2: memref<2x9x9x64xbf16, #tpu.memory_space<vmem>>, %arg3: memref<2x9x9x64xbf16, #tpu.memory_space<vmem>>, %arg4: memref<576x128xbf16, #tpu.memory_space<vmem>>, %arg5: memref<1x128xf32, #tpu.memory_space<vmem>>, %arg6: memref<1x128xf32, #tpu.memory_space<vmem>>, %arg7: memref<1152x128xbf16, #tpu.memory_space<vmem>>, %arg8: memref<1x128xf32, #tpu.memory_space<vmem>>, %arg9: memref<1x128xf32, #tpu.memory_space<vmem>>, %arg10: memref<128x64xbf16, #tpu.memory_space<vmem>>, %arg11: memref<64x128xbf16, #tpu.memory_space<vmem>>, %arg12: memref<1x128xf32, #tpu.memory_space<vmem>>, %arg13: memref<1x128xf32, #tpu.memory_space<vmem>>, %arg14: memref<128x128xf32, #tpu.memory_space<vmem>>) attributes {dimension_semantics = [], scalar_prefetch = 0 : i64, scratch_operands = 0 : i64, tpu.core_type = #tpu.core_type<tc>} {
    %c0 = arith.constant 0 : index
    %c0_0 = arith.constant 0 : index
    %c0_1 = arith.constant 0 : index
    %c0_2 = arith.constant 0 : index
    %0 = vector.load %arg0[%c0, %c0_0, %c0_1, %c0_2] : memref<2x9x9x64xbf16, #tpu.memory_space<vmem>>, vector<2x9x9x64xbf16>
    %c0_3 = arith.constant 0 : index
    %c0_4 = arith.constant 0 : index
    %c0_5 = arith.constant 0 : index
    %c0_6 = arith.constant 0 : index
    %1 = vector.load %arg1[%c0_3, %c0_4, %c0_5, %c0_6] : memref<2x9x9x64xbf16, #tpu.memory_space<vmem>>, vector<2x9x9x64xbf16>
    %c0_7 = arith.constant 0 : index
    %c0_8 = arith.constant 0 : index
    %c0_9 = arith.constant 0 : index
    %c0_10 = arith.constant 0 : index
    %2 = vector.load %arg2[%c0_7, %c0_8, %c0_9, %c0_10] : memref<2x9x9x64xbf16, #tpu.memory_space<vmem>>, vector<2x9x9x64xbf16>
    %c0_11 = arith.constant 0 : index
    %c0_12 = arith.constant 0 : index
    %c0_13 = arith.constant 0 : index
    %c0_14 = arith.constant 0 : index
    %3 = vector.load %arg3[%c0_11, %c0_12, %c0_13, %c0_14] : memref<2x9x9x64xbf16, #tpu.memory_space<vmem>>, vector<2x9x9x64xbf16>
    %4 = vector.extract_strided_slice %0 {offsets = [0, 0, 0, 0], sizes = [2, 8, 8, 64], strides = [1, 1, 1, 1]} : vector<2x9x9x64xbf16> to vector<2x8x8x64xbf16>
    %5 = vector.extract_strided_slice %1 {offsets = [0, 0, 0, 0], sizes = [2, 8, 8, 64], strides = [1, 1, 1, 1]} : vector<2x9x9x64xbf16> to vector<2x8x8x64xbf16>
    %6 = vector.extract_strided_slice %0 {offsets = [0, 0, 1, 0], sizes = [2, 8, 8, 64], strides = [1, 1, 1, 1]} : vector<2x9x9x64xbf16> to vector<2x8x8x64xbf16>
    %7 = vector.extract_strided_slice %2 {offsets = [0, 0, 0, 0], sizes = [2, 8, 8, 64], strides = [1, 1, 1, 1]} : vector<2x9x9x64xbf16> to vector<2x8x8x64xbf16>
    %8 = vector.extract_strided_slice %3 {offsets = [0, 0, 0, 0], sizes = [2, 8, 8, 64], strides = [1, 1, 1, 1]} : vector<2x9x9x64xbf16> to vector<2x8x8x64xbf16>
    %9 = vector.extract_strided_slice %2 {offsets = [0, 0, 1, 0], sizes = [2, 8, 8, 64], strides = [1, 1, 1, 1]} : vector<2x9x9x64xbf16> to vector<2x8x8x64xbf16>
    %10 = vector.extract_strided_slice %0 {offsets = [0, 1, 0, 0], sizes = [2, 8, 8, 64], strides = [1, 1, 1, 1]} : vector<2x9x9x64xbf16> to vector<2x8x8x64xbf16>
    %11 = vector.extract_strided_slice %1 {offsets = [0, 1, 0, 0], sizes = [2, 8, 8, 64], strides = [1, 1, 1, 1]} : vector<2x9x9x64xbf16> to vector<2x8x8x64xbf16>
    %12 = vector.extract_strided_slice %0 {offsets = [0, 1, 1, 0], sizes = [2, 8, 8, 64], strides = [1, 1, 1, 1]} : vector<2x9x9x64xbf16> to vector<2x8x8x64xbf16>
    %13 = tpu.concatenate %4, %5, %6, %7, %8, %9, %10, %11, %12 in 3 : vector<2x8x8x64xbf16>, vector<2x8x8x64xbf16>, vector<2x8x8x64xbf16>, vector<2x8x8x64xbf16>, vector<2x8x8x64xbf16>, vector<2x8x8x64xbf16>, vector<2x8x8x64xbf16>, vector<2x8x8x64xbf16>, vector<2x8x8x64xbf16> -> vector<2x8x8x576xbf16>
    %14 = vector.shape_cast %13 : vector<2x8x8x576xbf16> to vector<128x576xbf16>
    %c0_15 = arith.constant 0 : index
    %c0_16 = arith.constant 0 : index
    %15 = vector.load %arg4[%c0_15, %c0_16] : memref<576x128xbf16, #tpu.memory_space<vmem>>, vector<576x128xbf16>
    %cst = arith.constant dense<0.000000e+00> : vector<128x128xf32>
    %16 = tpu.matmul %14, %15, %cst {dimension_numbers = #tpu.dot_dimension_numbers<[1], [0], [0], [1], [0, 0, 1, 1], [], []>} : vector<128x576xbf16>, vector<576x128xbf16>, vector<128x128xf32> -> vector<128x128xf32>
    %c0_17 = arith.constant 0 : index
    %c0_18 = arith.constant 0 : index
    %17 = vector.load %arg5[%c0_17, %c0_18] : memref<1x128xf32, #tpu.memory_space<vmem>>, vector<1x128xf32>
    %c0_19 = arith.constant 0 : index
    %c0_20 = arith.constant 0 : index
    %18 = vector.load %arg6[%c0_19, %c0_20] : memref<1x128xf32, #tpu.memory_space<vmem>>, vector<1x128xf32>
    %cst_21 = arith.constant dense<0.000000e+00> : vector<128xf32>
    %19 = vector.multi_reduction <add>, %16, %cst_21 [0] : vector<128x128xf32> to vector<128xf32>
    %20 = vector.shape_cast %19 : vector<128xf32> to vector<1x128xf32>
    %cst_22 = arith.constant 1.280000e+02 : f32
    %21 = vector.broadcast %cst_22 : f32 to vector<1x128xf32>
    %22 = arith.divf %20, %21 : vector<1x128xf32>
    %23 = vector.broadcast %22 : vector<1x128xf32> to vector<128x128xf32>
    %24 = arith.subf %16, %23 : vector<128x128xf32>
    %25 = arith.mulf %24, %24 : vector<128x128xf32>
    %cst_23 = arith.constant dense<0.000000e+00> : vector<128xf32>
    %26 = vector.multi_reduction <add>, %25, %cst_23 [0] : vector<128x128xf32> to vector<128xf32>
    %27 = vector.shape_cast %26 : vector<128xf32> to vector<1x128xf32>
    %cst_24 = arith.constant 1.280000e+02 : f32
    %28 = vector.broadcast %cst_24 : f32 to vector<1x128xf32>
    %29 = arith.divf %27, %28 : vector<1x128xf32>
    %cst_25 = arith.constant 0.000000e+00 : f32
    %30 = vector.broadcast %cst_25 : f32 to vector<1x128xf32>
    %31 = arith.maximumf %29, %30 : vector<1x128xf32>
    %cst_26 = arith.constant 9.99999974E-6 : f32
    %32 = vector.broadcast %cst_26 : f32 to vector<1x128xf32>
    %33 = arith.addf %31, %32 : vector<1x128xf32>
    %34 = math.rsqrt %33 : vector<1x128xf32>
    %35 = arith.mulf %17, %34 : vector<1x128xf32>
    %36 = vector.broadcast %35 : vector<1x128xf32> to vector<128x128xf32>
    %37 = arith.mulf %24, %36 : vector<128x128xf32>
    %38 = vector.broadcast %18 : vector<1x128xf32> to vector<128x128xf32>
    %39 = arith.addf %37, %38 : vector<128x128xf32>
    %cst_27 = arith.constant 0.000000e+00 : f32
    %40 = vector.broadcast %cst_27 : f32 to vector<128x128xf32>
    %41 = arith.maximumf %39, %40 : vector<128x128xf32>
    %42 = vector.shape_cast %41 : vector<128x128xf32> to vector<2x8x8x128xf32>
    %43 = arith.truncf %42 : vector<2x8x8x128xf32> to vector<2x8x8x128xbf16>
    %cst_28 = arith.constant 0.000000e+00 : bf16
    %44 = vector.broadcast %cst_28 : bf16 to vector<2x8x1x128xbf16>
    %cst_29 = arith.constant 0.000000e+00 : bf16
    %45 = vector.broadcast %cst_29 : bf16 to vector<2x1x10x128xbf16>
    %46 = tpu.concatenate %44, %43, %44 in 2 : vector<2x8x1x128xbf16>, vector<2x8x8x128xbf16>, vector<2x8x1x128xbf16> -> vector<2x8x10x128xbf16>
    %47 = tpu.concatenate %45, %46, %45 in 1 : vector<2x1x10x128xbf16>, vector<2x8x10x128xbf16>, vector<2x1x10x128xbf16> -> vector<2x10x10x128xbf16>
    %48 = vector.extract_strided_slice %47 {offsets = [0, 0, 0, 0], sizes = [2, 8, 8, 128], strides = [1, 1, 1, 1]} : vector<2x10x10x128xbf16> to vector<2x8x8x128xbf16>
    %49 = vector.extract_strided_slice %47 {offsets = [0, 0, 1, 0], sizes = [2, 8, 8, 128], strides = [1, 1, 1, 1]} : vector<2x10x10x128xbf16> to vector<2x8x8x128xbf16>
    %50 = vector.extract_strided_slice %47 {offsets = [0, 0, 2, 0], sizes = [2, 8, 8, 128], strides = [1, 1, 1, 1]} : vector<2x10x10x128xbf16> to vector<2x8x8x128xbf16>
    %51 = vector.extract_strided_slice %47 {offsets = [0, 1, 0, 0], sizes = [2, 8, 8, 128], strides = [1, 1, 1, 1]} : vector<2x10x10x128xbf16> to vector<2x8x8x128xbf16>
    %52 = vector.extract_strided_slice %47 {offsets = [0, 1, 1, 0], sizes = [2, 8, 8, 128], strides = [1, 1, 1, 1]} : vector<2x10x10x128xbf16> to vector<2x8x8x128xbf16>
    %53 = vector.extract_strided_slice %47 {offsets = [0, 1, 2, 0], sizes = [2, 8, 8, 128], strides = [1, 1, 1, 1]} : vector<2x10x10x128xbf16> to vector<2x8x8x128xbf16>
    %54 = vector.extract_strided_slice %47 {offsets = [0, 2, 0, 0], sizes = [2, 8, 8, 128], strides = [1, 1, 1, 1]} : vector<2x10x10x128xbf16> to vector<2x8x8x128xbf16>
    %55 = vector.extract_strided_slice %47 {offsets = [0, 2, 1, 0], sizes = [2, 8, 8, 128], strides = [1, 1, 1, 1]} : vector<2x10x10x128xbf16> to vector<2x8x8x128xbf16>
    %56 = vector.extract_strided_slice %47 {offsets = [0, 2, 2, 0], sizes = [2, 8, 8, 128], strides = [1, 1, 1, 1]} : vector<2x10x10x128xbf16> to vector<2x8x8x128xbf16>
    %57 = tpu.concatenate %48, %49, %50, %51, %52, %53, %54, %55, %56 in 3 : vector<2x8x8x128xbf16>, vector<2x8x8x128xbf16>, vector<2x8x8x128xbf16>, vector<2x8x8x128xbf16>, vector<2x8x8x128xbf16>, vector<2x8x8x128xbf16>, vector<2x8x8x128xbf16>, vector<2x8x8x128xbf16>, vector<2x8x8x128xbf16> -> vector<2x8x8x1152xbf16>
    %58 = vector.shape_cast %57 : vector<2x8x8x1152xbf16> to vector<128x1152xbf16>
    %c0_30 = arith.constant 0 : index
    %c0_31 = arith.constant 0 : index
    %59 = vector.load %arg7[%c0_30, %c0_31] : memref<1152x128xbf16, #tpu.memory_space<vmem>>, vector<1152x128xbf16>
    %cst_32 = arith.constant dense<0.000000e+00> : vector<128x128xf32>
    %60 = tpu.matmul %58, %59, %cst_32 {dimension_numbers = #tpu.dot_dimension_numbers<[1], [0], [0], [1], [0, 0, 1, 1], [], []>} : vector<128x1152xbf16>, vector<1152x128xbf16>, vector<128x128xf32> -> vector<128x128xf32>
    %c0_33 = arith.constant 0 : index
    %c0_34 = arith.constant 0 : index
    %61 = vector.load %arg8[%c0_33, %c0_34] : memref<1x128xf32, #tpu.memory_space<vmem>>, vector<1x128xf32>
    %c0_35 = arith.constant 0 : index
    %c0_36 = arith.constant 0 : index
    %62 = vector.load %arg9[%c0_35, %c0_36] : memref<1x128xf32, #tpu.memory_space<vmem>>, vector<1x128xf32>
    %cst_37 = arith.constant dense<0.000000e+00> : vector<128xf32>
    %63 = vector.multi_reduction <add>, %60, %cst_37 [0] : vector<128x128xf32> to vector<128xf32>
    %64 = vector.shape_cast %63 : vector<128xf32> to vector<1x128xf32>
    %cst_38 = arith.constant 1.280000e+02 : f32
    %65 = vector.broadcast %cst_38 : f32 to vector<1x128xf32>
    %66 = arith.divf %64, %65 : vector<1x128xf32>
    %67 = vector.broadcast %66 : vector<1x128xf32> to vector<128x128xf32>
    %68 = arith.subf %60, %67 : vector<128x128xf32>
    %69 = arith.mulf %68, %68 : vector<128x128xf32>
    %cst_39 = arith.constant dense<0.000000e+00> : vector<128xf32>
    %70 = vector.multi_reduction <add>, %69, %cst_39 [0] : vector<128x128xf32> to vector<128xf32>
    %71 = vector.shape_cast %70 : vector<128xf32> to vector<1x128xf32>
    %cst_40 = arith.constant 1.280000e+02 : f32
    %72 = vector.broadcast %cst_40 : f32 to vector<1x128xf32>
    %73 = arith.divf %71, %72 : vector<1x128xf32>
    %cst_41 = arith.constant 0.000000e+00 : f32
    %74 = vector.broadcast %cst_41 : f32 to vector<1x128xf32>
    %75 = arith.maximumf %73, %74 : vector<1x128xf32>
    %cst_42 = arith.constant 9.99999974E-6 : f32
    %76 = vector.broadcast %cst_42 : f32 to vector<1x128xf32>
    %77 = arith.addf %75, %76 : vector<1x128xf32>
    %78 = math.rsqrt %77 : vector<1x128xf32>
    %79 = arith.mulf %61, %78 : vector<1x128xf32>
    %80 = vector.broadcast %79 : vector<1x128xf32> to vector<128x128xf32>
    %81 = arith.mulf %68, %80 : vector<128x128xf32>
    %82 = vector.broadcast %62 : vector<1x128xf32> to vector<128x128xf32>
    %83 = arith.addf %81, %82 : vector<128x128xf32>
    %c0_43 = arith.constant 0 : index
    %c0_44 = arith.constant 0 : index
    %84 = vector.load %arg10[%c0_43, %c0_44] : memref<128x64xbf16, #tpu.memory_space<vmem>>, vector<128x64xbf16>
    %c0_45 = arith.constant 0 : index
    %c0_46 = arith.constant 0 : index
    %85 = vector.load %arg11[%c0_45, %c0_46] : memref<64x128xbf16, #tpu.memory_space<vmem>>, vector<64x128xbf16>
    %cst_47 = arith.constant dense<0.000000e+00> : vector<128x128xf32>
    %86 = tpu.matmul %84, %85, %cst_47 {dimension_numbers = #tpu.dot_dimension_numbers<[1], [0], [0], [1], [0, 0, 1, 1], [], []>} : vector<128x64xbf16>, vector<64x128xbf16>, vector<128x128xf32> -> vector<128x128xf32>
    %c0_48 = arith.constant 0 : index
    %c0_49 = arith.constant 0 : index
    %87 = vector.load %arg12[%c0_48, %c0_49] : memref<1x128xf32, #tpu.memory_space<vmem>>, vector<1x128xf32>
    %c0_50 = arith.constant 0 : index
    %c0_51 = arith.constant 0 : index
    %88 = vector.load %arg13[%c0_50, %c0_51] : memref<1x128xf32, #tpu.memory_space<vmem>>, vector<1x128xf32>
    %cst_52 = arith.constant dense<0.000000e+00> : vector<128xf32>
    %89 = vector.multi_reduction <add>, %86, %cst_52 [0] : vector<128x128xf32> to vector<128xf32>
    %90 = vector.shape_cast %89 : vector<128xf32> to vector<1x128xf32>
    %cst_53 = arith.constant 1.280000e+02 : f32
    %91 = vector.broadcast %cst_53 : f32 to vector<1x128xf32>
    %92 = arith.divf %90, %91 : vector<1x128xf32>
    %93 = vector.broadcast %92 : vector<1x128xf32> to vector<128x128xf32>
    %94 = arith.subf %86, %93 : vector<128x128xf32>
    %95 = arith.mulf %94, %94 : vector<128x128xf32>
    %cst_54 = arith.constant dense<0.000000e+00> : vector<128xf32>
    %96 = vector.multi_reduction <add>, %95, %cst_54 [0] : vector<128x128xf32> to vector<128xf32>
    %97 = vector.shape_cast %96 : vector<128xf32> to vector<1x128xf32>
    %cst_55 = arith.constant 1.280000e+02 : f32
    %98 = vector.broadcast %cst_55 : f32 to vector<1x128xf32>
    %99 = arith.divf %97, %98 : vector<1x128xf32>
    %cst_56 = arith.constant 0.000000e+00 : f32
    %100 = vector.broadcast %cst_56 : f32 to vector<1x128xf32>
    %101 = arith.maximumf %99, %100 : vector<1x128xf32>
    %cst_57 = arith.constant 9.99999974E-6 : f32
    %102 = vector.broadcast %cst_57 : f32 to vector<1x128xf32>
    %103 = arith.addf %101, %102 : vector<1x128xf32>
    %104 = math.rsqrt %103 : vector<1x128xf32>
    %105 = arith.mulf %87, %104 : vector<1x128xf32>
    %106 = vector.broadcast %105 : vector<1x128xf32> to vector<128x128xf32>
    %107 = arith.mulf %94, %106 : vector<128x128xf32>
    %108 = vector.broadcast %88 : vector<1x128xf32> to vector<128x128xf32>
    %109 = arith.addf %107, %108 : vector<128x128xf32>
    %110 = arith.addf %83, %109 : vector<128x128xf32>
    %cst_58 = arith.constant 0.000000e+00 : f32
    %111 = vector.broadcast %cst_58 : f32 to vector<128x128xf32>
    %112 = arith.maximumf %110, %111 : vector<128x128xf32>
    %c0_59 = arith.constant 0 : index
    %c0_60 = arith.constant 0 : index
    %113 = vector.load %arg14[%c0_59, %c0_60] : memref<128x128xf32, #tpu.memory_space<vmem>>, vector<128x128xf32>
    tpu.vector_store %arg14[%c0_59, %c0_60], %112 {strides = array<i32>} : memref<128x128xf32, #tpu.memory_space<vmem>>, vector<128x128xf32>,
    return
  }
}

module attributes {stable_mosaic.version = 11 : i64} {
  func.func @_basic_block_kernel(%arg0: memref<2x10x10x128xbf16, #tpu.memory_space<vmem>>, %arg1: memref<1152x128xbf16, #tpu.memory_space<vmem>>, %arg2: memref<1x128xf32, #tpu.memory_space<vmem>>, %arg3: memref<1x128xf32, #tpu.memory_space<vmem>>, %arg4: memref<1152x128xbf16, #tpu.memory_space<vmem>>, %arg5: memref<1x128xf32, #tpu.memory_space<vmem>>, %arg6: memref<1x128xf32, #tpu.memory_space<vmem>>, %arg7: memref<128x128xf32, #tpu.memory_space<vmem>>, %arg8: memref<128x128xf32, #tpu.memory_space<vmem>>) attributes {dimension_semantics = [], scalar_prefetch = 0 : i64, scratch_operands = 0 : i64, tpu.core_type = #tpu.core_type<tc>} {
    %c0 = arith.constant 0 : index
    %c0_0 = arith.constant 0 : index
    %c0_1 = arith.constant 0 : index
    %c0_2 = arith.constant 0 : index
    %0 = vector.load %arg0[%c0, %c0_0, %c0_1, %c0_2] : memref<2x10x10x128xbf16, #tpu.memory_space<vmem>>, vector<2x10x10x128xbf16>
    %1 = vector.extract_strided_slice %0 {offsets = [0, 0, 0, 0], sizes = [2, 8, 8, 128], strides = [1, 1, 1, 1]} : vector<2x10x10x128xbf16> to vector<2x8x8x128xbf16>
    %2 = vector.extract_strided_slice %0 {offsets = [0, 0, 1, 0], sizes = [2, 8, 8, 128], strides = [1, 1, 1, 1]} : vector<2x10x10x128xbf16> to vector<2x8x8x128xbf16>
    %3 = vector.extract_strided_slice %0 {offsets = [0, 0, 2, 0], sizes = [2, 8, 8, 128], strides = [1, 1, 1, 1]} : vector<2x10x10x128xbf16> to vector<2x8x8x128xbf16>
    %4 = vector.extract_strided_slice %0 {offsets = [0, 1, 0, 0], sizes = [2, 8, 8, 128], strides = [1, 1, 1, 1]} : vector<2x10x10x128xbf16> to vector<2x8x8x128xbf16>
    %5 = vector.extract_strided_slice %0 {offsets = [0, 1, 1, 0], sizes = [2, 8, 8, 128], strides = [1, 1, 1, 1]} : vector<2x10x10x128xbf16> to vector<2x8x8x128xbf16>
    %6 = vector.extract_strided_slice %0 {offsets = [0, 1, 2, 0], sizes = [2, 8, 8, 128], strides = [1, 1, 1, 1]} : vector<2x10x10x128xbf16> to vector<2x8x8x128xbf16>
    %7 = vector.extract_strided_slice %0 {offsets = [0, 2, 0, 0], sizes = [2, 8, 8, 128], strides = [1, 1, 1, 1]} : vector<2x10x10x128xbf16> to vector<2x8x8x128xbf16>
    %8 = vector.extract_strided_slice %0 {offsets = [0, 2, 1, 0], sizes = [2, 8, 8, 128], strides = [1, 1, 1, 1]} : vector<2x10x10x128xbf16> to vector<2x8x8x128xbf16>
    %9 = vector.extract_strided_slice %0 {offsets = [0, 2, 2, 0], sizes = [2, 8, 8, 128], strides = [1, 1, 1, 1]} : vector<2x10x10x128xbf16> to vector<2x8x8x128xbf16>
    %10 = tpu.concatenate %1, %2, %3, %4, %5, %6, %7, %8, %9 in 3 : vector<2x8x8x128xbf16>, vector<2x8x8x128xbf16>, vector<2x8x8x128xbf16>, vector<2x8x8x128xbf16>, vector<2x8x8x128xbf16>, vector<2x8x8x128xbf16>, vector<2x8x8x128xbf16>, vector<2x8x8x128xbf16>, vector<2x8x8x128xbf16> -> vector<2x8x8x1152xbf16>
    %11 = vector.shape_cast %10 : vector<2x8x8x1152xbf16> to vector<128x1152xbf16>
    %c0_3 = arith.constant 0 : index
    %c0_4 = arith.constant 0 : index
    %12 = vector.load %arg1[%c0_3, %c0_4] : memref<1152x128xbf16, #tpu.memory_space<vmem>>, vector<1152x128xbf16>
    %cst = arith.constant dense<0.000000e+00> : vector<128x128xf32>
    %13 = tpu.matmul %11, %12, %cst {dimension_numbers = #tpu.dot_dimension_numbers<[1], [0], [0], [1], [0, 0, 1, 1], [], []>} : vector<128x1152xbf16>, vector<1152x128xbf16>, vector<128x128xf32> -> vector<128x128xf32>
    %c0_5 = arith.constant 0 : index
    %c0_6 = arith.constant 0 : index
    %14 = vector.load %arg2[%c0_5, %c0_6] : memref<1x128xf32, #tpu.memory_space<vmem>>, vector<1x128xf32>
    %c0_7 = arith.constant 0 : index
    %c0_8 = arith.constant 0 : index
    %15 = vector.load %arg3[%c0_7, %c0_8] : memref<1x128xf32, #tpu.memory_space<vmem>>, vector<1x128xf32>
    %cst_9 = arith.constant dense<0.000000e+00> : vector<128xf32>
    %16 = vector.multi_reduction <add>, %13, %cst_9 [0] : vector<128x128xf32> to vector<128xf32>
    %17 = vector.shape_cast %16 : vector<128xf32> to vector<1x128xf32>
    %cst_10 = arith.constant 1.280000e+02 : f32
    %18 = vector.broadcast %cst_10 : f32 to vector<1x128xf32>
    %19 = arith.divf %17, %18 : vector<1x128xf32>
    %20 = vector.broadcast %19 : vector<1x128xf32> to vector<128x128xf32>
    %21 = arith.subf %13, %20 : vector<128x128xf32>
    %22 = arith.mulf %21, %21 : vector<128x128xf32>
    %cst_11 = arith.constant dense<0.000000e+00> : vector<128xf32>
    %23 = vector.multi_reduction <add>, %22, %cst_11 [0] : vector<128x128xf32> to vector<128xf32>
    %24 = vector.shape_cast %23 : vector<128xf32> to vector<1x128xf32>
    %cst_12 = arith.constant 1.280000e+02 : f32
    %25 = vector.broadcast %cst_12 : f32 to vector<1x128xf32>
    %26 = arith.divf %24, %25 : vector<1x128xf32>
    %cst_13 = arith.constant 0.000000e+00 : f32
    %27 = vector.broadcast %cst_13 : f32 to vector<1x128xf32>
    %28 = arith.maximumf %26, %27 : vector<1x128xf32>
    %cst_14 = arith.constant 9.99999974E-6 : f32
    %29 = vector.broadcast %cst_14 : f32 to vector<1x128xf32>
    %30 = arith.addf %28, %29 : vector<1x128xf32>
    %31 = math.rsqrt %30 : vector<1x128xf32>
    %32 = arith.mulf %14, %31 : vector<1x128xf32>
    %33 = vector.broadcast %32 : vector<1x128xf32> to vector<128x128xf32>
    %34 = arith.mulf %21, %33 : vector<128x128xf32>
    %35 = vector.broadcast %15 : vector<1x128xf32> to vector<128x128xf32>
    %36 = arith.addf %34, %35 : vector<128x128xf32>
    %cst_15 = arith.constant 0.000000e+00 : f32
    %37 = vector.broadcast %cst_15 : f32 to vector<128x128xf32>
    %38 = arith.maximumf %36, %37 : vector<128x128xf32>
    %39 = vector.shape_cast %38 : vector<128x128xf32> to vector<2x8x8x128xf32>
    %40 = arith.truncf %39 : vector<2x8x8x128xf32> to vector<2x8x8x128xbf16>
    %cst_16 = arith.constant 0.000000e+00 : bf16
    %41 = vector.broadcast %cst_16 : bf16 to vector<2x8x1x128xbf16>
    %cst_17 = arith.constant 0.000000e+00 : bf16
    %42 = vector.broadcast %cst_17 : bf16 to vector<2x1x10x128xbf16>
    %43 = tpu.concatenate %41, %40, %41 in 2 : vector<2x8x1x128xbf16>, vector<2x8x8x128xbf16>, vector<2x8x1x128xbf16> -> vector<2x8x10x128xbf16>
    %44 = tpu.concatenate %42, %43, %42 in 1 : vector<2x1x10x128xbf16>, vector<2x8x10x128xbf16>, vector<2x1x10x128xbf16> -> vector<2x10x10x128xbf16>
    %45 = vector.extract_strided_slice %44 {offsets = [0, 0, 0, 0], sizes = [2, 8, 8, 128], strides = [1, 1, 1, 1]} : vector<2x10x10x128xbf16> to vector<2x8x8x128xbf16>
    %46 = vector.extract_strided_slice %44 {offsets = [0, 0, 1, 0], sizes = [2, 8, 8, 128], strides = [1, 1, 1, 1]} : vector<2x10x10x128xbf16> to vector<2x8x8x128xbf16>
    %47 = vector.extract_strided_slice %44 {offsets = [0, 0, 2, 0], sizes = [2, 8, 8, 128], strides = [1, 1, 1, 1]} : vector<2x10x10x128xbf16> to vector<2x8x8x128xbf16>
    %48 = vector.extract_strided_slice %44 {offsets = [0, 1, 0, 0], sizes = [2, 8, 8, 128], strides = [1, 1, 1, 1]} : vector<2x10x10x128xbf16> to vector<2x8x8x128xbf16>
    %49 = vector.extract_strided_slice %44 {offsets = [0, 1, 1, 0], sizes = [2, 8, 8, 128], strides = [1, 1, 1, 1]} : vector<2x10x10x128xbf16> to vector<2x8x8x128xbf16>
    %50 = vector.extract_strided_slice %44 {offsets = [0, 1, 2, 0], sizes = [2, 8, 8, 128], strides = [1, 1, 1, 1]} : vector<2x10x10x128xbf16> to vector<2x8x8x128xbf16>
    %51 = vector.extract_strided_slice %44 {offsets = [0, 2, 0, 0], sizes = [2, 8, 8, 128], strides = [1, 1, 1, 1]} : vector<2x10x10x128xbf16> to vector<2x8x8x128xbf16>
    %52 = vector.extract_strided_slice %44 {offsets = [0, 2, 1, 0], sizes = [2, 8, 8, 128], strides = [1, 1, 1, 1]} : vector<2x10x10x128xbf16> to vector<2x8x8x128xbf16>
    %53 = vector.extract_strided_slice %44 {offsets = [0, 2, 2, 0], sizes = [2, 8, 8, 128], strides = [1, 1, 1, 1]} : vector<2x10x10x128xbf16> to vector<2x8x8x128xbf16>
    %54 = tpu.concatenate %45, %46, %47, %48, %49, %50, %51, %52, %53 in 3 : vector<2x8x8x128xbf16>, vector<2x8x8x128xbf16>, vector<2x8x8x128xbf16>, vector<2x8x8x128xbf16>, vector<2x8x8x128xbf16>, vector<2x8x8x128xbf16>, vector<2x8x8x128xbf16>, vector<2x8x8x128xbf16>, vector<2x8x8x128xbf16> -> vector<2x8x8x1152xbf16>
    %55 = vector.shape_cast %54 : vector<2x8x8x1152xbf16> to vector<128x1152xbf16>
    %c0_18 = arith.constant 0 : index
    %c0_19 = arith.constant 0 : index
    %56 = vector.load %arg4[%c0_18, %c0_19] : memref<1152x128xbf16, #tpu.memory_space<vmem>>, vector<1152x128xbf16>
    %cst_20 = arith.constant dense<0.000000e+00> : vector<128x128xf32>
    %57 = tpu.matmul %55, %56, %cst_20 {dimension_numbers = #tpu.dot_dimension_numbers<[1], [0], [0], [1], [0, 0, 1, 1], [], []>} : vector<128x1152xbf16>, vector<1152x128xbf16>, vector<128x128xf32> -> vector<128x128xf32>
    %c0_21 = arith.constant 0 : index
    %c0_22 = arith.constant 0 : index
    %58 = vector.load %arg5[%c0_21, %c0_22] : memref<1x128xf32, #tpu.memory_space<vmem>>, vector<1x128xf32>
    %c0_23 = arith.constant 0 : index
    %c0_24 = arith.constant 0 : index
    %59 = vector.load %arg6[%c0_23, %c0_24] : memref<1x128xf32, #tpu.memory_space<vmem>>, vector<1x128xf32>
    %cst_25 = arith.constant dense<0.000000e+00> : vector<128xf32>
    %60 = vector.multi_reduction <add>, %57, %cst_25 [0] : vector<128x128xf32> to vector<128xf32>
    %61 = vector.shape_cast %60 : vector<128xf32> to vector<1x128xf32>
    %cst_26 = arith.constant 1.280000e+02 : f32
    %62 = vector.broadcast %cst_26 : f32 to vector<1x128xf32>
    %63 = arith.divf %61, %62 : vector<1x128xf32>
    %64 = vector.broadcast %63 : vector<1x128xf32> to vector<128x128xf32>
    %65 = arith.subf %57, %64 : vector<128x128xf32>
    %66 = arith.mulf %65, %65 : vector<128x128xf32>
    %cst_27 = arith.constant dense<0.000000e+00> : vector<128xf32>
    %67 = vector.multi_reduction <add>, %66, %cst_27 [0] : vector<128x128xf32> to vector<128xf32>
    %68 = vector.shape_cast %67 : vector<128xf32> to vector<1x128xf32>
    %cst_28 = arith.constant 1.280000e+02 : f32
    %69 = vector.broadcast %cst_28 : f32 to vector<1x128xf32>
    %70 = arith.divf %68, %69 : vector<1x128xf32>
    %cst_29 = arith.constant 0.000000e+00 : f32
    %71 = vector.broadcast %cst_29 : f32 to vector<1x128xf32>
    %72 = arith.maximumf %70, %71 : vector<1x128xf32>
    %cst_30 = arith.constant 9.99999974E-6 : f32
    %73 = vector.broadcast %cst_30 : f32 to vector<1x128xf32>
    %74 = arith.addf %72, %73 : vector<1x128xf32>
    %75 = math.rsqrt %74 : vector<1x128xf32>
    %76 = arith.mulf %58, %75 : vector<1x128xf32>
    %77 = vector.broadcast %76 : vector<1x128xf32> to vector<128x128xf32>
    %78 = arith.mulf %65, %77 : vector<128x128xf32>
    %79 = vector.broadcast %59 : vector<1x128xf32> to vector<128x128xf32>
    %80 = arith.addf %78, %79 : vector<128x128xf32>
    %c0_31 = arith.constant 0 : index
    %c0_32 = arith.constant 0 : index
    %81 = vector.load %arg7[%c0_31, %c0_32] : memref<128x128xf32, #tpu.memory_space<vmem>>, vector<128x128xf32>
    %82 = arith.addf %80, %81 : vector<128x128xf32>
    %cst_33 = arith.constant 0.000000e+00 : f32
    %83 = vector.broadcast %cst_33 : f32 to vector<128x128xf32>
    %84 = arith.maximumf %82, %83 : vector<128x128xf32>
    %c0_34 = arith.constant 0 : index
    %c0_35 = arith.constant 0 : index
    %85 = vector.load %arg8[%c0_34, %c0_35] : memref<128x128xf32, #tpu.memory_space<vmem>>, vector<128x128xf32>
    tpu.vector_store %arg8[%c0_34, %c0_35], %84 {strides = array<i32>} : memref<128x128xf32, #tpu.memory_space<vmem>>, vector<128x128xf32>,
    return
  }
}

</mosaic_0001>

<llo_original>
// kernel: forward.3
$region0: #{forward.3}
  #allocation0 [shape = 'u32[]', space=smem, size = 0x4, offset = 0x4, fixed_abs, tag = 'smem constant byte address 0x4 - core index']
  #allocation1 [shape = 'u32[144,128]{1,0:T(1,128)}', space=vmem, size = 0x12000, scoped, tag = 'internal scratch']
  %s0 = inlined_call_operand.vmem [shape: bf16[2,10,10,128], index: 0, kind: input, shape index: {}]
  %s1 = inlined_call_operand.vmem [shape: bf16[1152,128], index: 1, kind: input, shape index: {}]
  %s2 = inlined_call_operand.vmem [shape: f32[1,128], index: 2, kind: input, shape index: {}, may-alias: {2,5}]
  %s3 = inlined_call_operand.vmem [shape: f32[1,128], index: 3, kind: input, shape index: {}, may-alias: {3,6}]
  %s4 = inlined_call_operand.vmem [shape: bf16[1152,128], index: 4, kind: input, shape index: {}]
  %s5 = inlined_call_operand.vmem [shape: f32[1,128], index: 5, kind: input, shape index: {}, may-alias: {2,5}]
  %s6 = inlined_call_operand.vmem [shape: f32[1,128], index: 6, kind: input, shape index: {}, may-alias: {3,6}]
  %s7 = inlined_call_operand.vmem [shape: f32[128,128], index: 7, kind: input, shape index: {}]
  %s8 = inlined_call_operand.hbm [shape: f32[128,128], index: 8, kind: output, shape index: {}]
  %s9 = sld [smem:[#allocation0]]
  $region42: #{forward.3} parent=0
    _
  %s11 = ssub.s32 1, %s9
  %s12 = scalar_select 0, %s11, %s9
  $region1: #{forward.3} parent=0
    #allocation2 [shape = 'u8[65536]{0}', space=vmem, size = 0x10000, scoped, tag = 'output window, operand 0, single buffered']
    #allocation3 [shape = 's32[1]{0}', space=sflag, size = 0x4, scoped, tag = 'scoped memory for forward.3']
    %13 = vsyncpa [#allocation3], 0
    // Predicated region
    $region2: #{forward.3} parent=1 // pred_check
      _
    $region3: #{forward.3} parent=1 // pred_check_branch
      %15 = sbr.rel (0) target = $region5
    $region4: #{forward.3} parent=1 // pred_region
      _
    $region5: #{forward.3} parent=1 // pred_fallthru
      _
    // Predicated region
    $region6: #{forward.3} parent=1 // pred_check
      _
    $region7: #{forward.3} parent=1 // pred_check_branch
      %17 = sbr.rel (0) target = $region9
    $region8: #{forward.3} parent=1 // pred_region
      _
    $region9: #{forward.3} parent=1 // pred_fallthru
      _
    // Predicated region
    $region10: #{forward.3} parent=1 // pred_check
      _
    $region11: #{forward.3} parent=1 // pred_check_branch
      %19 = sbr.rel (0) target = $region13
    $region12: #{forward.3} parent=1 // pred_region
      _
    $region13: #{forward.3} parent=1 // pred_fallthru
      _
    // Predicated region
    $region14: #{forward.3} parent=1 // pred_check
      _
    $region15: #{forward.3} parent=1 // pred_check_branch
      %21 = sbr.rel (0) target = $region17
    $region16: #{forward.3} parent=1 // pred_region
      _
    $region17: #{forward.3} parent=1 // pred_fallthru
      _
    // Predicated region
    $region18: #{forward.3} parent=1 // pred_check
      _
    $region19: #{forward.3} parent=1 // pred_check_branch
      %23 = sbr.rel (0) target = $region21
    $region20: #{forward.3} parent=1 // pred_region
      _
    $region21: #{forward.3} parent=1 // pred_fallthru
      _
    // Predicated region
    $region22: #{forward.3} parent=1 // pred_check
      _
    $region23: #{forward.3} parent=1 // pred_check_branch
      %25 = sbr.rel (0) target = $region25
    $region24: #{forward.3} parent=1 // pred_region
      _
    $region25: #{forward.3} parent=1 // pred_fallthru
      _
    // Predicated region
    $region26: #{forward.3} parent=1 // pred_check
      _
    $region27: #{forward.3} parent=1 // pred_check_branch
      %27 = sbr.rel (0) target = $region29
    $region28: #{forward.3} parent=1 // pred_region
      _
    $region29: #{forward.3} parent=1 // pred_fallthru
      _
    // Predicated region
    $region30: #{forward.3} parent=1 // pred_check
      _
    $region31: #{forward.3} parent=1 // pred_check_branch
      %29 = sbr.rel (0) target = $region33
    $region32: #{forward.3} parent=1 // pred_region
      _
    $region33: #{forward.3} parent=1 // pred_fallthru
      _
    %v31 = vld [vmem:[%s0] sm:$0xf]
    %v32 = vld [vmem:[%s0 + $0x4] sm:$0x1]
    %v33 = vld [vmem:[%s0 + $0x8] sm:$0xf]
    %v34 = vld [vmem:[%s0 + $0xc] sm:$0x1]
    %v35 = vld [vmem:[%s0 + $0x10] sm:$0xf]
    %v36 = vld [vmem:[%s0 + $0x14] sm:$0x1]
    %v37 = vld [vmem:[%s0 + $0x18] sm:$0xf]
    %v38 = vld [vmem:[%s0 + $0x1c] sm:$0x1]
    %v39 = vld [vmem:[%s0 + $0x20] sm:$0xf]
    %v40 = vld [vmem:[%s0 + $0x24] sm:$0x1]
    %v41 = vld [vmem:[%s0 + $0x28] sm:$0xf]
    %v42 = vld [vmem:[%s0 + $0x2c] sm:$0x1]
    %v43 = vld [vmem:[%s0 + $0x30] sm:$0xf]
    %v44 = vld [vmem:[%s0 + $0x34] sm:$0x1]
    %v45 = vld [vmem:[%s0 + $0x38] sm:$0xf]
    %v46 = vld [vmem:[%s0 + $0x3c] sm:$0x1]
    %v47 = vld [vmem:[%s0 + $0x40] sm:$0xf]
    %v48 = vld [vmem:[%s0 + $0x44] sm:$0x1]
    %v49 = vld [vmem:[%s0 + $0x48] sm:$0xf]
    %v50 = vld [vmem:[%s0 + $0x4c] sm:$0x1]
    %v51 = vld [vmem:[%s0 + $0x50] sm:$0xf]
    %v52 = vld [vmem:[%s0 + $0x54] sm:$0x1]
    %v53 = vld [vmem:[%s0 + $0x58] sm:$0xf]
    %v54 = vld [vmem:[%s0 + $0x5c] sm:$0x1]
    %v55 = vld [vmem:[%s0 + $0x60] sm:$0xf]
    %v56 = vld [vmem:[%s0 + $0x64] sm:$0x1]
    %v57 = vld [vmem:[%s0 + $0x68] sm:$0xf]
    %v58 = vld [vmem:[%s0 + $0x6c] sm:$0x1]
    %v59 = vld [vmem:[%s0 + $0x70] sm:$0xf]
    %v60 = vld [vmem:[%s0 + $0x74] sm:$0x1]
    %v61 = vld [vmem:[%s0 + $0x78] sm:$0xf]
    %v62 = vld [vmem:[%s0 + $0x7c] sm:$0x1]
    %v63 = vld [vmem:[%s0 + $0x80] sm:$0xf]
    %v64 = vld [vmem:[%s0 + $0x84] sm:$0x1]
    %v65 = vld [vmem:[%s0 + $0x88] sm:$0xf]
    %v66 = vld [vmem:[%s0 + $0x8c] sm:$0x1]
    %v67 = vld [vmem:[%s0 + $0x90] sm:$0xf]
    %v68 = vld [vmem:[%s0 + $0x94] sm:$0x1]
    %v69 = vld [vmem:[%s0 + $0x98] sm:$0xf]
    %v70 = vld [vmem:[%s0 + $0x9c] sm:$0x1]
    %v103 = vunpack.c.l.b16 %v31
    %v104 = vunpack.c.l.b16 %v32
    %v105 = vunpack.c.l.b16 %v33
    %v106 = vunpack.c.l.b16 %v34
    %v107 = vunpack.c.l.b16 %v35
    %v108 = vunpack.c.l.b16 %v36
    %v109 = vunpack.c.l.b16 %v37
    %v110 = vunpack.c.l.b16 %v38
    %v111 = vunpack.c.l.b16 %v39
    %v112 = vunpack.c.l.b16 %v40
    %v113 = vunpack.c.l.b16 %v41
    %v114 = vunpack.c.l.b16 %v42
    %v115 = vunpack.c.l.b16 %v43
    %v116 = vunpack.c.l.b16 %v44
    %v117 = vunpack.c.l.b16 %v45
    %v118 = vunpack.c.l.b16 %v46
    %v119 = vunpack.c.l.b16 %v51
    %v120 = vunpack.c.l.b16 %v52
    %v121 = vunpack.c.l.b16 %v53
    %v122 = vunpack.c.l.b16 %v54
    %v123 = vunpack.c.l.b16 %v55
    %v124 = vunpack.c.l.b16 %v56
    %v125 = vunpack.c.l.b16 %v57
    %v126 = vunpack.c.l.b16 %v58
    %v127 = vunpack.c.l.b16 %v59
    %v128 = vunpack.c.l.b16 %v60
    %v129 = vunpack.c.l.b16 %v61
    %v130 = vunpack.c.l.b16 %v62
    %v131 = vunpack.c.l.b16 %v63
    %v132 = vunpack.c.l.b16 %v64
    %v133 = vunpack.c.l.b16 %v65
    %v134 = vunpack.c.l.b16 %v66
    %v135 = vpack.c.b16 %v104, %v103
    %v136 = vpack.c.b16 %v106, %v105
    %v137 = vpack.c.b16 %v108, %v107
    %v138 = vpack.c.b16 %v110, %v109
    %v139 = vpack.c.b16 %v112, %v111
    %v140 = vpack.c.b16 %v114, %v113
    %v141 = vpack.c.b16 %v116, %v115
    %v142 = vpack.c.b16 %v118, %v117
    %v143 = vpack.c.b16 %v120, %v119
    %v144 = vpack.c.b16 %v122, %v121
    %v145 = vpack.c.b16 %v124, %v123
    %v146 = vpack.c.b16 %v126, %v125
    %v147 = vpack.c.b16 %v128, %v127
    %v148 = vpack.c.b16 %v130, %v129
    %v149 = vpack.c.b16 %v132, %v131
    %v150 = vpack.c.b16 %v134, %v133
    %v152 = vshrl.u32 %v135, 16
    %v154 = vshll.u32 %v135, 16
    %v156 = vrot.slane %v154, 1
    %v157 = vor.u32 %v152, %v156
    %v159 = vshrl.u32 %v136, 16
    %v161 = vshll.u32 %v136, 16
    %v163 = vrot.slane %v161, 1
    %v164 = vor.u32 %v159, %v163
    %v166 = vshrl.u32 %v137, 16
    %v168 = vshll.u32 %v137, 16
    %v170 = vrot.slane %v168, 1
    %v171 = vor.u32 %v166, %v170
    %v173 = vshrl.u32 %v138, 16
    %v175 = vshll.u32 %v138, 16
    %v177 = vrot.slane %v175, 1
    %v178 = vor.u32 %v173, %v177
    %v180 = vshrl.u32 %v139, 16
    %v182 = vshll.u32 %v139, 16
    %v184 = vrot.slane %v182, 1
    %v185 = vor.u32 %v180, %v184
    %v187 = vshrl.u32 %v140, 16
    %v189 = vshll.u32 %v140, 16
    %v191 = vrot.slane %v189, 1
    %v192 = vor.u32 %v187, %v191
    %v194 = vshrl.u32 %v141, 16
    %v196 = vshll.u32 %v141, 16
    %v198 = vrot.slane %v196, 1
    %v199 = vor.u32 %v194, %v198
    %v201 = vshrl.u32 %v142, 16
    %v203 = vshll.u32 %v142, 16
    %v205 = vrot.slane %v203, 1
    %v206 = vor.u32 %v201, %v205
    %v208 = vshrl.u32 %v143, 16
    %v210 = vshll.u32 %v143, 16
    %v212 = vrot.slane %v210, 1
    %v213 = vor.u32 %v208, %v212
    %v215 = vshrl.u32 %v144, 16
    %v217 = vshll.u32 %v144, 16
    %v219 = vrot.slane %v217, 1
    %v220 = vor.u32 %v215, %v219
    %v222 = vshrl.u32 %v145, 16
    %v224 = vshll.u32 %v145, 16
    %v226 = vrot.slane %v224, 1
    %v227 = vor.u32 %v222, %v226
    %v229 = vshrl.u32 %v146, 16
    %v231 = vshll.u32 %v146, 16
    %v233 = vrot.slane %v231, 1
    %v234 = vor.u32 %v229, %v233
    %v236 = vshrl.u32 %v147, 16
    %v238 = vshll.u32 %v147, 16
    %v240 = vrot.slane %v238, 1
    %v241 = vor.u32 %v236, %v240
    %v243 = vshrl.u32 %v148, 16
    %v245 = vshll.u32 %v148, 16
    %v247 = vrot.slane %v245, 1
    %v248 = vor.u32 %v243, %v247
    %v250 = vshrl.u32 %v149, 16
    %v252 = vshll.u32 %v149, 16
    %v254 = vrot.slane %v252, 1
    %v255 = vor.u32 %v250, %v254
    %v257 = vshrl.u32 %v150, 16
    %v259 = vshll.u32 %v150, 16
    %v261 = vrot.slane %v259, 1
    %v262 = vor.u32 %v257, %v261
    %v263 = vrot.slane %v135, 1
    %v264 = vrot.slane %v136, 1
    %v265 = vrot.slane %v137, 1
    %v266 = vrot.slane %v138, 1
    %v267 = vrot.slane %v139, 1
    %v268 = vrot.slane %v140, 1
    %v269 = vrot.slane %v141, 1
    %v270 = vrot.slane %v142, 1
    %v271 = vrot.slane %v143, 1
    %v272 = vrot.slane %v144, 1
    %v273 = vrot.slane %v145, 1
    %v274 = vrot.slane %v146, 1
    %v275 = vrot.slane %v147, 1
    %v276 = vrot.slane %v148, 1
    %v277 = vrot.slane %v149, 1
    %v278 = vrot.slane %v150, 1
    %v283 = vunpack.c.l.b16 %v47
    %v284 = vunpack.c.l.b16 %v48
    %v285 = vunpack.c.l.b16 %v67
    %v286 = vunpack.c.l.b16 %v68
    %v287 = vpack.c.b16 %v284, %v283
    %v288 = vpack.c.b16 %v286, %v285
    %v290 = vshrl.u32 %v287, 16
    %v292 = vshll.u32 %v287, 16
    %v294 = vrot.slane %v292, 1
    %v295 = vor.u32 %v290, %v294
    %v297 = vshrl.u32 %v288, 16
    %v299 = vshll.u32 %v288, 16
    %v301 = vrot.slane %v299, 1
    %v302 = vor.u32 %v297, %v301
    %v303 = vrot.slane %v287, 1
    %v304 = vrot.slane %v288, 1
    %v309 = vunpack.c.l.b16 %v49
    %v310 = vunpack.c.l.b16 %v50
    %v311 = vunpack.c.l.b16 %v69
    %v312 = vunpack.c.l.b16 %v70
    %v313 = vpack.c.b16 %v310, %v309
    %v314 = vpack.c.b16 %v312, %v311
    %v316 = vshrl.u32 %v313, 16
    %v318 = vshll.u32 %v313, 16
    %v320 = vrot.slane %v318, 1
    %v321 = vor.u32 %v316, %v320
    %v323 = vshrl.u32 %v314, 16
    %v325 = vshll.u32 %v314, 16
    %v327 = vrot.slane %v325, 1
    %v328 = vor.u32 %v323, %v327
    %v329 = vrot.slane %v313, 1
    %v330 = vrot.slane %v314, 1
    %v331 = vunpack.c.l.b16 %v157
    %v332 = vunpack.c.l.b16 %v263
    %v333 = vunpack.c.l.b16 %v164
    %v334 = vunpack.c.l.b16 %v264
    %v335 = vunpack.c.l.b16 %v171
    %v336 = vunpack.c.l.b16 %v265
    %v337 = vunpack.c.l.b16 %v178
    %v338 = vunpack.c.l.b16 %v266
    %v339 = vunpack.c.l.b16 %v185
    %v340 = vunpack.c.l.b16 %v267
    %v341 = vunpack.c.l.b16 %v192
    %v342 = vunpack.c.l.b16 %v268
    %v343 = vunpack.c.l.b16 %v199
    %v344 = vunpack.c.l.b16 %v269
    %v345 = vunpack.c.l.b16 %v206
    %v346 = vunpack.c.l.b16 %v270
    %v347 = vunpack.c.l.b16 %v295
    %v348 = vunpack.c.l.b16 %v303
    %v349 = vunpack.c.l.b16 %v321
    %v350 = vunpack.c.l.b16 %v329
    %v351 = vunpack.c.l.b16 %v213
    %v352 = vunpack.c.l.b16 %v271
    %v353 = vunpack.c.l.b16 %v220
    %v354 = vunpack.c.l.b16 %v272
    %v355 = vunpack.c.l.b16 %v227
    %v356 = vunpack.c.l.b16 %v273
    %v357 = vunpack.c.l.b16 %v234
    %v358 = vunpack.c.l.b16 %v274
    %v359 = vunpack.c.l.b16 %v241
    %v360 = vunpack.c.l.b16 %v275
    %v361 = vunpack.c.l.b16 %v248
    %v362 = vunpack.c.l.b16 %v276
    %v363 = vunpack.c.l.b16 %v255
    %v364 = vunpack.c.l.b16 %v277
    %v365 = vunpack.c.l.b16 %v262
    %v366 = vunpack.c.l.b16 %v278
    %v367 = vunpack.c.l.b16 %v302
    %v368 = vunpack.c.l.b16 %v304
    %v369 = vunpack.c.l.b16 %v328
    %v370 = vunpack.c.l.b16 %v330
    %v371 = vld [vmem:[%s1] sm:$0xf]
    %v372 = vld [vmem:[%s1 + $0x4] sm:$0xf]
    %v373 = vld [vmem:[%s1 + $0x8] sm:$0xf]
    %v374 = vld [vmem:[%s1 + $0xc] sm:$0xf]
    %v375 = vld [vmem:[%s1 + $0x10] sm:$0xf]
    %v376 = vld [vmem:[%s1 + $0x14] sm:$0xf]
    %v377 = vld [vmem:[%s1 + $0x18] sm:$0xf]
    %v378 = vld [vmem:[%s1 + $0x1c] sm:$0xf]
    %v379 = vld [vmem:[%s1 + $0x20] sm:$0xf]
    %v380 = vld [vmem:[%s1 + $0x24] sm:$0xf]
    %v381 = vld [vmem:[%s1 + $0x28] sm:$0xf]
    %v382 = vld [vmem:[%s1 + $0x2c] sm:$0xf]
    %v383 = vld [vmem:[%s1 + $0x30] sm:$0xf]
    %v384 = vld [vmem:[%s1 + $0x34] sm:$0xf]
    %v385 = vld [vmem:[%s1 + $0x38] sm:$0xf]
    %v386 = vld [vmem:[%s1 + $0x3c] sm:$0xf]
    %v387 = vld [vmem:[%s1 + $0x40] sm:$0xf]
    %v388 = vld [vmem:[%s1 + $0x44] sm:$0xf]
    %v389 = vld [vmem:[%s1 + $0x48] sm:$0xf]
    %v390 = vld [vmem:[%s1 + $0x4c] sm:$0xf]
    %v391 = vld [vmem:[%s1 + $0x50] sm:$0xf]
    %v392 = vld [vmem:[%s1 + $0x54] sm:$0xf]
    %v393 = vld [vmem:[%s1 + $0x58] sm:$0xf]
    %v394 = vld [vmem:[%s1 + $0x5c] sm:$0xf]
    %v395 = vld [vmem:[%s1 + $0x60] sm:$0xf]
    %v396 = vld [vmem:[%s1 + $0x64] sm:$0xf]
    %v397 = vld [vmem:[%s1 + $0x68] sm:$0xf]
    %v398 = vld [vmem:[%s1 + $0x6c] sm:$0xf]
    %v399 = vld [vmem:[%s1 + $0x70] sm:$0xf]
    %v400 = vld [vmem:[%s1 + $0x74] sm:$0xf]
    %v401 = vld [vmem:[%s1 + $0x78] sm:$0xf]
    %v402 = vld [vmem:[%s1 + $0x7c] sm:$0xf]
    %v403 = vld [vmem:[%s1 + $0x80] sm:$0xf]
    %v404 = vld [vmem:[%s1 + $0x84] sm:$0xf]
    %v405 = vld [vmem:[%s1 + $0x88] sm:$0xf]
    %v406 = vld [vmem:[%s1 + $0x8c] sm:$0xf]
    %v407 = vld [vmem:[%s1 + $0x90] sm:$0xf]
    %v408 = vld [vmem:[%s1 + $0x94] sm:$0xf]
    %v409 = vld [vmem:[%s1 + $0x98] sm:$0xf]
    %v410 = vld [vmem:[%s1 + $0x9c] sm:$0xf]
    %v411 = vld [vmem:[%s1 + $0xa0] sm:$0xf]
    %v412 = vld [vmem:[%s1 + $0xa4] sm:$0xf]
    %v413 = vld [vmem:[%s1 + $0xa8] sm:$0xf]
    %v414 = vld [vmem:[%s1 + $0xac] sm:$0xf]
    %v415 = vld [vmem:[%s1 + $0xb0] sm:$0xf]
    %v416 = vld [vmem:[%s1 + $0xb4] sm:$0xf]
    %v417 = vld [vmem:[%s1 + $0xb8] sm:$0xf]
    %v418 = vld [vmem:[%s1 + $0xbc] sm:$0xf]
    %v419 = vld [vmem:[%s1 + $0xc0] sm:$0xf]
    %v420 = vld [vmem:[%s1 + $0xc4] sm:$0xf]
    %v421 = vld [vmem:[%s1 + $0xc8] sm:$0xf]
    %v422 = vld [vmem:[%s1 + $0xcc] sm:$0xf]
    %v423 = vld [vmem:[%s1 + $0xd0] sm:$0xf]
    %v424 = vld [vmem:[%s1 + $0xd4] sm:$0xf]
    %v425 = vld [vmem:[%s1 + $0xd8] sm:$0xf]
    %v426 = vld [vmem:[%s1 + $0xdc] sm:$0xf]
    %v427 = vld [vmem:[%s1 + $0xe0] sm:$0xf]
    %v428 = vld [vmem:[%s1 + $0xe4] sm:$0xf]
    %v429 = vld [vmem:[%s1 + $0xe8] sm:$0xf]
    %v430 = vld [vmem:[%s1 + $0xec] sm:$0xf]
    %v431 = vld [vmem:[%s1 + $0xf0] sm:$0xf]
    %v432 = vld [vmem:[%s1 + $0xf4] sm:$0xf]
    %v433 = vld [vmem:[%s1 + $0xf8] sm:$0xf]
    %v434 = vld [vmem:[%s1 + $0xfc] sm:$0xf]
    %v435 = vld [vmem:[%s1 + $0x100] sm:$0xf]
    %v436 = vld [vmem:[%s1 + $0x104] sm:$0xf]
    %v437 = vld [vmem:[%s1 + $0x108] sm:$0xf]
    %v438 = vld [vmem:[%s1 + $0x10c] sm:$0xf]
    %v439 = vld [vmem:[%s1 + $0x110] sm:$0xf]
    %v440 = vld [vmem:[%s1 + $0x114] sm:$0xf]
    %v441 = vld [vmem:[%s1 + $0x118] sm:$0xf]
    %v442 = vld [vmem:[%s1 + $0x11c] sm:$0xf]
    %v443 = vld [vmem:[%s1 + $0x120] sm:$0xf]
    %v444 = vld [vmem:[%s1 + $0x124] sm:$0xf]
    %v445 = vld [vmem:[%s1 + $0x128] sm:$0xf]
    %v446 = vld [vmem:[%s1 + $0x12c] sm:$0xf]
    %v447 = vld [vmem:[%s1 + $0x130] sm:$0xf]
    %v448 = vld [vmem:[%s1 + $0x134] sm:$0xf]
    %v449 = vld [vmem:[%s1 + $0x138] sm:$0xf]
    %v450 = vld [vmem:[%s1 + $0x13c] sm:$0xf]
    %v451 = vld [vmem:[%s1 + $0x140] sm:$0xf]
    %v452 = vld [vmem:[%s1 + $0x144] sm:$0xf]
    %v453 = vld [vmem:[%s1 + $0x148] sm:$0xf]
    %v454 = vld [vmem:[%s1 + $0x14c] sm:$0xf]
    %v455 = vld [vmem:[%s1 + $0x150] sm:$0xf]
    %v456 = vld [vmem:[%s1 + $0x154] sm:$0xf]
    %v457 = vld [vmem:[%s1 + $0x158] sm:$0xf]
    %v458 = vld [vmem:[%s1 + $0x15c] sm:$0xf]
    %v459 = vld [vmem:[%s1 + $0x160] sm:$0xf]
    %v460 = vld [vmem:[%s1 + $0x164] sm:$0xf]
    %v461 = vld [vmem:[%s1 + $0x168] sm:$0xf]
    %v462 = vld [vmem:[%s1 + $0x16c] sm:$0xf]
    %v463 = vld [vmem:[%s1 + $0x170] sm:$0xf]
    %v464 = vld [vmem:[%s1 + $0x174] sm:$0xf]
    %v465 = vld [vmem:[%s1 + $0x178] sm:$0xf]
    %v466 = vld [vmem:[%s1 + $0x17c] sm:$0xf]
    %v467 = vld [vmem:[%s1 + $0x180] sm:$0xf]
    %v468 = vld [vmem:[%s1 + $0x184] sm:$0xf]
    %v469 = vld [vmem:[%s1 + $0x188] sm:$0xf]
    %v470 = vld [vmem:[%s1 + $0x18c] sm:$0xf]
    %v471 = vld [vmem:[%s1 + $0x190] sm:$0xf]
    %v472 = vld [vmem:[%s1 + $0x194] sm:$0xf]
    %v473 = vld [vmem:[%s1 + $0x198] sm:$0xf]
    %v474 = vld [vmem:[%s1 + $0x19c] sm:$0xf]
    %v475 = vld [vmem:[%s1 + $0x1a0] sm:$0xf]
    %v476 = vld [vmem:[%s1 + $0x1a4] sm:$0xf]
    %v477 = vld [vmem:[%s1 + $0x1a8] sm:$0xf]
    %v478 = vld [vmem:[%s1 + $0x1ac] sm:$0xf]
    %v479 = vld [vmem:[%s1 + $0x1b0] sm:$0xf]
    %v480 = vld [vmem:[%s1 + $0x1b4] sm:$0xf]
    %v481 = vld [vmem:[%s1 + $0x1b8] sm:$0xf]
    %v482 = vld [vmem:[%s1 + $0x1bc] sm:$0xf]
    %v483 = vld [vmem:[%s1 + $0x1c0] sm:$0xf]
    %v484 = vld [vmem:[%s1 + $0x1c4] sm:$0xf]
    %v485 = vld [vmem:[%s1 + $0x1c8] sm:$0xf]
    %v486 = vld [vmem:[%s1 + $0x1cc] sm:$0xf]
    %v487 = vld [vmem:[%s1 + $0x1d0] sm:$0xf]
    %v488 = vld [vmem:[%s1 + $0x1d4] sm:$0xf]
    %v489 = vld [vmem:[%s1 + $0x1d8] sm:$0xf]
    %v490 = vld [vmem:[%s1 + $0x1dc] sm:$0xf]
    %v491 = vld [vmem:[%s1 + $0x1e0] sm:$0xf]
    %v492 = vld [vmem:[%s1 + $0x1e4] sm:$0xf]
    %v493 = vld [vmem:[%s1 + $0x1e8] sm:$0xf]
    %v494 = vld [vmem:[%s1 + $0x1ec] sm:$0xf]
    %v495 = vld [vmem:[%s1 + $0x1f0] sm:$0xf]
    %v496 = vld [vmem:[%s1 + $0x1f4] sm:$0xf]
    %v497 = vld [vmem:[%s1 + $0x1f8] sm:$0xf]
    %v498 = vld [vmem:[%s1 + $0x1fc] sm:$0xf]
    %v499 = vld [vmem:[%s1 + $0x200] sm:$0xf]
    %v500 = vld [vmem:[%s1 + $0x204] sm:$0xf]
    %v501 = vld [vmem:[%s1 + $0x208] sm:$0xf]
    %v502 = vld [vmem:[%s1 + $0x20c] sm:$0xf]
    %v503 = vld [vmem:[%s1 + $0x210] sm:$0xf]
    %v504 = vld [vmem:[%s1 + $0x214] sm:$0xf]
    %v505 = vld [vmem:[%s1 + $0x218] sm:$0xf]
    %v506 = vld [vmem:[%s1 + $0x21c] sm:$0xf]
    %v507 = vld [vmem:[%s1 + $0x220] sm:$0xf]
    %v508 = vld [vmem:[%s1 + $0x224] sm:$0xf]
    %v509 = vld [vmem:[%s1 + $0x228] sm:$0xf]
    %v510 = vld [vmem:[%s1 + $0x22c] sm:$0xf]
    %v511 = vld [vmem:[%s1 + $0x230] sm:$0xf]
    %v512 = vld [vmem:[%s1 + $0x234] sm:$0xf]
    %v513 = vld [vmem:[%s1 + $0x238] sm:$0xf]
    %v514 = vld [vmem:[%s1 + $0x23c] sm:$0xf]
    %v515 = vpack.c.b16 %v105, %v103
    %v516 = vpack.c.b16 %v333, %v331
    %v517 = vpack.c.b16 %v334, %v332
    %v518 = vpack.c.b16 %v107, %v105
    %v519 = vpack.c.b16 %v335, %v333
    %v520 = vpack.c.b16 %v336, %v334
    %v521 = vpack.c.b16 %v109, %v107
    %v522 = vpack.c.b16 %v337, %v335
    %v523 = vpack.c.b16 %v338, %v336
    %v524 = vpack.c.b16 %v111, %v109
    %v525 = vpack.c.b16 %v339, %v337
    %v526 = vpack.c.b16 %v340, %v338
    %v527 = vpack.c.b16 %v113, %v111
    %v528 = vpack.c.b16 %v341, %v339
    %v529 = vpack.c.b16 %v342, %v340
    %v530 = vpack.c.b16 %v115, %v113
    %v531 = vpack.c.b16 %v343, %v341
    %v532 = vpack.c.b16 %v344, %v342
    %v533 = vpack.c.b16 %v117, %v115
    %v534 = vpack.c.b16 %v345, %v343
    %v535 = vpack.c.b16 %v346, %v344
    %v536 = vpack.c.b16 %v283, %v117
    %v537 = vpack.c.b16 %v347, %v345
    %v538 = vpack.c.b16 %v348, %v346
    %v539 = vpack.c.b16 %v309, %v283
    %v540 = vpack.c.b16 %v349, %v347
    %v541 = vpack.c.b16 %v350, %v348
    %v542 = vpack.c.b16 %v121, %v119
    %v543 = vpack.c.b16 %v353, %v351
    %v544 = vpack.c.b16 %v354, %v352
    %v545 = vpack.c.b16 %v123, %v121
    %v546 = vpack.c.b16 %v355, %v353
    %v547 = vpack.c.b16 %v356, %v354
    %v548 = vpack.c.b16 %v125, %v123
    %v549 = vpack.c.b16 %v357, %v355
    %v550 = vpack.c.b16 %v358, %v356
    %v551 = vpack.c.b16 %v127, %v125
    %v552 = vpack.c.b16 %v359, %v357
    %v553 = vpack.c.b16 %v360, %v358
    %v554 = vpack.c.b16 %v129, %v127
    %v555 = vpack.c.b16 %v361, %v359
    %v556 = vpack.c.b16 %v362, %v360
    %v557 = vpack.c.b16 %v131, %v129
    %v558 = vpack.c.b16 %v363, %v361
    %v559 = vpack.c.b16 %v364, %v362
    %v560 = vpack.c.b16 %v133, %v131
    %v561 = vpack.c.b16 %v365, %v363
    %v562 = vpack.c.b16 %v366, %v364
    %v563 = vpack.c.b16 %v285, %v133
    %v564 = vpack.c.b16 %v367, %v365
    %v565 = vpack.c.b16 %v368, %v366
    %v566 = vpack.c.b16 %v311, %v285
    %v567 = vpack.c.b16 %v369, %v367
    %v568 = vpack.c.b16 %v370, %v368
    %v767 = vunpack.c.l.b16 %v371
    %v768 = vunpack.c.l.b16 %v372
    %v769 = vunpack.c.l.b16 %v373
    %v770 = vunpack.c.l.b16 %v374
    %v771 = vunpack.c.l.b16 %v375
    %v772 = vunpack.c.l.b16 %v376
    %v773 = vunpack.c.l.b16 %v377
    %v774 = vunpack.c.l.b16 %v378
    %v775 = vunpack.c.l.b16 %v379
    %v776 = vunpack.c.l.b16 %v380
    %v777 = vunpack.c.l.b16 %v381
    %v778 = vunpack.c.l.b16 %v382
    %v779 = vunpack.c.l.b16 %v383
    %v780 = vunpack.c.l.b16 %v384
    %v781 = vunpack.c.l.b16 %v385
    %v782 = vunpack.c.l.b16 %v386
    %v783 = vunpack.c.l.b16 %v387
    %v784 = vunpack.c.l.b16 %v388
    %v785 = vunpack.c.l.b16 %v389
    %v786 = vunpack.c.l.b16 %v390
    %v787 = vunpack.c.l.b16 %v391
    %v788 = vunpack.c.l.b16 %v392
    %v789 = vunpack.c.l.b16 %v393
    %v790 = vunpack.c.l.b16 %v394
    %v791 = vunpack.c.l.b16 %v395
    %v792 = vunpack.c.l.b16 %v396
    %v793 = vunpack.c.l.b16 %v397
    %v794 = vunpack.c.l.b16 %v398
    %v795 = vunpack.c.l.b16 %v399
    %v796 = vunpack.c.l.b16 %v400
    %v797 = vunpack.c.l.b16 %v401
    %v798 = vunpack.c.l.b16 %v402
    %v799 = vunpack.c.l.b16 %v403
    %v800 = vunpack.c.l.b16 %v404
    %v801 = vunpack.c.l.b16 %v405
    %v802 = vunpack.c.l.b16 %v406
    %v803 = vunpack.c.l.b16 %v407
    %v804 = vunpack.c.l.b16 %v408
    %v805 = vunpack.c.l.b16 %v409
    %v806 = vunpack.c.l.b16 %v410
    %v807 = vunpack.c.l.b16 %v411
    %v808 = vunpack.c.l.b16 %v412
    %v809 = vunpack.c.l.b16 %v413
    %v810 = vunpack.c.l.b16 %v414
    %v811 = vunpack.c.l.b16 %v415
    %v812 = vunpack.c.l.b16 %v416
    %v813 = vunpack.c.l.b16 %v417
    %v814 = vunpack.c.l.b16 %v418
    %v815 = vunpack.c.l.b16 %v419
    %v816 = vunpack.c.l.b16 %v420
    %v817 = vunpack.c.l.b16 %v421
    %v818 = vunpack.c.l.b16 %v422
    %v819 = vunpack.c.l.b16 %v423
    %v820 = vunpack.c.l.b16 %v424
    %v821 = vunpack.c.l.b16 %v425
    %v822 = vunpack.c.l.b16 %v426
    %v823 = vunpack.c.l.b16 %v427
    %v824 = vunpack.c.l.b16 %v428
    %v825 = vunpack.c.l.b16 %v429
    %v826 = vunpack.c.l.b16 %v430
    %v827 = vunpack.c.l.b16 %v431
    %v828 = vunpack.c.l.b16 %v432
    %v829 = vunpack.c.l.b16 %v433
    %v830 = vunpack.c.l.b16 %v434
    %v831 = vunpack.c.l.b16 %v435
    %v832 = vunpack.c.l.b16 %v436
    %v833 = vunpack.c.l.b16 %v437
    %v834 = vunpack.c.l.b16 %v438
    %v835 = vunpack.c.l.b16 %v439
    %v836 = vunpack.c.l.b16 %v440
    %v837 = vunpack.c.l.b16 %v441
    %v838 = vunpack.c.l.b16 %v442
    %v839 = vunpack.c.l.b16 %v443
    %v840 = vunpack.c.l.b16 %v444
    %v841 = vunpack.c.l.b16 %v445
    %v842 = vunpack.c.l.b16 %v446
    %v843 = vunpack.c.l.b16 %v447
    %v844 = vunpack.c.l.b16 %v448
    %v845 = vunpack.c.l.b16 %v449
    %v846 = vunpack.c.l.b16 %v450
    %v847 = vunpack.c.l.b16 %v451
    %v848 = vunpack.c.l.b16 %v452
    %v849 = vunpack.c.l.b16 %v453
    %v850 = vunpack.c.l.b16 %v454
    %v851 = vunpack.c.l.b16 %v455
    %v852 = vunpack.c.l.b16 %v456
    %v853 = vunpack.c.l.b16 %v457
    %v854 = vunpack.c.l.b16 %v458
    %v855 = vunpack.c.l.b16 %v459
    %v856 = vunpack.c.l.b16 %v460
    %v857 = vunpack.c.l.b16 %v461
    %v858 = vunpack.c.l.b16 %v462
    %v859 = vunpack.c.l.b16 %v463
    %v860 = vunpack.c.l.b16 %v464
    %v861 = vunpack.c.l.b16 %v465
    %v862 = vunpack.c.l.b16 %v466
    %v863 = vunpack.c.l.b16 %v467
    %v864 = vunpack.c.l.b16 %v468
    %v865 = vunpack.c.l.b16 %v469
    %v866 = vunpack.c.l.b16 %v470
    %v867 = vunpack.c.l.b16 %v471
    %v868 = vunpack.c.l.b16 %v472
    %v869 = vunpack.c.l.b16 %v473
    %v870 = vunpack.c.l.b16 %v474
    %v871 = vunpack.c.l.b16 %v475
    %v872 = vunpack.c.l.b16 %v476
    %v873 = vunpack.c.l.b16 %v477
    %v874 = vunpack.c.l.b16 %v478
    %v875 = vunpack.c.l.b16 %v479
    %v876 = vunpack.c.l.b16 %v480
    %v877 = vunpack.c.l.b16 %v481
    %v878 = vunpack.c.l.b16 %v482
    %v879 = vunpack.c.l.b16 %v483
    %v880 = vunpack.c.l.b16 %v484
    %v881 = vunpack.c.l.b16 %v485
    %v882 = vunpack.c.l.b16 %v486
    %v883 = vunpack.c.l.b16 %v487
    %v884 = vunpack.c.l.b16 %v488
    %v885 = vunpack.c.l.b16 %v489
    %v886 = vunpack.c.l.b16 %v490
    %v887 = vunpack.c.l.b16 %v491
    %v888 = vunpack.c.l.b16 %v492
    %v889 = vunpack.c.l.b16 %v493
    %v890 = vunpack.c.l.b16 %v494
    %v891 = vunpack.c.l.b16 %v495
    %v892 = vunpack.c.l.b16 %v496
    %v893 = vunpack.c.l.b16 %v497
    %v894 = vunpack.c.l.b16 %v498
    %v895 = vunpack.c.l.b16 %v499
    %v896 = vunpack.c.l.b16 %v500
    %v897 = vunpack.c.l.b16 %v501
    %v898 = vunpack.c.l.b16 %v502
    %v899 = vunpack.c.l.b16 %v503
    %v900 = vunpack.c.l.b16 %v504
    %v901 = vunpack.c.l.b16 %v505
    %v902 = vunpack.c.l.b16 %v506
    %v903 = vunpack.c.l.b16 %v507
    %v904 = vunpack.c.l.b16 %v508
    %v905 = vunpack.c.l.b16 %v509
    %v906 = vunpack.c.l.b16 %v510
    %v907 = vunpack.c.l.b16 %v511
    %v908 = vunpack.c.l.b16 %v512
    %v909 = vunpack.c.l.b16 %v513
    %v910 = vunpack.c.l.b16 %v514
    %v911 = vpack.c.b16 %v768, %v767
    %v912 = vpack.c.b16 %v770, %v769
    %v913 = vpack.c.b16 %v772, %v771
    %v914 = vpack.c.b16 %v774, %v773
    %v915 = vpack.c.b16 %v776, %v775
    %v916 = vpack.c.b16 %v778, %v777
    %v917 = vpack.c.b16 %v780, %v779
    %v918 = vpack.c.b16 %v782, %v781
    %v919 = vpack.c.b16 %v784, %v783
    %v920 = vpack.c.b16 %v786, %v785
    %v921 = vpack.c.b16 %v788, %v787
    %v922 = vpack.c.b16 %v790, %v789
    %v923 = vpack.c.b16 %v792, %v791
    %v924 = vpack.c.b16 %v794, %v793
    %v925 = vpack.c.b16 %v796, %v795
    %v926 = vpack.c.b16 %v798, %v797
    %v927 = vpack.c.b16 %v800, %v799
    %v928 = vpack.c.b16 %v802, %v801
    %v929 = vpack.c.b16 %v804, %v803
    %v930 = vpack.c.b16 %v806, %v805
    %v931 = vpack.c.b16 %v808, %v807
    %v932 = vpack.c.b16 %v810, %v809
    %v933 = vpack.c.b16 %v812, %v811
    %v934 = vpack.c.b16 %v814, %v813
    %v935 = vpack.c.b16 %v816, %v815
    %v936 = vpack.c.b16 %v818, %v817
    %v937 = vpack.c.b16 %v820, %v819
    %v938 = vpack.c.b16 %v822, %v821
    %v939 = vpack.c.b16 %v824, %v823
    %v940 = vpack.c.b16 %v826, %v825
    %v941 = vpack.c.b16 %v828, %v827
    %v942 = vpack.c.b16 %v830, %v829
    %v943 = vpack.c.b16 %v832, %v831
    %v944 = vpack.c.b16 %v834, %v833
    %v945 = vpack.c.b16 %v836, %v835
    %v946 = vpack.c.b16 %v838, %v837
    %v947 = vpack.c.b16 %v840, %v839
    %v948 = vpack.c.b16 %v842, %v841
    %v949 = vpack.c.b16 %v844, %v843
    %v950 = vpack.c.b16 %v846, %v845
    %v951 = vpack.c.b16 %v848, %v847
    %v952 = vpack.c.b16 %v850, %v849
    %v953 = vpack.c.b16 %v852, %v851
    %v954 = vpack.c.b16 %v854, %v853
    %v955 = vpack.c.b16 %v856, %v855
    %v956 = vpack.c.b16 %v858, %v857
    %v957 = vpack.c.b16 %v860, %v859
    %v958 = vpack.c.b16 %v862, %v861
    %v959 = vpack.c.b16 %v864, %v863
    %v960 = vpack.c.b16 %v866, %v865
    %v961 = vpack.c.b16 %v868, %v867
    %v962 = vpack.c.b16 %v870, %v869
    %v963 = vpack.c.b16 %v872, %v871
    %v964 = vpack.c.b16 %v874, %v873
    %v965 = vpack.c.b16 %v876, %v875
    %v966 = vpack.c.b16 %v878, %v877
    %v967 = vpack.c.b16 %v880, %v879
    %v968 = vpack.c.b16 %v882, %v881
    %v969 = vpack.c.b16 %v884, %v883
    %v970 = vpack.c.b16 %v886, %v885
    %v971 = vpack.c.b16 %v888, %v887
    %v972 = vpack.c.b16 %v890, %v889
    %v973 = vpack.c.b16 %v892, %v891
    %v974 = vpack.c.b16 %v894, %v893
    %v975 = vpack.c.b16 %v896, %v895
    %v976 = vpack.c.b16 %v898, %v897
    %v977 = vpack.c.b16 %v900, %v899
    %v978 = vpack.c.b16 %v902, %v901
    %v979 = vpack.c.b16 %v904, %v903
    %v980 = vpack.c.b16 %v906, %v905
    %v981 = vpack.c.b16 %v908, %v907
    %v982 = vpack.c.b16 %v910, %v909
    %1055 = vmatprep.subr.bf16.mxu0 0
    %1056 = vmatpush1.bf16.msra.mxu0 %v918
    %1057 = vmatprep.subr.bf16.mxu0 0
    %1058 = vmatpush1.bf16.msra.mxu0 %v917
    %1059 = vmatprep.subr.bf16.mxu0 0
    %1060 = vmatpush1.bf16.msra.mxu0 %v916
    %1061 = vmatprep.subr.bf16.mxu0 0
    %1062 = vmatpush1.bf16.msra.mxu0 %v915
    %1063 = vmatprep.subr.bf16.mxu0 0
    %1064 = vmatpush1.bf16.msra.mxu0 %v914
    %1065 = vmatprep.subr.bf16.mxu0 0
    %1066 = vmatpush1.bf16.msra.mxu0 %v913
    %1067 = vmatprep.subr.bf16.mxu0 0
    %1068 = vmatpush1.bf16.msra.mxu0 %v912
    %1069 = vmatprep.subr.bf16.mxu0 0
    %1070 = vmatpush1.bf16.msra.mxu0 %v911
    %1071 = vmatprep.subr.bf16.mxu0 0
    %1072 = vmatpush2.bf16.msra.mxu0 %v926
    %1073 = vmatprep.subr.bf16.mxu0 0
    %1074 = vmatpush2.bf16.msra.mxu0 %v925
    %1075 = vmatprep.subr.bf16.mxu0 0
    %1076 = vmatpush2.bf16.msra.mxu0 %v924
    %1077 = vmatprep.subr.bf16.mxu0 0
    %1078 = vmatpush2.bf16.msra.mxu0 %v923
    %1079 = vmatprep.subr.bf16.mxu0 0
    %1080 = vmatpush2.bf16.msra.mxu0 %v922
    %1081 = vmatprep.subr.bf16.mxu0 0
    %1082 = vmatpush2.bf16.msra.mxu0 %v921
    %1083 = vmatprep.subr.bf16.mxu0 0
    %1084 = vmatpush2.bf16.msra.mxu0 %v920
    %1085 = vmatprep.subr.bf16.mxu0 0
    %1086 = vmatpush2.bf16.msra.mxu0 %v919
    %1087 = vmatprep.mubr.bf16.mxu0 %v516
    %1088 = vmatmul.mubr.bf16.gmra.mxu0 %v515
    %v1089 = vpop.f32.mrf.mxu0
    %v1090 = vadd.f32 0.0, %v1089
    %v1091 = vpop.f32.mrf.mxu0
    %v1092 = vpop.f32.mrf.mxu0
    %v1093 = vadd.f32 0.0, %v1092
    %v1094 = vpop.f32.mrf.mxu0
    %1095 = vmatprep.mubr.bf16.mxu0 %v522
    %1096 = vmatmul.mubr.bf16.gmra.mxu0 %v521
    %v1097 = vpop.f32.mrf.mxu0
    %v1098 = vadd.f32 0.0, %v1097
    %v1099 = vpop.f32.mrf.mxu0
    %v1100 = vpop.f32.mrf.mxu0
    %v1101 = vadd.f32 0.0, %v1100
    %v1102 = vpop.f32.mrf.mxu0
    %1103 = vmatprep.mubr.bf16.mxu0 %v528
    %1104 = vmatmul.mubr.bf16.gmra.mxu0 %v527
    %v1105 = vpop.f32.mrf.mxu0
    %v1106 = vadd.f32 0.0, %v1105
    %v1107 = vpop.f32.mrf.mxu0
    %v1108 = vpop.f32.mrf.mxu0
    %v1109 = vadd.f32 0.0, %v1108
    %v1110 = vpop.f32.mrf.mxu0
    %1111 = vmatprep.mubr.bf16.mxu0 %v534
    %1112 = vmatmul.mubr.bf16.gmra.mxu0 %v533
    %v1113 = vpop.f32.mrf.mxu0
    %v1114 = vadd.f32 0.0, %v1113
    %v1115 = vpop.f32.mrf.mxu0
    %v1116 = vpop.f32.mrf.mxu0
    %v1117 = vadd.f32 0.0, %v1116
    %v1118 = vpop.f32.mrf.mxu0
    %1119 = vmatprep.mubr.bf16.mxu0 %v543
    %1120 = vmatmul.mubr.bf16.gmra.mxu0 %v542
    %v1121 = vpop.f32.mrf.mxu0
    %v1122 = vadd.f32 0.0, %v1121
    %v1123 = vpop.f32.mrf.mxu0
    %v1124 = vpop.f32.mrf.mxu0
    %v1125 = vadd.f32 0.0, %v1124
    %v1126 = vpop.f32.mrf.mxu0
    %1127 = vmatprep.mubr.bf16.mxu0 %v549
    %1128 = vmatmul.mubr.bf16.gmra.mxu0 %v548
    %v1129 = vpop.f32.mrf.mxu0
    %v1130 = vadd.f32 0.0, %v1129
    %v1131 = vpop.f32.mrf.mxu0
    %v1132 = vpop.f32.mrf.mxu0
    %v1133 = vadd.f32 0.0, %v1132
    %v1134 = vpop.f32.mrf.mxu0
    %1135 = vmatprep.mubr.bf16.mxu0 %v555
    %1136 = vmatmul.mubr.bf16.gmra.mxu0 %v554
    %v1137 = vpop.f32.mrf.mxu0
    %v1138 = vadd.f32 0.0, %v1137
    %v1139 = vpop.f32.mrf.mxu0
    %v1140 = vpop.f32.mrf.mxu0
    %v1141 = vadd.f32 0.0, %v1140
    %v1142 = vpop.f32.mrf.mxu0
    %1143 = vmatprep.mubr.bf16.mxu0 %v561
    %1144 = vmatmul.mubr.bf16.gmra.mxu0 %v560
    %v1145 = vpop.f32.mrf.mxu0
    %v1146 = vadd.f32 0.0, %v1145
    %v1147 = vpop.f32.mrf.mxu0
    %v1148 = vpop.f32.mrf.mxu0
    %v1149 = vadd.f32 0.0, %v1148
    %v1150 = vpop.f32.mrf.mxu0
    %1151 = vdwg.mxu0
    %1152 = vmatprep.subr.bf16.mxu0 0
    %1153 = vmatpush1.bf16.msra.mxu0 %v934
    %1154 = vmatprep.subr.bf16.mxu0 0
    %1155 = vmatpush1.bf16.msra.mxu0 %v933
    %1156 = vmatprep.subr.bf16.mxu0 0
    %1157 = vmatpush1.bf16.msra.mxu0 %v932
    %1158 = vmatprep.subr.bf16.mxu0 0
    %1159 = vmatpush1.bf16.msra.mxu0 %v931
    %1160 = vmatprep.subr.bf16.mxu0 0
    %1161 = vmatpush1.bf16.msra.mxu0 %v930
    %1162 = vmatprep.subr.bf16.mxu0 0
    %1163 = vmatpush1.bf16.msra.mxu0 %v929
    %1164 = vmatprep.subr.bf16.mxu0 0
    %1165 = vmatpush1.bf16.msra.mxu0 %v928
    %1166 = vmatprep.subr.bf16.mxu0 0
    %1167 = vmatpush1.bf16.msra.mxu0 %v927
    %1168 = vmatprep.subr.bf16.mxu0 0
    %1169 = vmatpush2.bf16.msra.mxu0 %v942
    %1170 = vmatprep.subr.bf16.mxu0 0
    %1171 = vmatpush2.bf16.msra.mxu0 %v941
    %1172 = vmatprep.subr.bf16.mxu0 0
    %1173 = vmatpush2.bf16.msra.mxu0 %v940
    %1174 = vmatprep.subr.bf16.mxu0 0
    %1175 = vmatpush2.bf16.msra.mxu0 %v939
    %1176 = vmatprep.subr.bf16.mxu0 0
    %1177 = vmatpush2.bf16.msra.mxu0 %v938
    %1178 = vmatprep.subr.bf16.mxu0 0
    %1179 = vmatpush2.bf16.msra.mxu0 %v937
    %1180 = vmatprep.subr.bf16.mxu0 0
    %1181 = vmatpush2.bf16.msra.mxu0 %v936
    %1182 = vmatprep.subr.bf16.mxu0 0
    %1183 = vmatpush2.bf16.msra.mxu0 %v935
    %1184 = vmatprep.mubr.bf16.mxu0 %v518
    %1185 = vmatmul.mubr.bf16.gmra.mxu0 %v517
    %v1186 = vpop.f32.mrf.mxu0
    %v1187 = vadd.f32 %v1090, %v1186
    %v1188 = vpop.f32.mrf.mxu0
    %v1189 = vpop.f32.mrf.mxu0
    %v1190 = vadd.f32 %v1093, %v1189
    %v1191 = vpop.f32.mrf.mxu0
    %1192 = vmatprep.mubr.bf16.mxu0 %v524
    %1193 = vmatmul.mubr.bf16.gmra.mxu0 %v523
    %v1194 = vpop.f32.mrf.mxu0
    %v1195 = vadd.f32 %v1098, %v1194
    %v1196 = vpop.f32.mrf.mxu0
    %v1197 = vpop.f32.mrf.mxu0
    %v1198 = vadd.f32 %v1101, %v1197
    %v1199 = vpop.f32.mrf.mxu0
    %1200 = vmatprep.mubr.bf16.mxu0 %v530
    %1201 = vmatmul.mubr.bf16.gmra.mxu0 %v529
    %v1202 = vpop.f32.mrf.mxu0
    %v1203 = vadd.f32 %v1106, %v1202
    %v1204 = vpop.f32.mrf.mxu0
    %v1205 = vpop.f32.mrf.mxu0
    %v1206 = vadd.f32 %v1109, %v1205
    %v1207 = vpop.f32.mrf.mxu0
    %1208 = vmatprep.mubr.bf16.mxu0 %v536
    %1209 = vmatmul.mubr.bf16.gmra.mxu0 %v535
    %v1210 = vpop.f32.mrf.mxu0
    %v1211 = vadd.f32 %v1114, %v1210
    %v1212 = vpop.f32.mrf.mxu0
    %v1213 = vpop.f32.mrf.mxu0
    %v1214 = vadd.f32 %v1117, %v1213
    %v1215 = vpop.f32.mrf.mxu0
    %1216 = vmatprep.mubr.bf16.mxu0 %v545
    %1217 = vmatmul.mubr.bf16.gmra.mxu0 %v544
    %v1218 = vpop.f32.mrf.mxu0
    %v1219 = vadd.f32 %v1122, %v1218
    %v1220 = vpop.f32.mrf.mxu0
    %v1221 = vpop.f32.mrf.mxu0
    %v1222 = vadd.f32 %v1125, %v1221
    %v1223 = vpop.f32.mrf.mxu0
    %1224 = vmatprep.mubr.bf16.mxu0 %v551
    %1225 = vmatmul.mubr.bf16.gmra.mxu0 %v550
    %v1226 = vpop.f32.mrf.mxu0
    %v1227 = vadd.f32 %v1130, %v1226
    %v1228 = vpop.f32.mrf.mxu0
    %v1229 = vpop.f32.mrf.mxu0
    %v1230 = vadd.f32 %v1133, %v1229
    %v1231 = vpop.f32.mrf.mxu0
    %1232 = vmatprep.mubr.bf16.mxu0 %v557
    %1233 = vmatmul.mubr.bf16.gmra.mxu0 %v556
    %v1234 = vpop.f32.mrf.mxu0
    %v1235 = vadd.f32 %v1138, %v1234
    %v1236 = vpop.f32.mrf.mxu0
    %v1237 = vpop.f32.mrf.mxu0
    %v1238 = vadd.f32 %v1141, %v1237
    %v1239 = vpop.f32.mrf.mxu0
    %1240 = vmatprep.mubr.bf16.mxu0 %v563
    %1241 = vmatmul.mubr.bf16.gmra.mxu0 %v562
    %v1242 = vpop.f32.mrf.mxu0
    %v1243 = vadd.f32 %v1146, %v1242
    %v1244 = vpop.f32.mrf.mxu0
    %v1245 = vpop.f32.mrf.mxu0
    %v1246 = vadd.f32 %v1149, %v1245
    %v1247 = vpop.f32.mrf.mxu0
    %1248 = vdwg.mxu0
    %1249 = vmatprep.subr.bf16.mxu0 0
    %1250 = vmatpush1.bf16.msra.mxu0 %v950
    %1251 = vmatprep.subr.bf16.mxu0 0
    %1252 = vmatpush1.bf16.msra.mxu0 %v949
    %1253 = vmatprep.subr.bf16.mxu0 0
    %1254 = vmatpush1.bf16.msra.mxu0 %v948
    %1255 = vmatprep.subr.bf16.mxu0 0
    %1256 = vmatpush1.bf16.msra.mxu0 %v947
    %1257 = vmatprep.subr.bf16.mxu0 0
    %1258 = vmatpush1.bf16.msra.mxu0 %v946
    %1259 = vmatprep.subr.bf16.mxu0 0
    %1260 = vmatpush1.bf16.msra.mxu0 %v945
    %1261 = vmatprep.subr.bf16.mxu0 0
    %1262 = vmatpush1.bf16.msra.mxu0 %v944
    %1263 = vmatprep.subr.bf16.mxu0 0
    %1264 = vmatpush1.bf16.msra.mxu0 %v943
    %1265 = vmatprep.subr.bf16.mxu0 0
    %1266 = vmatpush2.bf16.msra.mxu0 %v958
    %1267 = vmatprep.subr.bf16.mxu0 0
    %1268 = vmatpush2.bf16.msra.mxu0 %v957
    %1269 = vmatprep.subr.bf16.mxu0 0
    %1270 = vmatpush2.bf16.msra.mxu0 %v956
    %1271 = vmatprep.subr.bf16.mxu0 0
    %1272 = vmatpush2.bf16.msra.mxu0 %v955
    %1273 = vmatprep.subr.bf16.mxu0 0
    %1274 = vmatpush2.bf16.msra.mxu0 %v954
    %1275 = vmatprep.subr.bf16.mxu0 0
    %1276 = vmatpush2.bf16.msra.mxu0 %v953
    %1277 = vmatprep.subr.bf16.mxu0 0
    %1278 = vmatpush2.bf16.msra.mxu0 %v952
    %1279 = vmatprep.subr.bf16.mxu0 0
    %1280 = vmatpush2.bf16.msra.mxu0 %v951
    %1281 = vmatprep.mubr.bf16.mxu0 %v520
    %1282 = vmatmul.mubr.bf16.gmra.mxu0 %v519
    %v1283 = vpop.f32.mrf.mxu0
    %v1284 = vadd.f32 %v1187, %v1283
    %v1285 = vpop.f32.mrf.mxu0
    %v1286 = vpop.f32.mrf.mxu0
    %v1287 = vadd.f32 %v1190, %v1286
    %v1288 = vpop.f32.mrf.mxu0
    %1289 = vmatprep.mubr.bf16.mxu0 %v526
    %1290 = vmatmul.mubr.bf16.gmra.mxu0 %v525
    %v1291 = vpop.f32.mrf.mxu0
    %v1292 = vadd.f32 %v1195, %v1291
    %v1293 = vpop.f32.mrf.mxu0
    %v1294 = vpop.f32.mrf.mxu0
    %v1295 = vadd.f32 %v1198, %v1294
    %v1296 = vpop.f32.mrf.mxu0
    %1297 = vmatprep.mubr.bf16.mxu0 %v532
    %1298 = vmatmul.mubr.bf16.gmra.mxu0 %v531
    %v1299 = vpop.f32.mrf.mxu0
    %v1300 = vadd.f32 %v1203, %v1299
    %v1301 = vpop.f32.mrf.mxu0
    %v1302 = vpop.f32.mrf.mxu0
    %v1303 = vadd.f32 %v1206, %v1302
    %v1304 = vpop.f32.mrf.mxu0
    %1305 = vmatprep.mubr.bf16.mxu0 %v538
    %1306 = vmatmul.mubr.bf16.gmra.mxu0 %v537
    %v1307 = vpop.f32.mrf.mxu0
    %v1308 = vadd.f32 %v1211, %v1307
    %v1309 = vpop.f32.mrf.mxu0
    %v1310 = vpop.f32.mrf.mxu0
    %v1311 = vadd.f32 %v1214, %v1310
    %v1312 = vpop.f32.mrf.mxu0
    %1313 = vmatprep.mubr.bf16.mxu0 %v547
    %1314 = vmatmul.mubr.bf16.gmra.mxu0 %v546
    %v1315 = vpop.f32.mrf.mxu0
    %v1316 = vadd.f32 %v1219, %v1315
    %v1317 = vpop.f32.mrf.mxu0
    %v1318 = vpop.f32.mrf.mxu0
    %v1319 = vadd.f32 %v1222, %v1318
    %v1320 = vpop.f32.mrf.mxu0
    %1321 = vmatprep.mubr.bf16.mxu0 %v553
    %1322 = vmatmul.mubr.bf16.gmra.mxu0 %v552
    %v1323 = vpop.f32.mrf.mxu0
    %v1324 = vadd.f32 %v1227, %v1323
    %v1325 = vpop.f32.mrf.mxu0
    %v1326 = vpop.f32.mrf.mxu0
    %v1327 = vadd.f32 %v1230, %v1326
    %v1328 = vpop.f32.mrf.mxu0
    %1329 = vmatprep.mubr.bf16.mxu0 %v559
    %1330 = vmatmul.mubr.bf16.gmra.mxu0 %v558
    %v1331 = vpop.f32.mrf.mxu0
    %v1332 = vadd.f32 %v1235, %v1331
    %v1333 = vpop.f32.mrf.mxu0
    %v1334 = vpop.f32.mrf.mxu0
    %v1335 = vadd.f32 %v1238, %v1334
    %v1336 = vpop.f32.mrf.mxu0
    %1337 = vmatprep.mubr.bf16.mxu0 %v565
    %1338 = vmatmul.mubr.bf16.gmra.mxu0 %v564
    %v1339 = vpop.f32.mrf.mxu0
    %v1340 = vadd.f32 %v1243, %v1339
    %v1341 = vpop.f32.mrf.mxu0
    %v1342 = vpop.f32.mrf.mxu0
    %v1343 = vadd.f32 %v1246, %v1342
    %v1344 = vpop.f32.mrf.mxu0
    %1345 = vdwg.mxu0
    %1346 = vmatprep.subr.bf16.mxu0 0
    %1347 = vmatpush1.bf16.msra.mxu0 %v966
    %1348 = vmatprep.subr.bf16.mxu0 0
    %1349 = vmatpush1.bf16.msra.mxu0 %v965
    %1350 = vmatprep.subr.bf16.mxu0 0
    %1351 = vmatpush1.bf16.msra.mxu0 %v964
    %1352 = vmatprep.subr.bf16.mxu0 0
    %1353 = vmatpush1.bf16.msra.mxu0 %v963
    %1354 = vmatprep.subr.bf16.mxu0 0
    %1355 = vmatpush1.bf16.msra.mxu0 %v962
    %1356 = vmatprep.subr.bf16.mxu0 0
    %1357 = vmatpush1.bf16.msra.mxu0 %v961
    %1358 = vmatprep.subr.bf16.mxu0 0
    %1359 = vmatpush1.bf16.msra.mxu0 %v960
    %1360 = vmatprep.subr.bf16.mxu0 0
    %1361 = vmatpush1.bf16.msra.mxu0 %v959
    %1362 = vmatprep.subr.bf16.mxu0 0
    %1363 = vmatpush2.bf16.msra.mxu0 %v974
    %1364 = vmatprep.subr.bf16.mxu0 0
    %1365 = vmatpush2.bf16.msra.mxu0 %v973
    %1366 = vmatprep.subr.bf16.mxu0 0
    %1367 = vmatpush2.bf16.msra.mxu0 %v972
    %1368 = vmatprep.subr.bf16.mxu0 0
    %1369 = vmatpush2.bf16.msra.mxu0 %v971
    %1370 = vmatprep.subr.bf16.mxu0 0
    %1371 = vmatpush2.bf16.msra.mxu0 %v970
    %1372 = vmatprep.subr.bf16.mxu0 0
    %1373 = vmatpush2.bf16.msra.mxu0 %v969
    %1374 = vmatprep.subr.bf16.mxu0 0
    %1375 = vmatpush2.bf16.msra.mxu0 %v968
    %1376 = vmatprep.subr.bf16.mxu0 0
    %1377 = vmatpush2.bf16.msra.mxu0 %v967
    %1378 = vmatprep.mubr.bf16.mxu0 %v522
    %1379 = vmatmul.mubr.bf16.gmra.mxu0 %v521
    %v1380 = vpop.f32.mrf.mxu0
    %v1381 = vadd.f32 %v1284, %v1380
    %v1382 = vpop.f32.mrf.mxu0
    %v1383 = vpop.f32.mrf.mxu0
    %v1384 = vadd.f32 %v1287, %v1383
    %v1385 = vpop.f32.mrf.mxu0
    %1386 = vmatprep.mubr.bf16.mxu0 %v528
    %1387 = vmatmul.mubr.bf16.gmra.mxu0 %v527
    %v1388 = vpop.f32.mrf.mxu0
    %v1389 = vadd.f32 %v1292, %v1388
    %v1390 = vpop.f32.mrf.mxu0
    %v1391 = vpop.f32.mrf.mxu0
    %v1392 = vadd.f32 %v1295, %v1391
    %v1393 = vpop.f32.mrf.mxu0
    %1394 = vmatprep.mubr.bf16.mxu0 %v534
    %1395 = vmatmul.mubr.bf16.gmra.mxu0 %v533
    %v1396 = vpop.f32.mrf.mxu0
    %v1397 = vadd.f32 %v1300, %v1396
    %v1398 = vpop.f32.mrf.mxu0
    %v1399 = vpop.f32.mrf.mxu0
    %v1400 = vadd.f32 %v1303, %v1399
    %v1401 = vpop.f32.mrf.mxu0
    %1402 = vmatprep.mubr.bf16.mxu0 %v540
    %1403 = vmatmul.mubr.bf16.gmra.mxu0 %v539
    %v1404 = vpop.f32.mrf.mxu0
    %v1405 = vadd.f32 %v1308, %v1404
    %v1406 = vpop.f32.mrf.mxu0
    %v1407 = vpop.f32.mrf.mxu0
    %v1408 = vadd.f32 %v1311, %v1407
    %v1409 = vpop.f32.mrf.mxu0
    %1410 = vmatprep.mubr.bf16.mxu0 %v549
    %1411 = vmatmul.mubr.bf16.gmra.mxu0 %v548
    %v1412 = vpop.f32.mrf.mxu0
    %v1413 = vadd.f32 %v1316, %v1412
    %v1414 = vpop.f32.mrf.mxu0
    %v1415 = vpop.f32.mrf.mxu0
    %v1416 = vadd.f32 %v1319, %v1415
    %v1417 = vpop.f32.mrf.mxu0
    %1418 = vmatprep.mubr.bf16.mxu0 %v555
    %1419 = vmatmul.mubr.bf16.gmra.mxu0 %v554
    %v1420 = vpop.f32.mrf.mxu0
    %v1421 = vadd.f32 %v1324, %v1420
    %v1422 = vpop.f32.mrf.mxu0
    %v1423 = vpop.f32.mrf.mxu0
    %v1424 = vadd.f32 %v1327, %v1423
    %v1425 = vpop.f32.mrf.mxu0
    %1426 = vmatprep.mubr.bf16.mxu0 %v561
    %1427 = vmatmul.mubr.bf16.gmra.mxu0 %v560
    %v1428 = vpop.f32.mrf.mxu0
    %v1429 = vadd.f32 %v1332, %v1428
    %v1430 = vpop.f32.mrf.mxu0
    %v1431 = vpop.f32.mrf.mxu0
    %v1432 = vadd.f32 %v1335, %v1431
    %v1433 = vpop.f32.mrf.mxu0
    %1434 = vmatprep.mubr.bf16.mxu0 %v567
    %1435 = vmatmul.mubr.bf16.gmra.mxu0 %v566
    %v1436 = vpop.f32.mrf.mxu0
    %v1437 = vadd.f32 %v1340, %v1436
    %v1438 = vpop.f32.mrf.mxu0
    %v1439 = vpop.f32.mrf.mxu0
    %v1440 = vadd.f32 %v1343, %v1439
    %v1441 = vpop.f32.mrf.mxu0
    %1442 = vdwg.mxu0
    %1443 = vmatprep.subr.bf16.mxu0 0
    %1444 = vmatpush1.bf16.msra.mxu0 %v982
    %1445 = vmatprep.subr.bf16.mxu0 0
    %1446 = vmatpush1.bf16.msra.mxu0 %v981
    %1447 = vmatprep.subr.bf16.mxu0 0
    %1448 = vmatpush1.bf16.msra.mxu0 %v980
    %1449 = vmatprep.subr.bf16.mxu0 0
    %1450 = vmatpush1.bf16.msra.mxu0 %v979
    %1451 = vmatprep.subr.bf16.mxu0 0
    %1452 = vmatpush1.bf16.msra.mxu0 %v978
    %1453 = vmatprep.subr.bf16.mxu0 0
    %1454 = vmatpush1.bf16.msra.mxu0 %v977
    %1455 = vmatprep.subr.bf16.mxu0 0
    %1456 = vmatpush1.bf16.msra.mxu0 %v976
    %1457 = vmatprep.subr.bf16.mxu0 0
    %1458 = vmatpush1.bf16.msra.mxu0 %v975
    %1459 = vmatprep.subr.bf16.mxu0 0
    %1460 = vmatpush2.bf16.msra.mxu0 0
    %1461 = vmatprep.subr.bf16.mxu0 0
    %1462 = vmatpush2.bf16.msra.mxu0 0
    %1463 = vmatprep.subr.bf16.mxu0 0
    %1464 = vmatpush2.bf16.msra.mxu0 0
    %1465 = vmatprep.subr.bf16.mxu0 0
    %1466 = vmatpush2.bf16.msra.mxu0 0
    %1467 = vmatprep.subr.bf16.mxu0 0
    %1468 = vmatpush2.bf16.msra.mxu0 0
    %1469 = vmatprep.subr.bf16.mxu0 0
    %1470 = vmatpush2.bf16.msra.mxu0 0
    %1471 = vmatprep.subr.bf16.mxu0 0
    %1472 = vmatpush2.bf16.msra.mxu0 0
    %1473 = vmatprep.subr.bf16.mxu0 0
    %1474 = vmatpush2.bf16.msra.mxu0 0
    %1475 = vmatprep.mubr.bf16.mxu0 0
    %1476 = vmatmul.mubr.bf16.gmra.mxu0 %v523
    %v1477 = vpop.f32.mrf.mxu0
    %v1478 = vadd.f32 %v1381, %v1477
    %v1479 = vpop.f32.mrf.mxu0
    %v1480 = vpop.f32.mrf.mxu0
    %v1481 = vadd.f32 %v1384, %v1480
    %v1482 = vpop.f32.mrf.mxu0
    %1483 = vmatprep.mubr.bf16.mxu0 0
    %1484 = vmatmul.mubr.bf16.gmra.mxu0 %v529
    %v1485 = vpop.f32.mrf.mxu0
    %v1486 = vadd.f32 %v1389, %v1485
    %v1487 = vpop.f32.mrf.mxu0
    %v1488 = vpop.f32.mrf.mxu0
    %v1489 = vadd.f32 %v1392, %v1488
    %v1490 = vpop.f32.mrf.mxu0
    %1491 = vmatprep.mubr.bf16.mxu0 0
    %1492 = vmatmul.mubr.bf16.gmra.mxu0 %v535
    %v1493 = vpop.f32.mrf.mxu0
    %v1494 = vadd.f32 %v1397, %v1493
    %v1495 = vpop.f32.mrf.mxu0
    %v1496 = vpop.f32.mrf.mxu0
    %v1497 = vadd.f32 %v1400, %v1496
    %v1498 = vpop.f32.mrf.mxu0
    %1499 = vmatprep.mubr.bf16.mxu0 0
    %1500 = vmatmul.mubr.bf16.gmra.mxu0 %v541
    %v1501 = vpop.f32.mrf.mxu0
    %v1502 = vadd.f32 %v1405, %v1501
    %v1503 = vpop.f32.mrf.mxu0
    %v1504 = vpop.f32.mrf.mxu0
    %v1505 = vadd.f32 %v1408, %v1504
    %v1506 = vpop.f32.mrf.mxu0
    %1507 = vmatprep.mubr.bf16.mxu0 0
    %1508 = vmatmul.mubr.bf16.gmra.mxu0 %v550
    %v1509 = vpop.f32.mrf.mxu0
    %v1510 = vadd.f32 %v1413, %v1509
    %v1511 = vpop.f32.mrf.mxu0
    %v1512 = vpop.f32.mrf.mxu0
    %v1513 = vadd.f32 %v1416, %v1512
    %v1514 = vpop.f32.mrf.mxu0
    %1515 = vmatprep.mubr.bf16.mxu0 0
    %1516 = vmatmul.mubr.bf16.gmra.mxu0 %v556
    %v1517 = vpop.f32.mrf.mxu0
    %v1518 = vadd.f32 %v1421, %v1517
    %v1519 = vpop.f32.mrf.mxu0
    %v1520 = vpop.f32.mrf.mxu0
    %v1521 = vadd.f32 %v1424, %v1520
    %v1522 = vpop.f32.mrf.mxu0
    %1523 = vmatprep.mubr.bf16.mxu0 0
    %1524 = vmatmul.mubr.bf16.gmra.mxu0 %v562
    %v1525 = vpop.f32.mrf.mxu0
    %v1526 = vadd.f32 %v1429, %v1525
    %v1527 = vpop.f32.mrf.mxu0
    %v1528 = vpop.f32.mrf.mxu0
    %v1529 = vadd.f32 %v1432, %v1528
    %v1530 = vpop.f32.mrf.mxu0
    %1531 = vmatprep.mubr.bf16.mxu0 0
    %1532 = vmatmul.mubr.bf16.gmra.mxu0 %v568
    %v1533 = vpop.f32.mrf.mxu0
    %v1534 = vadd.f32 %v1437, %v1533
    %v1535 = vpop.f32.mrf.mxu0
    %v1536 = vpop.f32.mrf.mxu0
    %v1537 = vadd.f32 %v1440, %v1536
    %v1538 = vpop.f32.mrf.mxu0
    %1539 = vdwg.mxu0
    %v1540 = vld [vmem:[%s2] sm:$0x1]
    %v1541 = vld [vmem:[%s3] sm:$0x1]
    %v1542 = vadd.f32 %v1478, %v1481
    %v1543 = vadd.f32 %v1542, %v1486
    %v1544 = vadd.f32 %v1543, %v1489
    %v1545 = vadd.f32 %v1544, %v1494
    %v1546 = vadd.f32 %v1545, %v1497
    %v1547 = vadd.f32 %v1546, %v1502
    %v1548 = vadd.f32 %v1547, %v1505
    %v1549 = vadd.f32 %v1548, %v1510
    %v1550 = vadd.f32 %v1549, %v1513
    %v1551 = vadd.f32 %v1550, %v1518
    %v1552 = vadd.f32 %v1551, %v1521
    %v1553 = vadd.f32 %v1552, %v1526
    %v1554 = vadd.f32 %v1553, %v1529
    %v1555 = vadd.f32 %v1554, %v1534
    %v1556 = vadd.f32 %v1555, %v1537
    %v1557 = vrot.slane %v1556, 4
    %v1558 = vadd.f32 %v1556, %v1557
    %v1559 = vrot.slane %v1558, 2
    %v1560 = vadd.f32 %v1558, %v1559
    %v1561 = vrot.slane %v1560, 1
    %v1562 = vadd.f32 %v1560, %v1561
    %v1563 = vrcp.pop 128.0
    %v1564 = vmul.f32 %v1562, %v1563
    %v1565 = vsub.f32 %v1478, %v1564
    %v1566 = vsub.f32 %v1481, %v1564
    %v1567 = vsub.f32 %v1486, %v1564
    %v1568 = vsub.f32 %v1489, %v1564
    %v1569 = vsub.f32 %v1494, %v1564
    %v1570 = vsub.f32 %v1497, %v1564
    %v1571 = vsub.f32 %v1502, %v1564
    %v1572 = vsub.f32 %v1505, %v1564
    %v1573 = vsub.f32 %v1510, %v1564
    %v1574 = vsub.f32 %v1513, %v1564
    %v1575 = vsub.f32 %v1518, %v1564
    %v1576 = vsub.f32 %v1521, %v1564
    %v1577 = vsub.f32 %v1526, %v1564
    %v1578 = vsub.f32 %v1529, %v1564
    %v1579 = vsub.f32 %v1534, %v1564
    %v1580 = vsub.f32 %v1537, %v1564
    %v1581 = vmul.f32 %v1565, %v1565
    %v1582 = vmul.f32 %v1566, %v1566
    %v1583 = vmul.f32 %v1567, %v1567
    %v1584 = vmul.f32 %v1568, %v1568
    %v1585 = vmul.f32 %v1569, %v1569
    %v1586 = vmul.f32 %v1570, %v1570
    %v1587 = vmul.f32 %v1571, %v1571
    %v1588 = vmul.f32 %v1572, %v1572
    %v1589 = vmul.f32 %v1573, %v1573
    %v1590 = vmul.f32 %v1574, %v1574
    %v1591 = vmul.f32 %v1575, %v1575
    %v1592 = vmul.f32 %v1576, %v1576
    %v1593 = vmul.f32 %v1577, %v1577
    %v1594 = vmul.f32 %v1578, %v1578
    %v1595 = vmul.f32 %v1579, %v1579
    %v1596 = vmul.f32 %v1580, %v1580
    %v1597 = vadd.f32 %v1581, %v1582
    %v1598 = vadd.f32 %v1597, %v1583
    %v1599 = vadd.f32 %v1598, %v1584
    %v1600 = vadd.f32 %v1599, %v1585
    %v1601 = vadd.f32 %v1600, %v1586
    %v1602 = vadd.f32 %v1601, %v1587
    %v1603 = vadd.f32 %v1602, %v1588
    %v1604 = vadd.f32 %v1603, %v1589
    %v1605 = vadd.f32 %v1604, %v1590
    %v1606 = vadd.f32 %v1605, %v1591
    %v1607 = vadd.f32 %v1606, %v1592
    %v1608 = vadd.f32 %v1607, %v1593
    %v1609 = vadd.f32 %v1608, %v1594
    %v1610 = vadd.f32 %v1609, %v1595
    %v1611 = vadd.f32 %v1610, %v1596
    %v1612 = vrot.slane %v1611, 4
    %v1613 = vadd.f32 %v1611, %v1612
    %v1614 = vrot.slane %v1613, 2
    %v1615 = vadd.f32 %v1613, %v1614
    %v1616 = vrot.slane %v1615, 1
    %v1617 = vadd.f32 %v1615, %v1616
    %v1618 = vmul.f32 %v1617, %v1563
    %v1619 = vmax.f32 %v1618, 0.0
    %v1620 = vadd.f32 %v1619, 1e-05
    %v1621 = vrsqrt.pop %v1620
    %v1622 = vmul.f32 %v1540, %v1621
    %v1624 = vlaneseq
    %v1625 = vshrl.u32 %v1624, 7
    %v1626 = vsub.s32 0, %v1625
    %v1627 = vrot.slane %v1622, %v1626
    %v1629 = vmul.f32 %v1565, %v1627
    %v1630 = vmul.f32 %v1566, %v1627
    %v1631 = vmul.f32 %v1567, %v1627
    %v1632 = vmul.f32 %v1568, %v1627
    %v1633 = vmul.f32 %v1569, %v1627
    %v1634 = vmul.f32 %v1570, %v1627
    %v1635 = vmul.f32 %v1571, %v1627
    %v1636 = vmul.f32 %v1572, %v1627
    %v1637 = vmul.f32 %v1573, %v1627
    %v1638 = vmul.f32 %v1574, %v1627
    %v1639 = vmul.f32 %v1575, %v1627
    %v1640 = vmul.f32 %v1576, %v1627
    %v1641 = vmul.f32 %v1577, %v1627
    %v1642 = vmul.f32 %v1578, %v1627
    %v1643 = vmul.f32 %v1579, %v1627
    %v1644 = vmul.f32 %v1580, %v1627
    %v1646 = vlaneseq
    %v1647 = vshrl.u32 %v1646, 7
    %v1648 = vsub.s32 0, %v1647
    %v1649 = vrot.slane %v1541, %v1648
    %v1651 = vadd.f32 %v1629, %v1649
    %v1652 = vadd.f32 %v1630, %v1649
    %v1653 = vadd.f32 %v1631, %v1649
    %v1654 = vadd.f32 %v1632, %v1649
    %v1655 = vadd.f32 %v1633, %v1649
    %v1656 = vadd.f32 %v1634, %v1649
    %v1657 = vadd.f32 %v1635, %v1649
    %v1658 = vadd.f32 %v1636, %v1649
    %v1659 = vadd.f32 %v1637, %v1649
    %v1660 = vadd.f32 %v1638, %v1649
    %v1661 = vadd.f32 %v1639, %v1649
    %v1662 = vadd.f32 %v1640, %v1649
    %v1663 = vadd.f32 %v1641, %v1649
    %v1664 = vadd.f32 %v1642, %v1649
    %v1665 = vadd.f32 %v1643, %v1649
    %v1666 = vadd.f32 %v1644, %v1649
    %v1667 = vmax.f32 %v1651, 0.0
    %v1668 = vmax.f32 %v1652, 0.0
    %v1669 = vmax.f32 %v1653, 0.0
    %v1670 = vmax.f32 %v1654, 0.0
    %v1671 = vmax.f32 %v1655, 0.0
    %v1672 = vmax.f32 %v1656, 0.0
    %v1673 = vmax.f32 %v1657, 0.0
    %v1674 = vmax.f32 %v1658, 0.0
    %v1675 = vmax.f32 %v1659, 0.0
    %v1676 = vmax.f32 %v1660, 0.0
    %v1677 = vmax.f32 %v1661, 0.0
    %v1678 = vmax.f32 %v1662, 0.0
    %v1679 = vmax.f32 %v1663, 0.0
    %v1680 = vmax.f32 %v1664, 0.0
    %v1681 = vmax.f32 %v1665, 0.0
    %v1682 = vmax.f32 %v1666, 0.0
    %v1683 = vpack.c.bf16 %v1667, %v1667
    %v1684 = vpack.c.bf16 %v1668, %v1668
    %v1685 = vpack.c.bf16 %v1669, %v1669
    %v1686 = vpack.c.bf16 %v1670, %v1670
    %v1687 = vpack.c.bf16 %v1671, %v1671
    %v1688 = vpack.c.bf16 %v1672, %v1672
    %v1689 = vpack.c.bf16 %v1673, %v1673
    %v1690 = vpack.c.bf16 %v1674, %v1674
    %v1691 = vpack.c.bf16 %v1675, %v1675
    %v1692 = vpack.c.bf16 %v1676, %v1676
    %v1693 = vpack.c.bf16 %v1677, %v1677
    %v1694 = vpack.c.bf16 %v1678, %v1678
    %v1695 = vpack.c.bf16 %v1679, %v1679
    %v1696 = vpack.c.bf16 %v1680, %v1680
    %v1697 = vpack.c.bf16 %v1681, %v1681
    %v1698 = vpack.c.bf16 %v1682, %v1682
    %v1700 = vshrl.u32 %v1683, 16
    %v1702 = vrot.slane %v1700, 7
    %v1703 = vshll.u32 %v1683, 16
    %v1705 = vor.u32 %v1702, %v1703
    %v1707 = vshrl.u32 %v1684, 16
    %v1709 = vrot.slane %v1707, 7
    %v1710 = vshll.u32 %v1684, 16
    %v1712 = vor.u32 %v1709, %v1710
    %v1714 = vshrl.u32 %v1685, 16
    %v1716 = vrot.slane %v1714, 7
    %v1717 = vshll.u32 %v1685, 16
    %v1719 = vor.u32 %v1716, %v1717
    %v1721 = vshrl.u32 %v1686, 16
    %v1723 = vrot.slane %v1721, 7
    %v1724 = vshll.u32 %v1686, 16
    %v1726 = vor.u32 %v1723, %v1724
    %v1728 = vshrl.u32 %v1687, 16
    %v1730 = vrot.slane %v1728, 7
    %v1731 = vshll.u32 %v1687, 16
    %v1733 = vor.u32 %v1730, %v1731
    %v1735 = vshrl.u32 %v1688, 16
    %v1737 = vrot.slane %v1735, 7
    %v1738 = vshll.u32 %v1688, 16
    %v1740 = vor.u32 %v1737, %v1738
    %v1742 = vshrl.u32 %v1689, 16
    %v1744 = vrot.slane %v1742, 7
    %v1745 = vshll.u32 %v1689, 16
    %v1747 = vor.u32 %v1744, %v1745
    %v1749 = vshrl.u32 %v1690, 16
    %v1751 = vrot.slane %v1749, 7
    %v1752 = vshll.u32 %v1690, 16
    %v1754 = vor.u32 %v1751, %v1752
    %v1756 = vshrl.u32 %v1691, 16
    %v1758 = vrot.slane %v1756, 7
    %v1759 = vshll.u32 %v1691, 16
    %v1761 = vor.u32 %v1758, %v1759
    %v1763 = vshrl.u32 %v1692, 16
    %v1765 = vrot.slane %v1763, 7
    %v1766 = vshll.u32 %v1692, 16
    %v1768 = vor.u32 %v1765, %v1766
    %v1770 = vshrl.u32 %v1693, 16
    %v1772 = vrot.slane %v1770, 7
    %v1773 = vshll.u32 %v1693, 16
    %v1775 = vor.u32 %v1772, %v1773
    %v1777 = vshrl.u32 %v1694, 16
    %v1779 = vrot.slane %v1777, 7
    %v1780 = vshll.u32 %v1694, 16
    %v1782 = vor.u32 %v1779, %v1780
    %v1784 = vshrl.u32 %v1695, 16
    %v1786 = vrot.slane %v1784, 7
    %v1787 = vshll.u32 %v1695, 16
    %v1789 = vor.u32 %v1786, %v1787
    %v1791 = vshrl.u32 %v1696, 16
    %v1793 = vrot.slane %v1791, 7
    %v1794 = vshll.u32 %v1696, 16
    %v1796 = vor.u32 %v1793, %v1794
    %v1798 = vshrl.u32 %v1697, 16
    %v1800 = vrot.slane %v1798, 7
    %v1801 = vshll.u32 %v1697, 16
    %v1803 = vor.u32 %v1800, %v1801
    %v1805 = vshrl.u32 %v1698, 16
    %v1807 = vrot.slane %v1805, 7
    %v1808 = vshll.u32 %v1698, 16
    %v1810 = vor.u32 %v1807, %v1808
    %vm1827 = vcmask 1040384
    %vm1828 = vsmask.f32 256
    %vm1829 = vmand %vm1827, %vm1828
    %v1830 = vsel %vm1829, 0, %v1705
    %v1831 = vsel %vm1829, 0, %v1712
    %v1832 = vsel %vm1829, 0, %v1719
    %v1833 = vsel %vm1829, 0, %v1726
    %v1834 = vsel %vm1829, 0, %v1733
    %v1835 = vsel %vm1829, 0, %v1740
    %v1836 = vsel %vm1829, 0, %v1747
    %v1837 = vsel %vm1829, 0, %v1754
    %v1838 = vsel %vm1829, 0, %v1761
    %v1839 = vsel %vm1829, 0, %v1768
    %v1840 = vsel %vm1829, 0, %v1775
    %v1841 = vsel %vm1829, 0, %v1782
    %v1842 = vsel %vm1829, 0, %v1789
    %v1843 = vsel %vm1829, 0, %v1796
    %v1844 = vsel %vm1829, 0, %v1803
    %v1845 = vsel %vm1829, 0, %v1810
    %vm1846 = vcmask 1044480
    %vm1847 = vsmask.f32 4352
    %vm1848 = vmand %vm1846, %vm1847
    %v1849 = vsel %vm1848, %v1830, 0
    %v1850 = vsel %vm1848, %v1831, 0
    %v1851 = vsel %vm1848, %v1832, 0
    %v1852 = vsel %vm1848, %v1833, 0
    %v1853 = vsel %vm1848, %v1834, 0
    %v1854 = vsel %vm1848, %v1835, 0
    %v1855 = vsel %vm1848, %v1836, 0
    %v1856 = vsel %vm1848, %v1837, 0
    %v1857 = vsel %vm1848, %v1838, 0
    %v1858 = vsel %vm1848, %v1839, 0
    %v1859 = vsel %vm1848, %v1840, 0
    %v1860 = vsel %vm1848, %v1841, 0
    %v1861 = vsel %vm1848, %v1842, 0
    %v1862 = vsel %vm1848, %v1843, 0
    %v1863 = vsel %vm1848, %v1844, 0
    %v1864 = vsel %vm1848, %v1845, 0
    %v1866 = vshrl.u32 0, 16
    %v1868 = vshll.u32 0, 16
    %v1870 = vrot.slane %v1868, 1
    %v1871 = vor.u32 %v1866, %v1870
    %v1873 = vshrl.u32 %v1849, 16
    %v1875 = vshll.u32 %v1849, 16
    %v1877 = vrot.slane %v1875, 1
    %v1878 = vor.u32 %v1873, %v1877
    %v1880 = vshrl.u32 %v1850, 16
    %v1882 = vshll.u32 %v1850, 16
    %v1884 = vrot.slane %v1882, 1
    %v1885 = vor.u32 %v1880, %v1884
    %v1887 = vshrl.u32 %v1851, 16
    %v1889 = vshll.u32 %v1851, 16
    %v1891 = vrot.slane %v1889, 1
    %v1892 = vor.u32 %v1887, %v1891
    %v1894 = vshrl.u32 %v1852, 16
    %v1896 = vshll.u32 %v1852, 16
    %v1898 = vrot.slane %v1896, 1
    %v1899 = vor.u32 %v1894, %v1898
    %v1901 = vshrl.u32 %v1853, 16
    %v1903 = vshll.u32 %v1853, 16
    %v1905 = vrot.slane %v1903, 1
    %v1906 = vor.u32 %v1901, %v1905
    %v1908 = vshrl.u32 %v1854, 16
    %v1910 = vshll.u32 %v1854, 16
    %v1912 = vrot.slane %v1910, 1
    %v1913 = vor.u32 %v1908, %v1912
    %v1915 = vshrl.u32 %v1855, 16
    %v1917 = vshll.u32 %v1855, 16
    %v1919 = vrot.slane %v1917, 1
    %v1920 = vor.u32 %v1915, %v1919
    %v1922 = vshrl.u32 %v1857, 16
    %v1924 = vshll.u32 %v1857, 16
    %v1926 = vrot.slane %v1924, 1
    %v1927 = vor.u32 %v1922, %v1926
    %v1929 = vshrl.u32 %v1858, 16
    %v1931 = vshll.u32 %v1858, 16
    %v1933 = vrot.slane %v1931, 1
    %v1934 = vor.u32 %v1929, %v1933
    %v1936 = vshrl.u32 %v1859, 16
    %v1938 = vshll.u32 %v1859, 16
    %v1940 = vrot.slane %v1938, 1
    %v1941 = vor.u32 %v1936, %v1940
    %v1943 = vshrl.u32 %v1860, 16
    %v1945 = vshll.u32 %v1860, 16
    %v1947 = vrot.slane %v1945, 1
    %v1948 = vor.u32 %v1943, %v1947
    %v1950 = vshrl.u32 %v1861, 16
    %v1952 = vshll.u32 %v1861, 16
    %v1954 = vrot.slane %v1952, 1
    %v1955 = vor.u32 %v1950, %v1954
    %v1957 = vshrl.u32 %v1862, 16
    %v1959 = vshll.u32 %v1862, 16
    %v1961 = vrot.slane %v1959, 1
    %v1962 = vor.u32 %v1957, %v1961
    %v1964 = vshrl.u32 %v1863, 16
    %v1966 = vshll.u32 %v1863, 16
    %v1968 = vrot.slane %v1966, 1
    %v1969 = vor.u32 %v1964, %v1968
    %v1985 = vrot.slane 0, 1
    %v1986 = vrot.slane %v1849, 1
    %v1987 = vrot.slane %v1850, 1
    %v1988 = vrot.slane %v1851, 1
    %v1989 = vrot.slane %v1852, 1
    %v1990 = vrot.slane %v1853, 1
    %v1991 = vrot.slane %v1854, 1
    %v1992 = vrot.slane %v1855, 1
    %v1993 = vrot.slane %v1857, 1
    %v1994 = vrot.slane %v1858, 1
    %v1995 = vrot.slane %v1859, 1
    %v1996 = vrot.slane %v1860, 1
    %v1997 = vrot.slane %v1861, 1
    %v1998 = vrot.slane %v1862, 1
    %v1999 = vrot.slane %v1863, 1
    %v2001 = vshrl.u32 %v1856, 16
    %v2003 = vshll.u32 %v1856, 16
    %v2005 = vrot.slane %v2003, 1
    %v2006 = vor.u32 %v2001, %v2005
    %v2008 = vshrl.u32 %v1864, 16
    %v2010 = vshll.u32 %v1864, 16
    %v2012 = vrot.slane %v2010, 1
    %v2013 = vor.u32 %v2008, %v2012
    %v2016 = vrot.slane %v1856, 1
    %v2017 = vrot.slane %v1864, 1
    %v2018 = vunpack.c.l.b16 0
    %v2019 = vunpack.c.l.b16 %v1871
    %v2020 = vunpack.c.l.b16 %v1985
    %v2021 = vunpack.c.l.b16 %v1849
    %v2022 = vunpack.c.l.b16 %v1878
    %v2023 = vunpack.c.l.b16 %v1986
    %v2024 = vunpack.c.l.b16 %v1850
    %v2025 = vunpack.c.l.b16 %v1885
    %v2026 = vunpack.c.l.b16 %v1987
    %v2027 = vunpack.c.l.b16 %v1851
    %v2028 = vunpack.c.l.b16 %v1892
    %v2029 = vunpack.c.l.b16 %v1988
    %v2030 = vunpack.c.l.b16 %v1852
    %v2031 = vunpack.c.l.b16 %v1899
    %v2032 = vunpack.c.l.b16 %v1989
    %v2033 = vunpack.c.l.b16 %v1853
    %v2034 = vunpack.c.l.b16 %v1906
    %v2035 = vunpack.c.l.b16 %v1990
    %v2036 = vunpack.c.l.b16 %v1854
    %v2037 = vunpack.c.l.b16 %v1913
    %v2038 = vunpack.c.l.b16 %v1991
    %v2039 = vunpack.c.l.b16 %v1855
    %v2040 = vunpack.c.l.b16 %v1920
    %v2041 = vunpack.c.l.b16 %v1992
    %v2042 = vunpack.c.l.b16 %v1856
    %v2043 = vunpack.c.l.b16 %v2006
    %v2044 = vunpack.c.l.b16 %v2016
    %v2045 = vunpack.c.l.b16 %v1857
    %v2046 = vunpack.c.l.b16 %v1927
    %v2047 = vunpack.c.l.b16 %v1993
    %v2048 = vunpack.c.l.b16 %v1858
    %v2049 = vunpack.c.l.b16 %v1934
    %v2050 = vunpack.c.l.b16 %v1994
    %v2051 = vunpack.c.l.b16 %v1859
    %v2052 = vunpack.c.l.b16 %v1941
    %v2053 = vunpack.c.l.b16 %v1995
    %v2054 = vunpack.c.l.b16 %v1860
    %v2055 = vunpack.c.l.b16 %v1948
    %v2056 = vunpack.c.l.b16 %v1996
    %v2057 = vunpack.c.l.b16 %v1861
    %v2058 = vunpack.c.l.b16 %v1955
    %v2059 = vunpack.c.l.b16 %v1997
    %v2060 = vunpack.c.l.b16 %v1862
    %v2061 = vunpack.c.l.b16 %v1962
    %v2062 = vunpack.c.l.b16 %v1998
    %v2063 = vunpack.c.l.b16 %v1863
    %v2064 = vunpack.c.l.b16 %v1969
    %v2065 = vunpack.c.l.b16 %v1999
    %v2066 = vunpack.c.l.b16 %v1864
    %v2067 = vunpack.c.l.b16 %v2013
    %v2068 = vunpack.c.l.b16 %v2017
    %v2069 = vld [vmem:[%s4] sm:$0xf]
    %v2070 = vld [vmem:[%s4 + $0x4] sm:$0xf]
    %v2071 = vld [vmem:[%s4 + $0x8] sm:$0xf]
    %v2072 = vld [vmem:[%s4 + $0xc] sm:$0xf]
    %v2073 = vld [vmem:[%s4 + $0x10] sm:$0xf]
    %v2074 = vld [vmem:[%s4 + $0x14] sm:$0xf]
    %v2075 = vld [vmem:[%s4 + $0x18] sm:$0xf]
    %v2076 = vld [vmem:[%s4 + $0x1c] sm:$0xf]
    %v2077 = vld [vmem:[%s4 + $0x20] sm:$0xf]
    %v2078 = vld [vmem:[%s4 + $0x24] sm:$0xf]
    %v2079 = vld [vmem:[%s4 + $0x28] sm:$0xf]
    %v2080 = vld [vmem:[%s4 + $0x2c] sm:$0xf]
    %v2081 = vld [vmem:[%s4 + $0x30] sm:$0xf]
    %v2082 = vld [vmem:[%s4 + $0x34] sm:$0xf]
    %v2083 = vld [vmem:[%s4 + $0x38] sm:$0xf]
    %v2084 = vld [vmem:[%s4 + $0x3c] sm:$0xf]
    %v2085 = vld [vmem:[%s4 + $0x40] sm:$0xf]
    %v2086 = vld [vmem:[%s4 + $0x44] sm:$0xf]
    %v2087 = vld [vmem:[%s4 + $0x48] sm:$0xf]
    %v2088 = vld [vmem:[%s4 + $0x4c] sm:$0xf]
    %v2089 = vld [vmem:[%s4 + $0x50] sm:$0xf]
    %v2090 = vld [vmem:[%s4 + $0x54] sm:$0xf]
    %v2091 = vld [vmem:[%s4 + $0x58] sm:$0xf]
    %v2092 = vld [vmem:[%s4 + $0x5c] sm:$0xf]
    %v2093 = vld [vmem:[%s4 + $0x60] sm:$0xf]
    %v2094 = vld [vmem:[%s4 + $0x64] sm:$0xf]
    %v2095 = vld [vmem:[%s4 + $0x68] sm:$0xf]
    %v2096 = vld [vmem:[%s4 + $0x6c] sm:$0xf]
    %v2097 = vld [vmem:[%s4 + $0x70] sm:$0xf]
    %v2098 = vld [vmem:[%s4 + $0x74] sm:$0xf]
    %v2099 = vld [vmem:[%s4 + $0x78] sm:$0xf]
    %v2100 = vld [vmem:[%s4 + $0x7c] sm:$0xf]
    %v2101 = vld [vmem:[%s4 + $0x80] sm:$0xf]
    %v2102 = vld [vmem:[%s4 + $0x84] sm:$0xf]
    %v2103 = vld [vmem:[%s4 + $0x88] sm:$0xf]
    %v2104 = vld [vmem:[%s4 + $0x8c] sm:$0xf]
    %v2105 = vld [vmem:[%s4 + $0x90] sm:$0xf]
    %v2106 = vld [vmem:[%s4 + $0x94] sm:$0xf]
    %v2107 = vld [vmem:[%s4 + $0x98] sm:$0xf]
    %v2108 = vld [vmem:[%s4 + $0x9c] sm:$0xf]
    %v2109 = vld [vmem:[%s4 + $0xa0] sm:$0xf]
    %v2110 = vld [vmem:[%s4 + $0xa4] sm:$0xf]
    %v2111 = vld [vmem:[%s4 + $0xa8] sm:$0xf]
    %v2112 = vld [vmem:[%s4 + $0xac] sm:$0xf]
    %v2113 = vld [vmem:[%s4 + $0xb0] sm:$0xf]
    %v2114 = vld [vmem:[%s4 + $0xb4] sm:$0xf]
    %v2115 = vld [vmem:[%s4 + $0xb8] sm:$0xf]
    %v2116 = vld [vmem:[%s4 + $0xbc] sm:$0xf]
    %v2117 = vld [vmem:[%s4 + $0xc0] sm:$0xf]
    %v2118 = vld [vmem:[%s4 + $0xc4] sm:$0xf]
    %v2119 = vld [vmem:[%s4 + $0xc8] sm:$0xf]
    %v2120 = vld [vmem:[%s4 + $0xcc] sm:$0xf]
    %v2121 = vld [vmem:[%s4 + $0xd0] sm:$0xf]
    %v2122 = vld [vmem:[%s4 + $0xd4] sm:$0xf]
    %v2123 = vld [vmem:[%s4 + $0xd8] sm:$0xf]
    %v2124 = vld [vmem:[%s4 + $0xdc] sm:$0xf]
    %v2125 = vld [vmem:[%s4 + $0xe0] sm:$0xf]
    %v2126 = vld [vmem:[%s4 + $0xe4] sm:$0xf]
    %v2127 = vld [vmem:[%s4 + $0xe8] sm:$0xf]
    %v2128 = vld [vmem:[%s4 + $0xec] sm:$0xf]
    %v2129 = vld [vmem:[%s4 + $0xf0] sm:$0xf]
    %v2130 = vld [vmem:[%s4 + $0xf4] sm:$0xf]
    %v2131 = vld [vmem:[%s4 + $0xf8] sm:$0xf]
    %v2132 = vld [vmem:[%s4 + $0xfc] sm:$0xf]
    %v2133 = vld [vmem:[%s4 + $0x100] sm:$0xf]
    %v2134 = vld [vmem:[%s4 + $0x104] sm:$0xf]
    %v2135 = vld [vmem:[%s4 + $0x108] sm:$0xf]
    %v2136 = vld [vmem:[%s4 + $0x10c] sm:$0xf]
    %v2137 = vld [vmem:[%s4 + $0x110] sm:$0xf]
    %v2138 = vld [vmem:[%s4 + $0x114] sm:$0xf]
    %v2139 = vld [vmem:[%s4 + $0x118] sm:$0xf]
    %v2140 = vld [vmem:[%s4 + $0x11c] sm:$0xf]
    %v2141 = vld [vmem:[%s4 + $0x120] sm:$0xf]
    %v2142 = vld [vmem:[%s4 + $0x124] sm:$0xf]
    %v2143 = vld [vmem:[%s4 + $0x128] sm:$0xf]
    %v2144 = vld [vmem:[%s4 + $0x12c] sm:$0xf]
    %v2145 = vld [vmem:[%s4 + $0x130] sm:$0xf]
    %v2146 = vld [vmem:[%s4 + $0x134] sm:$0xf]
    %v2147 = vld [vmem:[%s4 + $0x138] sm:$0xf]
    %v2148 = vld [vmem:[%s4 + $0x13c] sm:$0xf]
    %v2149 = vld [vmem:[%s4 + $0x140] sm:$0xf]
    %v2150 = vld [vmem:[%s4 + $0x144] sm:$0xf]
    %v2151 = vld [vmem:[%s4 + $0x148] sm:$0xf]
    %v2152 = vld [vmem:[%s4 + $0x14c] sm:$0xf]
    %v2153 = vld [vmem:[%s4 + $0x150] sm:$0xf]
    %v2154 = vld [vmem:[%s4 + $0x154] sm:$0xf]
    %v2155 = vld [vmem:[%s4 + $0x158] sm:$0xf]
    %v2156 = vld [vmem:[%s4 + $0x15c] sm:$0xf]
    %v2157 = vld [vmem:[%s4 + $0x160] sm:$0xf]
    %v2158 = vld [vmem:[%s4 + $0x164] sm:$0xf]
    %v2159 = vld [vmem:[%s4 + $0x168] sm:$0xf]
    %v2160 = vld [vmem:[%s4 + $0x16c] sm:$0xf]
    %v2161 = vld [vmem:[%s4 + $0x170] sm:$0xf]
    %v2162 = vld [vmem:[%s4 + $0x174] sm:$0xf]
    %v2163 = vld [vmem:[%s4 + $0x178] sm:$0xf]
    %v2164 = vld [vmem:[%s4 + $0x17c] sm:$0xf]
    %v2165 = vld [vmem:[%s4 + $0x180] sm:$0xf]
    %v2166 = vld [vmem:[%s4 + $0x184] sm:$0xf]
    %v2167 = vld [vmem:[%s4 + $0x188] sm:$0xf]
    %v2168 = vld [vmem:[%s4 + $0x18c] sm:$0xf]
    %v2169 = vld [vmem:[%s4 + $0x190] sm:$0xf]
    %v2170 = vld [vmem:[%s4 + $0x194] sm:$0xf]
    %v2171 = vld [vmem:[%s4 + $0x198] sm:$0xf]
    %v2172 = vld [vmem:[%s4 + $0x19c] sm:$0xf]
    %v2173 = vld [vmem:[%s4 + $0x1a0] sm:$0xf]
    %v2174 = vld [vmem:[%s4 + $0x1a4] sm:$0xf]
    %v2175 = vld [vmem:[%s4 + $0x1a8] sm:$0xf]
    %v2176 = vld [vmem:[%s4 + $0x1ac] sm:$0xf]
    %v2177 = vld [vmem:[%s4 + $0x1b0] sm:$0xf]
    %v2178 = vld [vmem:[%s4 + $0x1b4] sm:$0xf]
    %v2179 = vld [vmem:[%s4 + $0x1b8] sm:$0xf]
    %v2180 = vld [vmem:[%s4 + $0x1bc] sm:$0xf]
    %v2181 = vld [vmem:[%s4 + $0x1c0] sm:$0xf]
    %v2182 = vld [vmem:[%s4 + $0x1c4] sm:$0xf]
    %v2183 = vld [vmem:[%s4 + $0x1c8] sm:$0xf]
    %v2184 = vld [vmem:[%s4 + $0x1cc] sm:$0xf]
    %v2185 = vld [vmem:[%s4 + $0x1d0] sm:$0xf]
    %v2186 = vld [vmem:[%s4 + $0x1d4] sm:$0xf]
    %v2187 = vld [vmem:[%s4 + $0x1d8] sm:$0xf]
    %v2188 = vld [vmem:[%s4 + $0x1dc] sm:$0xf]
    %v2189 = vld [vmem:[%s4 + $0x1e0] sm:$0xf]
    %v2190 = vld [vmem:[%s4 + $0x1e4] sm:$0xf]
    %v2191 = vld [vmem:[%s4 + $0x1e8] sm:$0xf]
    %v2192 = vld [vmem:[%s4 + $0x1ec] sm:$0xf]
    %v2193 = vld [vmem:[%s4 + $0x1f0] sm:$0xf]
    %v2194 = vld [vmem:[%s4 + $0x1f4] sm:$0xf]
    %v2195 = vld [vmem:[%s4 + $0x1f8] sm:$0xf]
    %v2196 = vld [vmem:[%s4 + $0x1fc] sm:$0xf]
    %v2197 = vld [vmem:[%s4 + $0x200] sm:$0xf]
    %v2198 = vld [vmem:[%s4 + $0x204] sm:$0xf]
    %v2199 = vld [vmem:[%s4 + $0x208] sm:$0xf]
    %v2200 = vld [vmem:[%s4 + $0x20c] sm:$0xf]
    %v2201 = vld [vmem:[%s4 + $0x210] sm:$0xf]
    %v2202 = vld [vmem:[%s4 + $0x214] sm:$0xf]
    %v2203 = vld [vmem:[%s4 + $0x218] sm:$0xf]
    %v2204 = vld [vmem:[%s4 + $0x21c] sm:$0xf]
    %v2205 = vld [vmem:[%s4 + $0x220] sm:$0xf]
    %v2206 = vld [vmem:[%s4 + $0x224] sm:$0xf]
    %v2207 = vld [vmem:[%s4 + $0x228] sm:$0xf]
    %v2208 = vld [vmem:[%s4 + $0x22c] sm:$0xf]
    %v2209 = vld [vmem:[%s4 + $0x230] sm:$0xf]
    %v2210 = vld [vmem:[%s4 + $0x234] sm:$0xf]
    %v2211 = vld [vmem:[%s4 + $0x238] sm:$0xf]
    %v2212 = vld [vmem:[%s4 + $0x23c] sm:$0xf]
    %v2213 = vpack.c.b16 %v2021, %v2018
    %v2214 = vpack.c.b16 %v2022, %v2019
    %v2215 = vpack.c.b16 %v2023, %v2020
    %v2216 = vpack.c.b16 %v2024, %v2021
    %v2217 = vpack.c.b16 %v2025, %v2022
    %v2218 = vpack.c.b16 %v2026, %v2023
    %v2219 = vpack.c.b16 %v2027, %v2024
    %v2220 = vpack.c.b16 %v2028, %v2025
    %v2221 = vpack.c.b16 %v2029, %v2026
    %v2222 = vpack.c.b16 %v2030, %v2027
    %v2223 = vpack.c.b16 %v2031, %v2028
    %v2224 = vpack.c.b16 %v2032, %v2029
    %v2225 = vpack.c.b16 %v2033, %v2030
    %v2226 = vpack.c.b16 %v2034, %v2031
    %v2227 = vpack.c.b16 %v2035, %v2032
    %v2228 = vpack.c.b16 %v2036, %v2033
    %v2229 = vpack.c.b16 %v2037, %v2034
    %v2230 = vpack.c.b16 %v2038, %v2035
    %v2231 = vpack.c.b16 %v2039, %v2036
    %v2232 = vpack.c.b16 %v2040, %v2037
    %v2233 = vpack.c.b16 %v2041, %v2038
    %v2234 = vpack.c.b16 %v2042, %v2039
    %v2235 = vpack.c.b16 %v2043, %v2040
    %v2236 = vpack.c.b16 %v2044, %v2041
    %v2237 = vpack.c.b16 %v2018, %v2042
    %v2238 = vpack.c.b16 %v2019, %v2043
    %v2239 = vpack.c.b16 %v2020, %v2044
    %v2240 = vpack.c.b16 %v2045, %v2018
    %v2241 = vpack.c.b16 %v2046, %v2019
    %v2242 = vpack.c.b16 %v2047, %v2020
    %v2243 = vpack.c.b16 %v2048, %v2045
    %v2244 = vpack.c.b16 %v2049, %v2046
    %v2245 = vpack.c.b16 %v2050, %v2047
    %v2246 = vpack.c.b16 %v2051, %v2048
    %v2247 = vpack.c.b16 %v2052, %v2049
    %v2248 = vpack.c.b16 %v2053, %v2050
    %v2249 = vpack.c.b16 %v2054, %v2051
    %v2250 = vpack.c.b16 %v2055, %v2052
    %v2251 = vpack.c.b16 %v2056, %v2053
    %v2252 = vpack.c.b16 %v2057, %v2054
    %v2253 = vpack.c.b16 %v2058, %v2055
    %v2254 = vpack.c.b16 %v2059, %v2056
    %v2255 = vpack.c.b16 %v2060, %v2057
    %v2256 = vpack.c.b16 %v2061, %v2058
    %v2257 = vpack.c.b16 %v2062, %v2059
    %v2258 = vpack.c.b16 %v2063, %v2060
    %v2259 = vpack.c.b16 %v2064, %v2061
    %v2260 = vpack.c.b16 %v2065, %v2062
    %v2261 = vpack.c.b16 %v2066, %v2063
    %v2262 = vpack.c.b16 %v2067, %v2064
    %v2263 = vpack.c.b16 %v2068, %v2065
    %v2264 = vpack.c.b16 %v2018, %v2066
    %v2265 = vpack.c.b16 %v2019, %v2067
    %v2266 = vpack.c.b16 %v2020, %v2068
    %v2465 = vunpack.c.l.b16 %v2069
    %v2466 = vunpack.c.l.b16 %v2070
    %v2467 = vunpack.c.l.b16 %v2071
    %v2468 = vunpack.c.l.b16 %v2072
    %v2469 = vunpack.c.l.b16 %v2073
    %v2470 = vunpack.c.l.b16 %v2074
    %v2471 = vunpack.c.l.b16 %v2075
    %v2472 = vunpack.c.l.b16 %v2076
    %v2473 = vunpack.c.l.b16 %v2077
    %v2474 = vunpack.c.l.b16 %v2078
    %v2475 = vunpack.c.l.b16 %v2079
    %v2476 = vunpack.c.l.b16 %v2080
    %v2477 = vunpack.c.l.b16 %v2081
    %v2478 = vunpack.c.l.b16 %v2082
    %v2479 = vunpack.c.l.b16 %v2083
    %v2480 = vunpack.c.l.b16 %v2084
    %v2481 = vunpack.c.l.b16 %v2085
    %v2482 = vunpack.c.l.b16 %v2086
    %v2483 = vunpack.c.l.b16 %v2087
    %v2484 = vunpack.c.l.b16 %v2088
    %v2485 = vunpack.c.l.b16 %v2089
    %v2486 = vunpack.c.l.b16 %v2090
    %v2487 = vunpack.c.l.b16 %v2091
    %v2488 = vunpack.c.l.b16 %v2092
    %v2489 = vunpack.c.l.b16 %v2093
    %v2490 = vunpack.c.l.b16 %v2094
    %v2491 = vunpack.c.l.b16 %v2095
    %v2492 = vunpack.c.l.b16 %v2096
    %v2493 = vunpack.c.l.b16 %v2097
    %v2494 = vunpack.c.l.b16 %v2098
    %v2495 = vunpack.c.l.b16 %v2099
    %v2496 = vunpack.c.l.b16 %v2100
    %v2497 = vunpack.c.l.b16 %v2101
    %v2498 = vunpack.c.l.b16 %v2102
    %v2499 = vunpack.c.l.b16 %v2103
    %v2500 = vunpack.c.l.b16 %v2104
    %v2501 = vunpack.c.l.b16 %v2105
    %v2502 = vunpack.c.l.b16 %v2106
    %v2503 = vunpack.c.l.b16 %v2107
    %v2504 = vunpack.c.l.b16 %v2108
    %v2505 = vunpack.c.l.b16 %v2109
    %v2506 = vunpack.c.l.b16 %v2110
    %v2507 = vunpack.c.l.b16 %v2111
    %v2508 = vunpack.c.l.b16 %v2112
    %v2509 = vunpack.c.l.b16 %v2113
    %v2510 = vunpack.c.l.b16 %v2114
    %v2511 = vunpack.c.l.b16 %v2115
    %v2512 = vunpack.c.l.b16 %v2116
    %v2513 = vunpack.c.l.b16 %v2117
    %v2514 = vunpack.c.l.b16 %v2118
    %v2515 = vunpack.c.l.b16 %v2119
    %v2516 = vunpack.c.l.b16 %v2120
    %v2517 = vunpack.c.l.b16 %v2121
    %v2518 = vunpack.c.l.b16 %v2122
    %v2519 = vunpack.c.l.b16 %v2123
    %v2520 = vunpack.c.l.b16 %v2124
    %v2521 = vunpack.c.l.b16 %v2125
    %v2522 = vunpack.c.l.b16 %v2126
    %v2523 = vunpack.c.l.b16 %v2127
    %v2524 = vunpack.c.l.b16 %v2128
    %v2525 = vunpack.c.l.b16 %v2129
    %v2526 = vunpack.c.l.b16 %v2130
    %v2527 = vunpack.c.l.b16 %v2131
    %v2528 = vunpack.c.l.b16 %v2132
    %v2529 = vunpack.c.l.b16 %v2133
    %v2530 = vunpack.c.l.b16 %v2134
    %v2531 = vunpack.c.l.b16 %v2135
    %v2532 = vunpack.c.l.b16 %v2136
    %v2533 = vunpack.c.l.b16 %v2137
    %v2534 = vunpack.c.l.b16 %v2138
    %v2535 = vunpack.c.l.b16 %v2139
    %v2536 = vunpack.c.l.b16 %v2140
    %v2537 = vunpack.c.l.b16 %v2141
    %v2538 = vunpack.c.l.b16 %v2142
    %v2539 = vunpack.c.l.b16 %v2143
    %v2540 = vunpack.c.l.b16 %v2144
    %v2541 = vunpack.c.l.b16 %v2145
    %v2542 = vunpack.c.l.b16 %v2146
    %v2543 = vunpack.c.l.b16 %v2147
    %v2544 = vunpack.c.l.b16 %v2148
    %v2545 = vunpack.c.l.b16 %v2149
    %v2546 = vunpack.c.l.b16 %v2150
    %v2547 = vunpack.c.l.b16 %v2151
    %v2548 = vunpack.c.l.b16 %v2152
    %v2549 = vunpack.c.l.b16 %v2153
    %v2550 = vunpack.c.l.b16 %v2154
    %v2551 = vunpack.c.l.b16 %v2155
    %v2552 = vunpack.c.l.b16 %v2156
    %v2553 = vunpack.c.l.b16 %v2157
    %v2554 = vunpack.c.l.b16 %v2158
    %v2555 = vunpack.c.l.b16 %v2159
    %v2556 = vunpack.c.l.b16 %v2160
    %v2557 = vunpack.c.l.b16 %v2161
    %v2558 = vunpack.c.l.b16 %v2162
    %v2559 = vunpack.c.l.b16 %v2163
    %v2560 = vunpack.c.l.b16 %v2164
    %v2561 = vunpack.c.l.b16 %v2165
    %v2562 = vunpack.c.l.b16 %v2166
    %v2563 = vunpack.c.l.b16 %v2167
    %v2564 = vunpack.c.l.b16 %v2168
    %v2565 = vunpack.c.l.b16 %v2169
    %v2566 = vunpack.c.l.b16 %v2170
    %v2567 = vunpack.c.l.b16 %v2171
    %v2568 = vunpack.c.l.b16 %v2172
    %v2569 = vunpack.c.l.b16 %v2173
    %v2570 = vunpack.c.l.b16 %v2174
    %v2571 = vunpack.c.l.b16 %v2175
    %v2572 = vunpack.c.l.b16 %v2176
    %v2573 = vunpack.c.l.b16 %v2177
    %v2574 = vunpack.c.l.b16 %v2178
    %v2575 = vunpack.c.l.b16 %v2179
    %v2576 = vunpack.c.l.b16 %v2180
    %v2577 = vunpack.c.l.b16 %v2181
    %v2578 = vunpack.c.l.b16 %v2182
    %v2579 = vunpack.c.l.b16 %v2183
    %v2580 = vunpack.c.l.b16 %v2184
    %v2581 = vunpack.c.l.b16 %v2185
    %v2582 = vunpack.c.l.b16 %v2186
    %v2583 = vunpack.c.l.b16 %v2187
    %v2584 = vunpack.c.l.b16 %v2188
    %v2585 = vunpack.c.l.b16 %v2189
    %v2586 = vunpack.c.l.b16 %v2190
    %v2587 = vunpack.c.l.b16 %v2191
    %v2588 = vunpack.c.l.b16 %v2192
    %v2589 = vunpack.c.l.b16 %v2193
    %v2590 = vunpack.c.l.b16 %v2194
    %v2591 = vunpack.c.l.b16 %v2195
    %v2592 = vunpack.c.l.b16 %v2196
    %v2593 = vunpack.c.l.b16 %v2197
    %v2594 = vunpack.c.l.b16 %v2198
    %v2595 = vunpack.c.l.b16 %v2199
    %v2596 = vunpack.c.l.b16 %v2200
    %v2597 = vunpack.c.l.b16 %v2201
    %v2598 = vunpack.c.l.b16 %v2202
    %v2599 = vunpack.c.l.b16 %v2203
    %v2600 = vunpack.c.l.b16 %v2204
    %v2601 = vunpack.c.l.b16 %v2205
    %v2602 = vunpack.c.l.b16 %v2206
    %v2603 = vunpack.c.l.b16 %v2207
    %v2604 = vunpack.c.l.b16 %v2208
    %v2605 = vunpack.c.l.b16 %v2209
    %v2606 = vunpack.c.l.b16 %v2210
    %v2607 = vunpack.c.l.b16 %v2211
    %v2608 = vunpack.c.l.b16 %v2212
    %v2609 = vpack.c.b16 %v2466, %v2465
    %v2610 = vpack.c.b16 %v2468, %v2467
    %v2611 = vpack.c.b16 %v2470, %v2469
    %v2612 = vpack.c.b16 %v2472, %v2471
    %v2613 = vpack.c.b16 %v2474, %v2473
    %v2614 = vpack.c.b16 %v2476, %v2475
    %v2615 = vpack.c.b16 %v2478, %v2477
    %v2616 = vpack.c.b16 %v2480, %v2479
    %v2617 = vpack.c.b16 %v2482, %v2481
    %v2618 = vpack.c.b16 %v2484, %v2483
    %v2619 = vpack.c.b16 %v2486, %v2485
    %v2620 = vpack.c.b16 %v2488, %v2487
    %v2621 = vpack.c.b16 %v2490, %v2489
    %v2622 = vpack.c.b16 %v2492, %v2491
    %v2623 = vpack.c.b16 %v2494, %v2493
    %v2624 = vpack.c.b16 %v2496, %v2495
    %v2625 = vpack.c.b16 %v2498, %v2497
    %v2626 = vpack.c.b16 %v2500, %v2499
    %v2627 = vpack.c.b16 %v2502, %v2501
    %v2628 = vpack.c.b16 %v2504, %v2503
    %v2629 = vpack.c.b16 %v2506, %v2505
    %v2630 = vpack.c.b16 %v2508, %v2507
    %v2631 = vpack.c.b16 %v2510, %v2509
    %v2632 = vpack.c.b16 %v2512, %v2511
    %v2633 = vpack.c.b16 %v2514, %v2513
    %v2634 = vpack.c.b16 %v2516, %v2515
    %v2635 = vpack.c.b16 %v2518, %v2517
    %v2636 = vpack.c.b16 %v2520, %v2519
    %v2637 = vpack.c.b16 %v2522, %v2521
    %v2638 = vpack.c.b16 %v2524, %v2523
    %v2639 = vpack.c.b16 %v2526, %v2525
    %v2640 = vpack.c.b16 %v2528, %v2527
    %v2641 = vpack.c.b16 %v2530, %v2529
    %v2642 = vpack.c.b16 %v2532, %v2531
    %v2643 = vpack.c.b16 %v2534, %v2533
    %v2644 = vpack.c.b16 %v2536, %v2535
    %v2645 = vpack.c.b16 %v2538, %v2537
    %v2646 = vpack.c.b16 %v2540, %v2539
    %v2647 = vpack.c.b16 %v2542, %v2541
    %v2648 = vpack.c.b16 %v2544, %v2543
    %v2649 = vpack.c.b16 %v2546, %v2545
    %v2650 = vpack.c.b16 %v2548, %v2547
    %v2651 = vpack.c.b16 %v2550, %v2549
    %v2652 = vpack.c.b16 %v2552, %v2551
    %v2653 = vpack.c.b16 %v2554, %v2553
    %v2654 = vpack.c.b16 %v2556, %v2555
    %v2655 = vpack.c.b16 %v2558, %v2557
    %v2656 = vpack.c.b16 %v2560, %v2559
    %v2657 = vpack.c.b16 %v2562, %v2561
    %v2658 = vpack.c.b16 %v2564, %v2563
    %v2659 = vpack.c.b16 %v2566, %v2565
    %v2660 = vpack.c.b16 %v2568, %v2567
    %v2661 = vpack.c.b16 %v2570, %v2569
    %v2662 = vpack.c.b16 %v2572, %v2571
    %v2663 = vpack.c.b16 %v2574, %v2573
    %v2664 = vpack.c.b16 %v2576, %v2575
    %v2665 = vpack.c.b16 %v2578, %v2577
    %v2666 = vpack.c.b16 %v2580, %v2579
    %v2667 = vpack.c.b16 %v2582, %v2581
    %v2668 = vpack.c.b16 %v2584, %v2583
    %v2669 = vpack.c.b16 %v2586, %v2585
    %v2670 = vpack.c.b16 %v2588, %v2587
    %v2671 = vpack.c.b16 %v2590, %v2589
    %v2672 = vpack.c.b16 %v2592, %v2591
    %v2673 = vpack.c.b16 %v2594, %v2593
    %v2674 = vpack.c.b16 %v2596, %v2595
    %v2675 = vpack.c.b16 %v2598, %v2597
    %v2676 = vpack.c.b16 %v2600, %v2599
    %v2677 = vpack.c.b16 %v2602, %v2601
    %v2678 = vpack.c.b16 %v2604, %v2603
    %v2679 = vpack.c.b16 %v2606, %v2605
    %v2680 = vpack.c.b16 %v2608, %v2607
    %2753 = vmatprep.subr.bf16.mxu0 0
    %2754 = vmatpush1.bf16.msra.mxu0 %v2616
    %2755 = vmatprep.subr.bf16.mxu0 0
    %2756 = vmatpush1.bf16.msra.mxu0 %v2615
    %2757 = vmatprep.subr.bf16.mxu0 0
    %2758 = vmatpush1.bf16.msra.mxu0 %v2614
    %2759 = vmatprep.subr.bf16.mxu0 0
    %2760 = vmatpush1.bf16.msra.mxu0 %v2613
    %2761 = vmatprep.subr.bf16.mxu0 0
    %2762 = vmatpush1.bf16.msra.mxu0 %v2612
    %2763 = vmatprep.subr.bf16.mxu0 0
    %2764 = vmatpush1.bf16.msra.mxu0 %v2611
    %2765 = vmatprep.subr.bf16.mxu0 0
    %2766 = vmatpush1.bf16.msra.mxu0 %v2610
    %2767 = vmatprep.subr.bf16.mxu0 0
    %2768 = vmatpush1.bf16.msra.mxu0 %v2609
    %2769 = vmatprep.subr.bf16.mxu0 0
    %2770 = vmatpush2.bf16.msra.mxu0 %v2624
    %2771 = vmatprep.subr.bf16.mxu0 0
    %2772 = vmatpush2.bf16.msra.mxu0 %v2623
    %2773 = vmatprep.subr.bf16.mxu0 0
    %2774 = vmatpush2.bf16.msra.mxu0 %v2622
    %2775 = vmatprep.subr.bf16.mxu0 0
    %2776 = vmatpush2.bf16.msra.mxu0 %v2621
    %2777 = vmatprep.subr.bf16.mxu0 0
    %2778 = vmatpush2.bf16.msra.mxu0 %v2620
    %2779 = vmatprep.subr.bf16.mxu0 0
    %2780 = vmatpush2.bf16.msra.mxu0 %v2619
    %2781 = vmatprep.subr.bf16.mxu0 0
    %2782 = vmatpush2.bf16.msra.mxu0 %v2618
    %2783 = vmatprep.subr.bf16.mxu0 0
    %2784 = vmatpush2.bf16.msra.mxu0 %v2617
    %2785 = vmatprep.mubr.bf16.mxu0 %v2214
    %2786 = vmatmul.mubr.bf16.gmra.mxu0 %v2213
    %v2787 = vpop.f32.mrf.mxu0
    %v2788 = vadd.f32 0.0, %v2787
    %v2789 = vpop.f32.mrf.mxu0
    %v2790 = vpop.f32.mrf.mxu0
    %v2791 = vadd.f32 0.0, %v2790
    %v2792 = vpop.f32.mrf.mxu0
    %2793 = vmatprep.mubr.bf16.mxu0 %v2220
    %2794 = vmatmul.mubr.bf16.gmra.mxu0 %v2219
    %v2795 = vpop.f32.mrf.mxu0
    %v2796 = vadd.f32 0.0, %v2795
    %v2797 = vpop.f32.mrf.mxu0
    %v2798 = vpop.f32.mrf.mxu0
    %v2799 = vadd.f32 0.0, %v2798
    %v2800 = vpop.f32.mrf.mxu0
    %2801 = vmatprep.mubr.bf16.mxu0 %v2226
    %2802 = vmatmul.mubr.bf16.gmra.mxu0 %v2225
    %v2803 = vpop.f32.mrf.mxu0
    %v2804 = vadd.f32 0.0, %v2803
    %v2805 = vpop.f32.mrf.mxu0
    %v2806 = vpop.f32.mrf.mxu0
    %v2807 = vadd.f32 0.0, %v2806
    %v2808 = vpop.f32.mrf.mxu0
    %2809 = vmatprep.mubr.bf16.mxu0 %v2232
    %2810 = vmatmul.mubr.bf16.gmra.mxu0 %v2231
    %v2811 = vpop.f32.mrf.mxu0
    %v2812 = vadd.f32 0.0, %v2811
    %v2813 = vpop.f32.mrf.mxu0
    %v2814 = vpop.f32.mrf.mxu0
    %v2815 = vadd.f32 0.0, %v2814
    %v2816 = vpop.f32.mrf.mxu0
    %2817 = vmatprep.mubr.bf16.mxu0 %v2241
    %2818 = vmatmul.mubr.bf16.gmra.mxu0 %v2240
    %v2819 = vpop.f32.mrf.mxu0
    %v2820 = vadd.f32 0.0, %v2819
    %v2821 = vpop.f32.mrf.mxu0
    %v2822 = vpop.f32.mrf.mxu0
    %v2823 = vadd.f32 0.0, %v2822
    %v2824 = vpop.f32.mrf.mxu0
    %2825 = vmatprep.mubr.bf16.mxu0 %v2247
    %2826 = vmatmul.mubr.bf16.gmra.mxu0 %v2246
    %v2827 = vpop.f32.mrf.mxu0
    %v2828 = vadd.f32 0.0, %v2827
    %v2829 = vpop.f32.mrf.mxu0
    %v2830 = vpop.f32.mrf.mxu0
    %v2831 = vadd.f32 0.0, %v2830
    %v2832 = vpop.f32.mrf.mxu0
    %2833 = vmatprep.mubr.bf16.mxu0 %v2253
    %2834 = vmatmul.mubr.bf16.gmra.mxu0 %v2252
    %v2835 = vpop.f32.mrf.mxu0
    %v2836 = vadd.f32 0.0, %v2835
    %v2837 = vpop.f32.mrf.mxu0
    %v2838 = vpop.f32.mrf.mxu0
    %v2839 = vadd.f32 0.0, %v2838
    %v2840 = vpop.f32.mrf.mxu0
    %2841 = vmatprep.mubr.bf16.mxu0 %v2259
    %2842 = vmatmul.mubr.bf16.gmra.mxu0 %v2258
    %v2843 = vpop.f32.mrf.mxu0
    %v2844 = vadd.f32 0.0, %v2843
    %v2845 = vpop.f32.mrf.mxu0
    %v2846 = vpop.f32.mrf.mxu0
    %v2847 = vadd.f32 0.0, %v2846
    %v2848 = vpop.f32.mrf.mxu0
    %2849 = vdwg.mxu0
    %2850 = vmatprep.subr.bf16.mxu0 0
    %2851 = vmatpush1.bf16.msra.mxu0 %v2632
    %2852 = vmatprep.subr.bf16.mxu0 0
    %2853 = vmatpush1.bf16.msra.mxu0 %v2631
    %2854 = vmatprep.subr.bf16.mxu0 0
    %2855 = vmatpush1.bf16.msra.mxu0 %v2630
    %2856 = vmatprep.subr.bf16.mxu0 0
    %2857 = vmatpush1.bf16.msra.mxu0 %v2629
    %2858 = vmatprep.subr.bf16.mxu0 0
    %2859 = vmatpush1.bf16.msra.mxu0 %v2628
    %2860 = vmatprep.subr.bf16.mxu0 0
    %2861 = vmatpush1.bf16.msra.mxu0 %v2627
    %2862 = vmatprep.subr.bf16.mxu0 0
    %2863 = vmatpush1.bf16.msra.mxu0 %v2626
    %2864 = vmatprep.subr.bf16.mxu0 0
    %2865 = vmatpush1.bf16.msra.mxu0 %v2625
    %2866 = vmatprep.subr.bf16.mxu0 0
    %2867 = vmatpush2.bf16.msra.mxu0 %v2640
    %2868 = vmatprep.subr.bf16.mxu0 0
    %2869 = vmatpush2.bf16.msra.mxu0 %v2639
    %2870 = vmatprep.subr.bf16.mxu0 0
    %2871 = vmatpush2.bf16.msra.mxu0 %v2638
    %2872 = vmatprep.subr.bf16.mxu0 0
    %2873 = vmatpush2.bf16.msra.mxu0 %v2637
    %2874 = vmatprep.subr.bf16.mxu0 0
    %2875 = vmatpush2.bf16.msra.mxu0 %v2636
    %2876 = vmatprep.subr.bf16.mxu0 0
    %2877 = vmatpush2.bf16.msra.mxu0 %v2635
    %2878 = vmatprep.subr.bf16.mxu0 0
    %2879 = vmatpush2.bf16.msra.mxu0 %v2634
    %2880 = vmatprep.subr.bf16.mxu0 0
    %2881 = vmatpush2.bf16.msra.mxu0 %v2633
    %2882 = vmatprep.mubr.bf16.mxu0 %v2216
    %2883 = vmatmul.mubr.bf16.gmra.mxu0 %v2215
    %v2884 = vpop.f32.mrf.mxu0
    %v2885 = vadd.f32 %v2788, %v2884
    %v2886 = vpop.f32.mrf.mxu0
    %v2887 = vpop.f32.mrf.mxu0
    %v2888 = vadd.f32 %v2791, %v2887
    %v2889 = vpop.f32.mrf.mxu0
    %2890 = vmatprep.mubr.bf16.mxu0 %v2222
    %2891 = vmatmul.mubr.bf16.gmra.mxu0 %v2221
    %v2892 = vpop.f32.mrf.mxu0
    %v2893 = vadd.f32 %v2796, %v2892
    %v2894 = vpop.f32.mrf.mxu0
    %v2895 = vpop.f32.mrf.mxu0
    %v2896 = vadd.f32 %v2799, %v2895
    %v2897 = vpop.f32.mrf.mxu0
    %2898 = vmatprep.mubr.bf16.mxu0 %v2228
    %2899 = vmatmul.mubr.bf16.gmra.mxu0 %v2227
    %v2900 = vpop.f32.mrf.mxu0
    %v2901 = vadd.f32 %v2804, %v2900
    %v2902 = vpop.f32.mrf.mxu0
    %v2903 = vpop.f32.mrf.mxu0
    %v2904 = vadd.f32 %v2807, %v2903
    %v2905 = vpop.f32.mrf.mxu0
    %2906 = vmatprep.mubr.bf16.mxu0 %v2234
    %2907 = vmatmul.mubr.bf16.gmra.mxu0 %v2233
    %v2908 = vpop.f32.mrf.mxu0
    %v2909 = vadd.f32 %v2812, %v2908
    %v2910 = vpop.f32.mrf.mxu0
    %v2911 = vpop.f32.mrf.mxu0
    %v2912 = vadd.f32 %v2815, %v2911
    %v2913 = vpop.f32.mrf.mxu0
    %2914 = vmatprep.mubr.bf16.mxu0 %v2243
    %2915 = vmatmul.mubr.bf16.gmra.mxu0 %v2242
    %v2916 = vpop.f32.mrf.mxu0
    %v2917 = vadd.f32 %v2820, %v2916
    %v2918 = vpop.f32.mrf.mxu0
    %v2919 = vpop.f32.mrf.mxu0
    %v2920 = vadd.f32 %v2823, %v2919
    %v2921 = vpop.f32.mrf.mxu0
    %2922 = vmatprep.mubr.bf16.mxu0 %v2249
    %2923 = vmatmul.mubr.bf16.gmra.mxu0 %v2248
    %v2924 = vpop.f32.mrf.mxu0
    %v2925 = vadd.f32 %v2828, %v2924
    %v2926 = vpop.f32.mrf.mxu0
    %v2927 = vpop.f32.mrf.mxu0
    %v2928 = vadd.f32 %v2831, %v2927
    %v2929 = vpop.f32.mrf.mxu0
    %2930 = vmatprep.mubr.bf16.mxu0 %v2255
    %2931 = vmatmul.mubr.bf16.gmra.mxu0 %v2254
    %v2932 = vpop.f32.mrf.mxu0
    %v2933 = vadd.f32 %v2836, %v2932
    %v2934 = vpop.f32.mrf.mxu0
    %v2935 = vpop.f32.mrf.mxu0
    %v2936 = vadd.f32 %v2839, %v2935
    %v2937 = vpop.f32.mrf.mxu0
    %2938 = vmatprep.mubr.bf16.mxu0 %v2261
    %2939 = vmatmul.mubr.bf16.gmra.mxu0 %v2260
    %v2940 = vpop.f32.mrf.mxu0
    %v2941 = vadd.f32 %v2844, %v2940
    %v2942 = vpop.f32.mrf.mxu0
    %v2943 = vpop.f32.mrf.mxu0
    %v2944 = vadd.f32 %v2847, %v2943
    %v2945 = vpop.f32.mrf.mxu0
    %2946 = vdwg.mxu0
    %2947 = vmatprep.subr.bf16.mxu0 0
    %2948 = vmatpush1.bf16.msra.mxu0 %v2648
    %2949 = vmatprep.subr.bf16.mxu0 0
    %2950 = vmatpush1.bf16.msra.mxu0 %v2647
    %2951 = vmatprep.subr.bf16.mxu0 0
    %2952 = vmatpush1.bf16.msra.mxu0 %v2646
    %2953 = vmatprep.subr.bf16.mxu0 0
    %2954 = vmatpush1.bf16.msra.mxu0 %v2645
    %2955 = vmatprep.subr.bf16.mxu0 0
    %2956 = vmatpush1.bf16.msra.mxu0 %v2644
    %2957 = vmatprep.subr.bf16.mxu0 0
    %2958 = vmatpush1.bf16.msra.mxu0 %v2643
    %2959 = vmatprep.subr.bf16.mxu0 0
    %2960 = vmatpush1.bf16.msra.mxu0 %v2642
    %2961 = vmatprep.subr.bf16.mxu0 0
    %2962 = vmatpush1.bf16.msra.mxu0 %v2641
    %2963 = vmatprep.subr.bf16.mxu0 0
    %2964 = vmatpush2.bf16.msra.mxu0 %v2656
    %2965 = vmatprep.subr.bf16.mxu0 0
    %2966 = vmatpush2.bf16.msra.mxu0 %v2655
    %2967 = vmatprep.subr.bf16.mxu0 0
    %2968 = vmatpush2.bf16.msra.mxu0 %v2654
    %2969 = vmatprep.subr.bf16.mxu0 0
    %2970 = vmatpush2.bf16.msra.mxu0 %v2653
    %2971 = vmatprep.subr.bf16.mxu0 0
    %2972 = vmatpush2.bf16.msra.mxu0 %v2652
    %2973 = vmatprep.subr.bf16.mxu0 0
    %2974 = vmatpush2.bf16.msra.mxu0 %v2651
    %2975 = vmatprep.subr.bf16.mxu0 0
    %2976 = vmatpush2.bf16.msra.mxu0 %v2650
    %2977 = vmatprep.subr.bf16.mxu0 0
    %2978 = vmatpush2.bf16.msra.mxu0 %v2649
    %2979 = vmatprep.mubr.bf16.mxu0 %v2218
    %2980 = vmatmul.mubr.bf16.gmra.mxu0 %v2217
    %v2981 = vpop.f32.mrf.mxu0
    %v2982 = vadd.f32 %v2885, %v2981
    %v2983 = vpop.f32.mrf.mxu0
    %v2984 = vpop.f32.mrf.mxu0
    %v2985 = vadd.f32 %v2888, %v2984
    %v2986 = vpop.f32.mrf.mxu0
    %2987 = vmatprep.mubr.bf16.mxu0 %v2224
    %2988 = vmatmul.mubr.bf16.gmra.mxu0 %v2223
    %v2989 = vpop.f32.mrf.mxu0
    %v2990 = vadd.f32 %v2893, %v2989
    %v2991 = vpop.f32.mrf.mxu0
    %v2992 = vpop.f32.mrf.mxu0
    %v2993 = vadd.f32 %v2896, %v2992
    %v2994 = vpop.f32.mrf.mxu0
    %2995 = vmatprep.mubr.bf16.mxu0 %v2230
    %2996 = vmatmul.mubr.bf16.gmra.mxu0 %v2229
    %v2997 = vpop.f32.mrf.mxu0
    %v2998 = vadd.f32 %v2901, %v2997
    %v2999 = vpop.f32.mrf.mxu0
    %v3000 = vpop.f32.mrf.mxu0
    %v3001 = vadd.f32 %v2904, %v3000
    %v3002 = vpop.f32.mrf.mxu0
    %3003 = vmatprep.mubr.bf16.mxu0 %v2236
    %3004 = vmatmul.mubr.bf16.gmra.mxu0 %v2235
    %v3005 = vpop.f32.mrf.mxu0
    %v3006 = vadd.f32 %v2909, %v3005
    %v3007 = vpop.f32.mrf.mxu0
    %v3008 = vpop.f32.mrf.mxu0
    %v3009 = vadd.f32 %v2912, %v3008
    %v3010 = vpop.f32.mrf.mxu0
    %3011 = vmatprep.mubr.bf16.mxu0 %v2245
    %3012 = vmatmul.mubr.bf16.gmra.mxu0 %v2244
    %v3013 = vpop.f32.mrf.mxu0
    %v3014 = vadd.f32 %v2917, %v3013
    %v3015 = vpop.f32.mrf.mxu0
    %v3016 = vpop.f32.mrf.mxu0
    %v3017 = vadd.f32 %v2920, %v3016
    %v3018 = vpop.f32.mrf.mxu0
    %3019 = vmatprep.mubr.bf16.mxu0 %v2251
    %3020 = vmatmul.mubr.bf16.gmra.mxu0 %v2250
    %v3021 = vpop.f32.mrf.mxu0
    %v3022 = vadd.f32 %v2925, %v3021
    %v3023 = vpop.f32.mrf.mxu0
    %v3024 = vpop.f32.mrf.mxu0
    %v3025 = vadd.f32 %v2928, %v3024
    %v3026 = vpop.f32.mrf.mxu0
    %3027 = vmatprep.mubr.bf16.mxu0 %v2257
    %3028 = vmatmul.mubr.bf16.gmra.mxu0 %v2256
    %v3029 = vpop.f32.mrf.mxu0
    %v3030 = vadd.f32 %v2933, %v3029
    %v3031 = vpop.f32.mrf.mxu0
    %v3032 = vpop.f32.mrf.mxu0
    %v3033 = vadd.f32 %v2936, %v3032
    %v3034 = vpop.f32.mrf.mxu0
    %3035 = vmatprep.mubr.bf16.mxu0 %v2263
    %3036 = vmatmul.mubr.bf16.gmra.mxu0 %v2262
    %v3037 = vpop.f32.mrf.mxu0
    %v3038 = vadd.f32 %v2941, %v3037
    %v3039 = vpop.f32.mrf.mxu0
    %v3040 = vpop.f32.mrf.mxu0
    %v3041 = vadd.f32 %v2944, %v3040
    %v3042 = vpop.f32.mrf.mxu0
    %3043 = vdwg.mxu0
    %3044 = vmatprep.subr.bf16.mxu0 0
    %3045 = vmatpush1.bf16.msra.mxu0 %v2664
    %3046 = vmatprep.subr.bf16.mxu0 0
    %3047 = vmatpush1.bf16.msra.mxu0 %v2663
    %3048 = vmatprep.subr.bf16.mxu0 0
    %3049 = vmatpush1.bf16.msra.mxu0 %v2662
    %3050 = vmatprep.subr.bf16.mxu0 0
    %3051 = vmatpush1.bf16.msra.mxu0 %v2661
    %3052 = vmatprep.subr.bf16.mxu0 0
    %3053 = vmatpush1.bf16.msra.mxu0 %v2660
    %3054 = vmatprep.subr.bf16.mxu0 0
    %3055 = vmatpush1.bf16.msra.mxu0 %v2659
    %3056 = vmatprep.subr.bf16.mxu0 0
    %3057 = vmatpush1.bf16.msra.mxu0 %v2658
    %3058 = vmatprep.subr.bf16.mxu0 0
    %3059 = vmatpush1.bf16.msra.mxu0 %v2657
    %3060 = vmatprep.subr.bf16.mxu0 0
    %3061 = vmatpush2.bf16.msra.mxu0 %v2672
    %3062 = vmatprep.subr.bf16.mxu0 0
    %3063 = vmatpush2.bf16.msra.mxu0 %v2671
    %3064 = vmatprep.subr.bf16.mxu0 0
    %3065 = vmatpush2.bf16.msra.mxu0 %v2670
    %3066 = vmatprep.subr.bf16.mxu0 0
    %3067 = vmatpush2.bf16.msra.mxu0 %v2669
    %3068 = vmatprep.subr.bf16.mxu0 0
    %3069 = vmatpush2.bf16.msra.mxu0 %v2668
    %3070 = vmatprep.subr.bf16.mxu0 0
    %3071 = vmatpush2.bf16.msra.mxu0 %v2667
    %3072 = vmatprep.subr.bf16.mxu0 0
    %3073 = vmatpush2.bf16.msra.mxu0 %v2666
    %3074 = vmatprep.subr.bf16.mxu0 0
    %3075 = vmatpush2.bf16.msra.mxu0 %v2665
    %3076 = vmatprep.mubr.bf16.mxu0 %v2220
    %3077 = vmatmul.mubr.bf16.gmra.mxu0 %v2219
    %v3078 = vpop.f32.mrf.mxu0
    %v3079 = vadd.f32 %v2982, %v3078
    %v3080 = vpop.f32.mrf.mxu0
    %v3081 = vpop.f32.mrf.mxu0
    %v3082 = vadd.f32 %v2985, %v3081
    %v3083 = vpop.f32.mrf.mxu0
    %3084 = vmatprep.mubr.bf16.mxu0 %v2226
    %3085 = vmatmul.mubr.bf16.gmra.mxu0 %v2225
    %v3086 = vpop.f32.mrf.mxu0
    %v3087 = vadd.f32 %v2990, %v3086
    %v3088 = vpop.f32.mrf.mxu0
    %v3089 = vpop.f32.mrf.mxu0
    %v3090 = vadd.f32 %v2993, %v3089
    %v3091 = vpop.f32.mrf.mxu0
    %3092 = vmatprep.mubr.bf16.mxu0 %v2232
    %3093 = vmatmul.mubr.bf16.gmra.mxu0 %v2231
    %v3094 = vpop.f32.mrf.mxu0
    %v3095 = vadd.f32 %v2998, %v3094
    %v3096 = vpop.f32.mrf.mxu0
    %v3097 = vpop.f32.mrf.mxu0
    %v3098 = vadd.f32 %v3001, %v3097
    %v3099 = vpop.f32.mrf.mxu0
    %3100 = vmatprep.mubr.bf16.mxu0 %v2238
    %3101 = vmatmul.mubr.bf16.gmra.mxu0 %v2237
    %v3102 = vpop.f32.mrf.mxu0
    %v3103 = vadd.f32 %v3006, %v3102
    %v3104 = vpop.f32.mrf.mxu0
    %v3105 = vpop.f32.mrf.mxu0
    %v3106 = vadd.f32 %v3009, %v3105
    %v3107 = vpop.f32.mrf.mxu0
    %3108 = vmatprep.mubr.bf16.mxu0 %v2247
    %3109 = vmatmul.mubr.bf16.gmra.mxu0 %v2246
    %v3110 = vpop.f32.mrf.mxu0
    %v3111 = vadd.f32 %v3014, %v3110
    %v3112 = vpop.f32.mrf.mxu0
    %v3113 = vpop.f32.mrf.mxu0
    %v3114 = vadd.f32 %v3017, %v3113
    %v3115 = vpop.f32.mrf.mxu0
    %3116 = vmatprep.mubr.bf16.mxu0 %v2253
    %3117 = vmatmul.mubr.bf16.gmra.mxu0 %v2252
    %v3118 = vpop.f32.mrf.mxu0
    %v3119 = vadd.f32 %v3022, %v3118
    %v3120 = vpop.f32.mrf.mxu0
    %v3121 = vpop.f32.mrf.mxu0
    %v3122 = vadd.f32 %v3025, %v3121
    %v3123 = vpop.f32.mrf.mxu0
    %3124 = vmatprep.mubr.bf16.mxu0 %v2259
    %3125 = vmatmul.mubr.bf16.gmra.mxu0 %v2258
    %v3126 = vpop.f32.mrf.mxu0
    %v3127 = vadd.f32 %v3030, %v3126
    %v3128 = vpop.f32.mrf.mxu0
    %v3129 = vpop.f32.mrf.mxu0
    %v3130 = vadd.f32 %v3033, %v3129
    %v3131 = vpop.f32.mrf.mxu0
    %3132 = vmatprep.mubr.bf16.mxu0 %v2265
    %3133 = vmatmul.mubr.bf16.gmra.mxu0 %v2264
    %v3134 = vpop.f32.mrf.mxu0
    %v3135 = vadd.f32 %v3038, %v3134
    %v3136 = vpop.f32.mrf.mxu0
    %v3137 = vpop.f32.mrf.mxu0
    %v3138 = vadd.f32 %v3041, %v3137
    %v3139 = vpop.f32.mrf.mxu0
    %3140 = vdwg.mxu0
    %3141 = vmatprep.subr.bf16.mxu0 0
    %3142 = vmatpush1.bf16.msra.mxu0 %v2680
    %3143 = vmatprep.subr.bf16.mxu0 0
    %3144 = vmatpush1.bf16.msra.mxu0 %v2679
    %3145 = vmatprep.subr.bf16.mxu0 0
    %3146 = vmatpush1.bf16.msra.mxu0 %v2678
    %3147 = vmatprep.subr.bf16.mxu0 0
    %3148 = vmatpush1.bf16.msra.mxu0 %v2677
    %3149 = vmatprep.subr.bf16.mxu0 0
    %3150 = vmatpush1.bf16.msra.mxu0 %v2676
    %3151 = vmatprep.subr.bf16.mxu0 0
    %3152 = vmatpush1.bf16.msra.mxu0 %v2675
    %3153 = vmatprep.subr.bf16.mxu0 0
    %3154 = vmatpush1.bf16.msra.mxu0 %v2674
    %3155 = vmatprep.subr.bf16.mxu0 0
    %3156 = vmatpush1.bf16.msra.mxu0 %v2673
    %3157 = vmatprep.subr.bf16.mxu0 0
    %3158 = vmatpush2.bf16.msra.mxu0 0
    %3159 = vmatprep.subr.bf16.mxu0 0
    %3160 = vmatpush2.bf16.msra.mxu0 0
    %3161 = vmatprep.subr.bf16.mxu0 0
    %3162 = vmatpush2.bf16.msra.mxu0 0
    %3163 = vmatprep.subr.bf16.mxu0 0
    %3164 = vmatpush2.bf16.msra.mxu0 0
    %3165 = vmatprep.subr.bf16.mxu0 0
    %3166 = vmatpush2.bf16.msra.mxu0 0
    %3167 = vmatprep.subr.bf16.mxu0 0
    %3168 = vmatpush2.bf16.msra.mxu0 0
    %3169 = vmatprep.subr.bf16.mxu0 0
    %3170 = vmatpush2.bf16.msra.mxu0 0
    %3171 = vmatprep.subr.bf16.mxu0 0
    %3172 = vmatpush2.bf16.msra.mxu0 0
    %3173 = vmatprep.mubr.bf16.mxu0 0
    %3174 = vmatmul.mubr.bf16.gmra.mxu0 %v2221
    %v3175 = vpop.f32.mrf.mxu0
    %v3176 = vadd.f32 %v3079, %v3175
    %v3177 = vpop.f32.mrf.mxu0
    %v3178 = vpop.f32.mrf.mxu0
    %v3179 = vadd.f32 %v3082, %v3178
    %v3180 = vpop.f32.mrf.mxu0
    %3181 = vmatprep.mubr.bf16.mxu0 0
    %3182 = vmatmul.mubr.bf16.gmra.mxu0 %v2227
    %v3183 = vpop.f32.mrf.mxu0
    %v3184 = vadd.f32 %v3087, %v3183
    %v3185 = vpop.f32.mrf.mxu0
    %v3186 = vpop.f32.mrf.mxu0
    %v3187 = vadd.f32 %v3090, %v3186
    %v3188 = vpop.f32.mrf.mxu0
    %3189 = vmatprep.mubr.bf16.mxu0 0
    %3190 = vmatmul.mubr.bf16.gmra.mxu0 %v2233
    %v3191 = vpop.f32.mrf.mxu0
    %v3192 = vadd.f32 %v3095, %v3191
    %v3193 = vpop.f32.mrf.mxu0
    %v3194 = vpop.f32.mrf.mxu0
    %v3195 = vadd.f32 %v3098, %v3194
    %v3196 = vpop.f32.mrf.mxu0
    %3197 = vmatprep.mubr.bf16.mxu0 0
    %3198 = vmatmul.mubr.bf16.gmra.mxu0 %v2239
    %v3199 = vpop.f32.mrf.mxu0
    %v3200 = vadd.f32 %v3103, %v3199
    %v3201 = vpop.f32.mrf.mxu0
    %v3202 = vpop.f32.mrf.mxu0
    %v3203 = vadd.f32 %v3106, %v3202
    %v3204 = vpop.f32.mrf.mxu0
    %3205 = vmatprep.mubr.bf16.mxu0 0
    %3206 = vmatmul.mubr.bf16.gmra.mxu0 %v2248
    %v3207 = vpop.f32.mrf.mxu0
    %v3208 = vadd.f32 %v3111, %v3207
    %v3209 = vpop.f32.mrf.mxu0
    %v3210 = vpop.f32.mrf.mxu0
    %v3211 = vadd.f32 %v3114, %v3210
    %v3212 = vpop.f32.mrf.mxu0
    %3213 = vmatprep.mubr.bf16.mxu0 0
    %3214 = vmatmul.mubr.bf16.gmra.mxu0 %v2254
    %v3215 = vpop.f32.mrf.mxu0
    %v3216 = vadd.f32 %v3119, %v3215
    %v3217 = vpop.f32.mrf.mxu0
    %v3218 = vpop.f32.mrf.mxu0
    %v3219 = vadd.f32 %v3122, %v3218
    %v3220 = vpop.f32.mrf.mxu0
    %3221 = vmatprep.mubr.bf16.mxu0 0
    %3222 = vmatmul.mubr.bf16.gmra.mxu0 %v2260
    %v3223 = vpop.f32.mrf.mxu0
    %v3224 = vadd.f32 %v3127, %v3223
    %v3225 = vpop.f32.mrf.mxu0
    %v3226 = vpop.f32.mrf.mxu0
    %v3227 = vadd.f32 %v3130, %v3226
    %v3228 = vpop.f32.mrf.mxu0
    %3229 = vmatprep.mubr.bf16.mxu0 0
    %3230 = vmatmul.mubr.bf16.gmra.mxu0 %v2266
    %v3231 = vpop.f32.mrf.mxu0
    %v3232 = vadd.f32 %v3135, %v3231
    %v3233 = vpop.f32.mrf.mxu0
    %v3234 = vpop.f32.mrf.mxu0
    %v3235 = vadd.f32 %v3138, %v3234
    %v3236 = vpop.f32.mrf.mxu0
    %3237 = vdwg.mxu0
    %v3238 = vld [vmem:[%s5] sm:$0x1]
    %v3239 = vld [vmem:[%s6] sm:$0x1]
    %v3240 = vadd.f32 %v3176, %v3179
    %v3241 = vadd.f32 %v3240, %v3184
    %v3242 = vadd.f32 %v3241, %v3187
    %v3243 = vadd.f32 %v3242, %v3192
    %v3244 = vadd.f32 %v3243, %v3195
    %v3245 = vadd.f32 %v3244, %v3200
    %v3246 = vadd.f32 %v3245, %v3203
    %v3247 = vadd.f32 %v3246, %v3208
    %v3248 = vadd.f32 %v3247, %v3211
    %v3249 = vadd.f32 %v3248, %v3216
    %v3250 = vadd.f32 %v3249, %v3219
    %v3251 = vadd.f32 %v3250, %v3224
    %v3252 = vadd.f32 %v3251, %v3227
    %v3253 = vadd.f32 %v3252, %v3232
    %v3254 = vadd.f32 %v3253, %v3235
    %v3255 = vrot.slane %v3254, 4
    %v3256 = vadd.f32 %v3254, %v3255
    %v3257 = vrot.slane %v3256, 2
    %v3258 = vadd.f32 %v3256, %v3257
    %v3259 = vrot.slane %v3258, 1
    %v3260 = vadd.f32 %v3258, %v3259
    %v3261 = vmul.f32 %v3260, %v1563
    %v3262 = vsub.f32 %v3176, %v3261
    %v3263 = vsub.f32 %v3179, %v3261
    %v3264 = vsub.f32 %v3184, %v3261
    %v3265 = vsub.f32 %v3187, %v3261
    %v3266 = vsub.f32 %v3192, %v3261
    %v3267 = vsub.f32 %v3195, %v3261
    %v3268 = vsub.f32 %v3200, %v3261
    %v3269 = vsub.f32 %v3203, %v3261
    %v3270 = vsub.f32 %v3208, %v3261
    %v3271 = vsub.f32 %v3211, %v3261
    %v3272 = vsub.f32 %v3216, %v3261
    %v3273 = vsub.f32 %v3219, %v3261
    %v3274 = vsub.f32 %v3224, %v3261
    %v3275 = vsub.f32 %v3227, %v3261
    %v3276 = vsub.f32 %v3232, %v3261
    %v3277 = vsub.f32 %v3235, %v3261
    %v3278 = vmul.f32 %v3262, %v3262
    %v3279 = vmul.f32 %v3263, %v3263
    %v3280 = vmul.f32 %v3264, %v3264
    %v3281 = vmul.f32 %v3265, %v3265
    %v3282 = vmul.f32 %v3266, %v3266
    %v3283 = vmul.f32 %v3267, %v3267
    %v3284 = vmul.f32 %v3268, %v3268
    %v3285 = vmul.f32 %v3269, %v3269
    %v3286 = vmul.f32 %v3270, %v3270
    %v3287 = vmul.f32 %v3271, %v3271
    %v3288 = vmul.f32 %v3272, %v3272
    %v3289 = vmul.f32 %v3273, %v3273
    %v3290 = vmul.f32 %v3274, %v3274
    %v3291 = vmul.f32 %v3275, %v3275
    %v3292 = vmul.f32 %v3276, %v3276
    %v3293 = vmul.f32 %v3277, %v3277
    %v3294 = vadd.f32 %v3278, %v3279
    %v3295 = vadd.f32 %v3294, %v3280
    %v3296 = vadd.f32 %v3295, %v3281
    %v3297 = vadd.f32 %v3296, %v3282
    %v3298 = vadd.f32 %v3297, %v3283
    %v3299 = vadd.f32 %v3298, %v3284
    %v3300 = vadd.f32 %v3299, %v3285
    %v3301 = vadd.f32 %v3300, %v3286
    %v3302 = vadd.f32 %v3301, %v3287
    %v3303 = vadd.f32 %v3302, %v3288
    %v3304 = vadd.f32 %v3303, %v3289
    %v3305 = vadd.f32 %v3304, %v3290
    %v3306 = vadd.f32 %v3305, %v3291
    %v3307 = vadd.f32 %v3306, %v3292
    %v3308 = vadd.f32 %v3307, %v3293
    %v3309 = vrot.slane %v3308, 4
    %v3310 = vadd.f32 %v3308, %v3309
    %v3311 = vrot.slane %v3310, 2
    %v3312 = vadd.f32 %v3310, %v3311
    %v3313 = vrot.slane %v3312, 1
    %v3314 = vadd.f32 %v3312, %v3313
    %v3315 = vmul.f32 %v3314, %v1563
    %v3316 = vmax.f32 %v3315, 0.0
    %v3317 = vadd.f32 %v3316, 1e-05
    %v3318 = vrsqrt.pop %v3317
    %v3319 = vmul.f32 %v3238, %v3318
    %v3321 = vlaneseq
    %v3322 = vshrl.u32 %v3321, 7
    %v3323 = vsub.s32 0, %v3322
    %v3324 = vrot.slane %v3319, %v3323
    %v3326 = vmul.f32 %v3262, %v3324
    %v3327 = vmul.f32 %v3263, %v3324
    %v3328 = vmul.f32 %v3264, %v3324
    %v3329 = vmul.f32 %v3265, %v3324
    %v3330 = vmul.f32 %v3266, %v3324
    %v3331 = vmul.f32 %v3267, %v3324
    %v3332 = vmul.f32 %v3268, %v3324
    %v3333 = vmul.f32 %v3269, %v3324
    %v3334 = vmul.f32 %v3270, %v3324
    %v3335 = vmul.f32 %v3271, %v3324
    %v3336 = vmul.f32 %v3272, %v3324
    %v3337 = vmul.f32 %v3273, %v3324
    %v3338 = vmul.f32 %v3274, %v3324
    %v3339 = vmul.f32 %v3275, %v3324
    %v3340 = vmul.f32 %v3276, %v3324
    %v3341 = vmul.f32 %v3277, %v3324
    %v3343 = vlaneseq
    %v3344 = vshrl.u32 %v3343, 7
    %v3345 = vsub.s32 0, %v3344
    %v3346 = vrot.slane %v3239, %v3345
    %v3348 = vadd.f32 %v3326, %v3346
    %v3349 = vadd.f32 %v3327, %v3346
    %v3350 = vadd.f32 %v3328, %v3346
    %v3351 = vadd.f32 %v3329, %v3346
    %v3352 = vadd.f32 %v3330, %v3346
    %v3353 = vadd.f32 %v3331, %v3346
    %v3354 = vadd.f32 %v3332, %v3346
    %v3355 = vadd.f32 %v3333, %v3346
    %v3356 = vadd.f32 %v3334, %v3346
    %v3357 = vadd.f32 %v3335, %v3346
    %v3358 = vadd.f32 %v3336, %v3346
    %v3359 = vadd.f32 %v3337, %v3346
    %v3360 = vadd.f32 %v3338, %v3346
    %v3361 = vadd.f32 %v3339, %v3346
    %v3362 = vadd.f32 %v3340, %v3346
    %v3363 = vadd.f32 %v3341, %v3346
    %v3364 = vld [vmem:[%s7] sm:$0xff]
    %v3365 = vld [vmem:[%s7 + $0x8] sm:$0xff]
    %v3366 = vld [vmem:[%s7 + $0x10] sm:$0xff]
    %v3367 = vld [vmem:[%s7 + $0x18] sm:$0xff]
    %v3368 = vld [vmem:[%s7 + $0x20] sm:$0xff]
    %v3369 = vld [vmem:[%s7 + $0x28] sm:$0xff]
    %v3370 = vld [vmem:[%s7 + $0x30] sm:$0xff]
    %v3371 = vld [vmem:[%s7 + $0x38] sm:$0xff]
    %v3372 = vld [vmem:[%s7 + $0x40] sm:$0xff]
    %v3373 = vld [vmem:[%s7 + $0x48] sm:$0xff]
    %v3374 = vld [vmem:[%s7 + $0x50] sm:$0xff]
    %v3375 = vld [vmem:[%s7 + $0x58] sm:$0xff]
    %v3376 = vld [vmem:[%s7 + $0x60] sm:$0xff]
    %v3377 = vld [vmem:[%s7 + $0x68] sm:$0xff]
    %v3378 = vld [vmem:[%s7 + $0x70] sm:$0xff]
    %v3379 = vld [vmem:[%s7 + $0x78] sm:$0xff]
    %v3380 = vadd.f32 %v3348, %v3364
    %v3381 = vadd.f32 %v3349, %v3365
    %v3382 = vadd.f32 %v3350, %v3366
    %v3383 = vadd.f32 %v3351, %v3367
    %v3384 = vadd.f32 %v3352, %v3368
    %v3385 = vadd.f32 %v3353, %v3369
    %v3386 = vadd.f32 %v3354, %v3370
    %v3387 = vadd.f32 %v3355, %v3371
    %v3388 = vadd.f32 %v3356, %v3372
    %v3389 = vadd.f32 %v3357, %v3373
    %v3390 = vadd.f32 %v3358, %v3374
    %v3391 = vadd.f32 %v3359, %v3375
    %v3392 = vadd.f32 %v3360, %v3376
    %v3393 = vadd.f32 %v3361, %v3377
    %v3394 = vadd.f32 %v3362, %v3378
    %v3395 = vadd.f32 %v3363, %v3379
    %v3396 = vmax.f32 %v3380, 0.0
    %v3397 = vmax.f32 %v3381, 0.0
    %v3398 = vmax.f32 %v3382, 0.0
    %v3399 = vmax.f32 %v3383, 0.0
    %v3400 = vmax.f32 %v3384, 0.0
    %v3401 = vmax.f32 %v3385, 0.0
    %v3402 = vmax.f32 %v3386, 0.0
    %v3403 = vmax.f32 %v3387, 0.0
    %v3404 = vmax.f32 %v3388, 0.0
    %v3405 = vmax.f32 %v3389, 0.0
    %v3406 = vmax.f32 %v3390, 0.0
    %v3407 = vmax.f32 %v3391, 0.0
    %v3408 = vmax.f32 %v3392, 0.0
    %v3409 = vmax.f32 %v3393, 0.0
    %v3410 = vmax.f32 %v3394, 0.0
    %v3411 = vmax.f32 %v3395, 0.0
    %3412 = vst [vmem:[#allocation2] sm:$0xff] %v3396
    %3413 = vst [vmem:[#allocation2 + $0x8] sm:$0xff] %v3397
    %3414 = vst [vmem:[#allocation2 + $0x10] sm:$0xff] %v3398
    %3415 = vst [vmem:[#allocation2 + $0x18] sm:$0xff] %v3399
    %3416 = vst [vmem:[#allocation2 + $0x20] sm:$0xff] %v3400
    %3417 = vst [vmem:[#allocation2 + $0x28] sm:$0xff] %v3401
    %3418 = vst [vmem:[#allocation2 + $0x30] sm:$0xff] %v3402
    %3419 = vst [vmem:[#allocation2 + $0x38] sm:$0xff] %v3403
    %3420 = vst [vmem:[#allocation2 + $0x40] sm:$0xff] %v3404
    %3421 = vst [vmem:[#allocation2 + $0x48] sm:$0xff] %v3405
    %3422 = vst [vmem:[#allocation2 + $0x50] sm:$0xff] %v3406
    %3423 = vst [vmem:[#allocation2 + $0x58] sm:$0xff] %v3407
    %3424 = vst [vmem:[#allocation2 + $0x60] sm:$0xff] %v3408
    %3425 = vst [vmem:[#allocation2 + $0x68] sm:$0xff] %v3409
    %3426 = vst [vmem:[#allocation2 + $0x70] sm:$0xff] %v3410
    %3427 = vst [vmem:[#allocation2 + $0x78] sm:$0xff] %v3411
    // Predicated region
    $region34: #{forward.3} parent=1 // pred_check
      _
    $region35: #{forward.3} parent=1 // pred_check_branch
      %3429 = sbr.rel (0) target = $region37
    $region36: #{forward.3} parent=1 // pred_region
      %s3431 = ssub.s32 2048, 2048
      %3432 = vsyncadd [#allocation3], %s3431
      %s3433 = sshll.u32 [#allocation2], 4
      %s3434 = int_to_ptr.vmem [resolvable:$true] %s3433
      %3439 = dma.vmem_to_hbm [thread:$0]  %s3434, 2048, %s8, [#allocation3], 128, 128, 8
    $region37: #{forward.3} parent=1 // pred_fallthru
      _
    // Predicated region
    $region38: #{forward.3} parent=1 // pred_check
      _
    $region39: #{forward.3} parent=1 // pred_check_branch
      %3441 = sbr.rel (0) target = $region41
    $region40: #{forward.3} parent=1 // pred_region
      %3442 = dma.done [#allocation3], 2048
    $region41: #{forward.3} parent=1 // pred_fallthru
      _
    %3443 = vsyncpa [#allocation3], 1

// kernel: forward.2
$region0: #{forward.2}
  #allocation0 [shape = 'u32[]', space=smem, size = 0x4, offset = 0x4, fixed_abs, tag = 'smem constant byte address 0x4 - core index']
  #allocation1 [shape = 'u32[144,128]{1,0:T(1,128)}', space=vmem, size = 0x12000, scoped, tag = 'internal scratch']
  %s0 = inlined_call_operand.vmem [shape: bf16[2,9,9,64], index: 0, kind: input, shape index: {}]
  %s1 = inlined_call_operand.vmem [shape: bf16[2,9,9,64], index: 1, kind: input, shape index: {}]
  %s2 = inlined_call_operand.vmem [shape: bf16[2,9,9,64], index: 2, kind: input, shape index: {}]
  %s3 = inlined_call_operand.vmem [shape: bf16[2,9,9,64], index: 3, kind: input, shape index: {}]
  %s4 = inlined_call_operand.vmem [shape: bf16[576,128], index: 4, kind: input, shape index: {}]
  %s5 = inlined_call_operand.vmem [shape: f32[1,128], index: 5, kind: input, shape index: {}, may-alias: {5,8,12}]
  %s6 = inlined_call_operand.vmem [shape: f32[1,128], index: 6, kind: input, shape index: {}, may-alias: {6,9,13}]
  %s7 = inlined_call_operand.vmem [shape: bf16[1152,128], index: 7, kind: input, shape index: {}]
  %s8 = inlined_call_operand.vmem [shape: f32[1,128], index: 8, kind: input, shape index: {}, may-alias: {5,8,12}]
  %s9 = inlined_call_operand.vmem [shape: f32[1,128], index: 9, kind: input, shape index: {}, may-alias: {6,9,13}]
  %s10 = inlined_call_operand.vmem [shape: bf16[128,64], index: 10, kind: input, shape index: {}]
  %s11 = inlined_call_operand.vmem [shape: bf16[64,128], index: 11, kind: input, shape index: {}]
  %s12 = inlined_call_operand.vmem [shape: f32[1,128], index: 12, kind: input, shape index: {}, may-alias: {5,8,12}]
  %s13 = inlined_call_operand.vmem [shape: f32[1,128], index: 13, kind: input, shape index: {}, may-alias: {6,9,13}]
  %s14 = inlined_call_operand.vmem [shape: f32[128,128], index: 14, kind: output, shape index: {}]
  %s15 = sld [smem:[#allocation0]]
  $region66: #{forward.2} parent=0
    _
  %s17 = ssub.s32 1, %s15
  %s18 = scalar_select 0, %s17, %s15
  // Predicated region
  $region2: #{forward.2} parent=0 // pred_check
    _
  $region3: #{forward.2} parent=0 // pred_check_branch
    %20 = sbr.rel (0) target = $region5
  $region4: #{forward.2} parent=0 // pred_region
    _
  $region5: #{forward.2} parent=0 // pred_fallthru
    _
  // Predicated region
  $region6: #{forward.2} parent=0 // pred_check
    _
  $region7: #{forward.2} parent=0 // pred_check_branch
    %22 = sbr.rel (0) target = $region9
  $region8: #{forward.2} parent=0 // pred_region
    _
  $region9: #{forward.2} parent=0 // pred_fallthru
    _
  // Predicated region
  $region10: #{forward.2} parent=0 // pred_check
    _
  $region11: #{forward.2} parent=0 // pred_check_branch
    %24 = sbr.rel (0) target = $region13
  $region12: #{forward.2} parent=0 // pred_region
    _
  $region13: #{forward.2} parent=0 // pred_fallthru
    _
  // Predicated region
  $region14: #{forward.2} parent=0 // pred_check
    _
  $region15: #{forward.2} parent=0 // pred_check_branch
    %26 = sbr.rel (0) target = $region17
  $region16: #{forward.2} parent=0 // pred_region
    _
  $region17: #{forward.2} parent=0 // pred_fallthru
    _
  // Predicated region
  $region18: #{forward.2} parent=0 // pred_check
    _
  $region19: #{forward.2} parent=0 // pred_check_branch
    %28 = sbr.rel (0) target = $region21
  $region20: #{forward.2} parent=0 // pred_region
    _
  $region21: #{forward.2} parent=0 // pred_fallthru
    _
  // Predicated region
  $region22: #{forward.2} parent=0 // pred_check
    _
  $region23: #{forward.2} parent=0 // pred_check_branch
    %30 = sbr.rel (0) target = $region25
  $region24: #{forward.2} parent=0 // pred_region
    _
  $region25: #{forward.2} parent=0 // pred_fallthru
    _
  // Predicated region
  $region26: #{forward.2} parent=0 // pred_check
    _
  $region27: #{forward.2} parent=0 // pred_check_branch
    %32 = sbr.rel (0) target = $region29
  $region28: #{forward.2} parent=0 // pred_region
    _
  $region29: #{forward.2} parent=0 // pred_fallthru
    _
  // Predicated region
  $region30: #{forward.2} parent=0 // pred_check
    _
  $region31: #{forward.2} parent=0 // pred_check_branch
    %34 = sbr.rel (0) target = $region33
  $region32: #{forward.2} parent=0 // pred_region
    _
  $region33: #{forward.2} parent=0 // pred_fallthru
    _
  // Predicated region
  $region34: #{forward.2} parent=0 // pred_check
    _
  $region35: #{forward.2} parent=0 // pred_check_branch
    %36 = sbr.rel (0) target = $region37
  $region36: #{forward.2} parent=0 // pred_region
    _
  $region37: #{forward.2} parent=0 // pred_fallthru
    _
  // Predicated region
  $region38: #{forward.2} parent=0 // pred_check
    _
  $region39: #{forward.2} parent=0 // pred_check_branch
    %38 = sbr.rel (0) target = $region41
  $region40: #{forward.2} parent=0 // pred_region
    _
  $region41: #{forward.2} parent=0 // pred_fallthru
    _
  // Predicated region
  $region42: #{forward.2} parent=0 // pred_check
    _
  $region43: #{forward.2} parent=0 // pred_check_branch
    %40 = sbr.rel (0) target = $region45
  $region44: #{forward.2} parent=0 // pred_region
    _
  $region45: #{forward.2} parent=0 // pred_fallthru
    _
  // Predicated region
  $region46: #{forward.2} parent=0 // pred_check
    _
  $region47: #{forward.2} parent=0 // pred_check_branch
    %42 = sbr.rel (0) target = $region49
  $region48: #{forward.2} parent=0 // pred_region
    _
  $region49: #{forward.2} parent=0 // pred_fallthru
    _
  // Predicated region
  $region50: #{forward.2} parent=0 // pred_check
    _
  $region51: #{forward.2} parent=0 // pred_check_branch
    %44 = sbr.rel (0) target = $region53
  $region52: #{forward.2} parent=0 // pred_region
    _
  $region53: #{forward.2} parent=0 // pred_fallthru
    _
  // Predicated region
  $region54: #{forward.2} parent=0 // pred_check
    _
  $region55: #{forward.2} parent=0 // pred_check_branch
    %46 = sbr.rel (0) target = $region57
  $region56: #{forward.2} parent=0 // pred_region
    _
  $region57: #{forward.2} parent=0 // pred_fallthru
    _
  %v48 = vld [vmem:[%s0] sm:$0xf]
  %v49 = vld [vmem:[%s0 + $0x4] sm:$0x1]
  %v50 = vld [vmem:[%s0 + $0x8] sm:$0xf]
  %v51 = vld [vmem:[%s0 + $0xc] sm:$0x1]
  %v52 = vld [vmem:[%s0 + $0x10] sm:$0xf]
  %v53 = vld [vmem:[%s0 + $0x14] sm:$0x1]
  %v54 = vld [vmem:[%s0 + $0x18] sm:$0xf]
  %v55 = vld [vmem:[%s0 + $0x1c] sm:$0x1]
  %v56 = vld [vmem:[%s0 + $0x20] sm:$0xf]
  %v57 = vld [vmem:[%s0 + $0x24] sm:$0x1]
  %v58 = vld [vmem:[%s0 + $0x28] sm:$0xf]
  %v59 = vld [vmem:[%s0 + $0x2c] sm:$0x1]
  %v60 = vld [vmem:[%s0 + $0x30] sm:$0xf]
  %v61 = vld [vmem:[%s0 + $0x34] sm:$0x1]
  %v62 = vld [vmem:[%s0 + $0x38] sm:$0xf]
  %v63 = vld [vmem:[%s0 + $0x3c] sm:$0x1]
  %v64 = vld [vmem:[%s0 + $0x40] sm:$0xf]
  %v65 = vld [vmem:[%s0 + $0x44] sm:$0x1]
  %v66 = vld [vmem:[%s0 + $0x48] sm:$0xf]
  %v67 = vld [vmem:[%s0 + $0x4c] sm:$0x1]
  %v68 = vld [vmem:[%s0 + $0x50] sm:$0xf]
  %v69 = vld [vmem:[%s0 + $0x54] sm:$0x1]
  %v70 = vld [vmem:[%s0 + $0x58] sm:$0xf]
  %v71 = vld [vmem:[%s0 + $0x5c] sm:$0x1]
  %v72 = vld [vmem:[%s0 + $0x60] sm:$0xf]
  %v73 = vld [vmem:[%s0 + $0x64] sm:$0x1]
  %v74 = vld [vmem:[%s0 + $0x68] sm:$0xf]
  %v75 = vld [vmem:[%s0 + $0x6c] sm:$0x1]
  %v76 = vld [vmem:[%s0 + $0x70] sm:$0xf]
  %v77 = vld [vmem:[%s0 + $0x74] sm:$0x1]
  %v78 = vld [vmem:[%s0 + $0x78] sm:$0xf]
  %v79 = vld [vmem:[%s0 + $0x7c] sm:$0x1]
  %v80 = vld [vmem:[%s0 + $0x80] sm:$0xf]
  %v81 = vld [vmem:[%s0 + $0x84] sm:$0x1]
  %v82 = vld [vmem:[%s0 + $0x88] sm:$0xf]
  %v83 = vld [vmem:[%s0 + $0x8c] sm:$0x1]
  %v84 = vld [vmem:[%s1] sm:$0xf]
  %v85 = vld [vmem:[%s1 + $0x8] sm:$0xf]
  %v86 = vld [vmem:[%s1 + $0x10] sm:$0xf]
  %v87 = vld [vmem:[%s1 + $0x18] sm:$0xf]
  %v88 = vld [vmem:[%s1 + $0x20] sm:$0xf]
  %v89 = vld [vmem:[%s1 + $0x28] sm:$0xf]
  %v90 = vld [vmem:[%s1 + $0x30] sm:$0xf]
  %v91 = vld [vmem:[%s1 + $0x38] sm:$0xf]
  %v92 = vld [vmem:[%s1 + $0x40] sm:$0xf]
  %v93 = vld [vmem:[%s1 + $0x48] sm:$0xf]
  %v94 = vld [vmem:[%s1 + $0x50] sm:$0xf]
  %v95 = vld [vmem:[%s1 + $0x58] sm:$0xf]
  %v96 = vld [vmem:[%s1 + $0x60] sm:$0xf]
  %v97 = vld [vmem:[%s1 + $0x68] sm:$0xf]
  %v98 = vld [vmem:[%s1 + $0x70] sm:$0xf]
  %v99 = vld [vmem:[%s1 + $0x78] sm:$0xf]
  %v100 = vld [vmem:[%s1 + $0x80] sm:$0xf]
  %v101 = vld [vmem:[%s1 + $0x88] sm:$0xf]
  %v102 = vld [vmem:[%s2] sm:$0xf]
  %v103 = vld [vmem:[%s2 + $0x4] sm:$0x1]
  %v104 = vld [vmem:[%s2 + $0x8] sm:$0xf]
  %v105 = vld [vmem:[%s2 + $0xc] sm:$0x1]
  %v106 = vld [vmem:[%s2 + $0x10] sm:$0xf]
  %v107 = vld [vmem:[%s2 + $0x14] sm:$0x1]
  %v108 = vld [vmem:[%s2 + $0x18] sm:$0xf]
  %v109 = vld [vmem:[%s2 + $0x1c] sm:$0x1]
  %v110 = vld [vmem:[%s2 + $0x20] sm:$0xf]
  %v111 = vld [vmem:[%s2 + $0x24] sm:$0x1]
  %v112 = vld [vmem:[%s2 + $0x28] sm:$0xf]
  %v113 = vld [vmem:[%s2 + $0x2c] sm:$0x1]
  %v114 = vld [vmem:[%s2 + $0x30] sm:$0xf]
  %v115 = vld [vmem:[%s2 + $0x34] sm:$0x1]
  %v116 = vld [vmem:[%s2 + $0x38] sm:$0xf]
  %v117 = vld [vmem:[%s2 + $0x3c] sm:$0x1]
  %v118 = vld [vmem:[%s2 + $0x48] sm:$0xf]
  %v119 = vld [vmem:[%s2 + $0x4c] sm:$0x1]
  %v120 = vld [vmem:[%s2 + $0x50] sm:$0xf]
  %v121 = vld [vmem:[%s2 + $0x54] sm:$0x1]
  %v122 = vld [vmem:[%s2 + $0x58] sm:$0xf]
  %v123 = vld [vmem:[%s2 + $0x5c] sm:$0x1]
  %v124 = vld [vmem:[%s2 + $0x60] sm:$0xf]
  %v125 = vld [vmem:[%s2 + $0x64] sm:$0x1]
  %v126 = vld [vmem:[%s2 + $0x68] sm:$0xf]
  %v127 = vld [vmem:[%s2 + $0x6c] sm:$0x1]
  %v128 = vld [vmem:[%s2 + $0x70] sm:$0xf]
  %v129 = vld [vmem:[%s2 + $0x74] sm:$0x1]
  %v130 = vld [vmem:[%s2 + $0x78] sm:$0xf]
  %v131 = vld [vmem:[%s2 + $0x7c] sm:$0x1]
  %v132 = vld [vmem:[%s2 + $0x80] sm:$0xf]
  %v133 = vld [vmem:[%s2 + $0x84] sm:$0x1]
  %v134 = vld [vmem:[%s3] sm:$0xf]
  %v135 = vld [vmem:[%s3 + $0x8] sm:$0xf]
  %v136 = vld [vmem:[%s3 + $0x10] sm:$0xf]
  %v137 = vld [vmem:[%s3 + $0x18] sm:$0xf]
  %v138 = vld [vmem:[%s3 + $0x20] sm:$0xf]
  %v139 = vld [vmem:[%s3 + $0x28] sm:$0xf]
  %v140 = vld [vmem:[%s3 + $0x30] sm:$0xf]
  %v141 = vld [vmem:[%s3 + $0x38] sm:$0xf]
  %v142 = vld [vmem:[%s3 + $0x48] sm:$0xf]
  %v143 = vld [vmem:[%s3 + $0x50] sm:$0xf]
  %v144 = vld [vmem:[%s3 + $0x58] sm:$0xf]
  %v145 = vld [vmem:[%s3 + $0x60] sm:$0xf]
  %v146 = vld [vmem:[%s3 + $0x68] sm:$0xf]
  %v147 = vld [vmem:[%s3 + $0x70] sm:$0xf]
  %v148 = vld [vmem:[%s3 + $0x78] sm:$0xf]
  %v149 = vld [vmem:[%s3 + $0x80] sm:$0xf]
  %v166 = vunpack.c.l.b16 %v84
  %v167 = vunpack.c.l.b16 %v85
  %v168 = vunpack.c.l.b16 %v86
  %v169 = vunpack.c.l.b16 %v87
  %v170 = vunpack.c.l.b16 %v88
  %v171 = vunpack.c.l.b16 %v89
  %v172 = vunpack.c.l.b16 %v90
  %v173 = vunpack.c.l.b16 %v91
  %v174 = vunpack.c.l.b16 %v93
  %v175 = vunpack.c.l.b16 %v94
  %v176 = vunpack.c.l.b16 %v95
  %v177 = vunpack.c.l.b16 %v96
  %v178 = vunpack.c.l.b16 %v97
  %v179 = vunpack.c.l.b16 %v98
  %v180 = vunpack.c.l.b16 %v99
  %v181 = vunpack.c.l.b16 %v100
  %v182 = vpack.c.b16 %v166, %v166
  %v183 = vpack.c.b16 %v167, %v167
  %v184 = vpack.c.b16 %v168, %v168
  %v185 = vpack.c.b16 %v169, %v169
  %v186 = vpack.c.b16 %v170, %v170
  %v187 = vpack.c.b16 %v171, %v171
  %v188 = vpack.c.b16 %v172, %v172
  %v189 = vpack.c.b16 %v173, %v173
  %v190 = vpack.c.b16 %v174, %v174
  %v191 = vpack.c.b16 %v175, %v175
  %v192 = vpack.c.b16 %v176, %v176
  %v193 = vpack.c.b16 %v177, %v177
  %v194 = vpack.c.b16 %v178, %v178
  %v195 = vpack.c.b16 %v179, %v179
  %v196 = vpack.c.b16 %v180, %v180
  %v197 = vpack.c.b16 %v181, %v181
  %198 = vrot.lane.b32.xlu0 %v182, 64
  %v199 = vpop.permute.xlu0 %198
  %200 = vrot.lane.b32.xlu0 %v183, 64
  %v201 = vpop.permute.xlu0 %200
  %202 = vrot.lane.b32.xlu0 %v184, 64
  %v203 = vpop.permute.xlu0 %202
  %204 = vrot.lane.b32.xlu0 %v185, 64
  %v205 = vpop.permute.xlu0 %204
  %206 = vrot.lane.b32.xlu0 %v186, 64
  %v207 = vpop.permute.xlu0 %206
  %208 = vrot.lane.b32.xlu0 %v187, 64
  %v209 = vpop.permute.xlu0 %208
  %210 = vrot.lane.b32.xlu0 %v188, 64
  %v211 = vpop.permute.xlu0 %210
  %212 = vrot.lane.b32.xlu0 %v189, 64
  %v213 = vpop.permute.xlu0 %212
  %214 = vrot.lane.b32.xlu0 %v190, 64
  %v215 = vpop.permute.xlu0 %214
  %216 = vrot.lane.b32.xlu0 %v191, 64
  %v217 = vpop.permute.xlu0 %216
  %218 = vrot.lane.b32.xlu0 %v192, 64
  %v219 = vpop.permute.xlu0 %218
  %220 = vrot.lane.b32.xlu0 %v193, 64
  %v221 = vpop.permute.xlu0 %220
  %222 = vrot.lane.b32.xlu0 %v194, 64
  %v223 = vpop.permute.xlu0 %222
  %224 = vrot.lane.b32.xlu0 %v195, 64
  %v225 = vpop.permute.xlu0 %224
  %226 = vrot.lane.b32.xlu0 %v196, 64
  %v227 = vpop.permute.xlu0 %226
  %228 = vrot.lane.b32.xlu0 %v197, 64
  %v229 = vpop.permute.xlu0 %228
  %v262 = vunpack.c.l.b16 %v48
  %v263 = vunpack.c.l.b16 %v49
  %v264 = vunpack.c.l.b16 %v50
  %v265 = vunpack.c.l.b16 %v51
  %v266 = vunpack.c.l.b16 %v52
  %v267 = vunpack.c.l.b16 %v53
  %v268 = vunpack.c.l.b16 %v54
  %v269 = vunpack.c.l.b16 %v55
  %v270 = vunpack.c.l.b16 %v56
  %v271 = vunpack.c.l.b16 %v57
  %v272 = vunpack.c.l.b16 %v58
  %v273 = vunpack.c.l.b16 %v59
  %v274 = vunpack.c.l.b16 %v60
  %v275 = vunpack.c.l.b16 %v61
  %v276 = vunpack.c.l.b16 %v62
  %v277 = vunpack.c.l.b16 %v63
  %v278 = vunpack.c.l.b16 %v66
  %v279 = vunpack.c.l.b16 %v67
  %v280 = vunpack.c.l.b16 %v68
  %v281 = vunpack.c.l.b16 %v69
  %v282 = vunpack.c.l.b16 %v70
  %v283 = vunpack.c.l.b16 %v71
  %v284 = vunpack.c.l.b16 %v72
  %v285 = vunpack.c.l.b16 %v73
  %v286 = vunpack.c.l.b16 %v74
  %v287 = vunpack.c.l.b16 %v75
  %v288 = vunpack.c.l.b16 %v76
  %v289 = vunpack.c.l.b16 %v77
  %v290 = vunpack.c.l.b16 %v78
  %v291 = vunpack.c.l.b16 %v79
  %v292 = vunpack.c.l.b16 %v80
  %v293 = vunpack.c.l.b16 %v81
  %v294 = vpack.c.b16 %v263, %v262
  %v295 = vpack.c.b16 %v265, %v264
  %v296 = vpack.c.b16 %v267, %v266
  %v297 = vpack.c.b16 %v269, %v268
  %v298 = vpack.c.b16 %v271, %v270
  %v299 = vpack.c.b16 %v273, %v272
  %v300 = vpack.c.b16 %v275, %v274
  %v301 = vpack.c.b16 %v277, %v276
  %v302 = vpack.c.b16 %v279, %v278
  %v303 = vpack.c.b16 %v281, %v280
  %v304 = vpack.c.b16 %v283, %v282
  %v305 = vpack.c.b16 %v285, %v284
  %v306 = vpack.c.b16 %v287, %v286
  %v307 = vpack.c.b16 %v289, %v288
  %v308 = vpack.c.b16 %v291, %v290
  %v309 = vpack.c.b16 %v293, %v292
  %v311 = vshrl.u32 %v294, 16
  %v313 = vshll.u32 %v294, 16
  %v315 = vrot.slane %v313, 1
  %v316 = vor.u32 %v311, %v315
  %v318 = vshrl.u32 %v295, 16
  %v320 = vshll.u32 %v295, 16
  %v322 = vrot.slane %v320, 1
  %v323 = vor.u32 %v318, %v322
  %v325 = vshrl.u32 %v296, 16
  %v327 = vshll.u32 %v296, 16
  %v329 = vrot.slane %v327, 1
  %v330 = vor.u32 %v325, %v329
  %v332 = vshrl.u32 %v297, 16
  %v334 = vshll.u32 %v297, 16
  %v336 = vrot.slane %v334, 1
  %v337 = vor.u32 %v332, %v336
  %v339 = vshrl.u32 %v298, 16
  %v341 = vshll.u32 %v298, 16
  %v343 = vrot.slane %v341, 1
  %v344 = vor.u32 %v339, %v343
  %v346 = vshrl.u32 %v299, 16
  %v348 = vshll.u32 %v299, 16
  %v350 = vrot.slane %v348, 1
  %v351 = vor.u32 %v346, %v350
  %v353 = vshrl.u32 %v300, 16
  %v355 = vshll.u32 %v300, 16
  %v357 = vrot.slane %v355, 1
  %v358 = vor.u32 %v353, %v357
  %v360 = vshrl.u32 %v301, 16
  %v362 = vshll.u32 %v301, 16
  %v364 = vrot.slane %v362, 1
  %v365 = vor.u32 %v360, %v364
  %v367 = vshrl.u32 %v302, 16
  %v369 = vshll.u32 %v302, 16
  %v371 = vrot.slane %v369, 1
  %v372 = vor.u32 %v367, %v371
  %v374 = vshrl.u32 %v303, 16
  %v376 = vshll.u32 %v303, 16
  %v378 = vrot.slane %v376, 1
  %v379 = vor.u32 %v374, %v378
  %v381 = vshrl.u32 %v304, 16
  %v383 = vshll.u32 %v304, 16
  %v385 = vrot.slane %v383, 1
  %v386 = vor.u32 %v381, %v385
  %v388 = vshrl.u32 %v305, 16
  %v390 = vshll.u32 %v305, 16
  %v392 = vrot.slane %v390, 1
  %v393 = vor.u32 %v388, %v392
  %v395 = vshrl.u32 %v306, 16
  %v397 = vshll.u32 %v306, 16
  %v399 = vrot.slane %v397, 1
  %v400 = vor.u32 %v395, %v399
  %v402 = vshrl.u32 %v307, 16
  %v404 = vshll.u32 %v307, 16
  %v406 = vrot.slane %v404, 1
  %v407 = vor.u32 %v402, %v406
  %v409 = vshrl.u32 %v308, 16
  %v411 = vshll.u32 %v308, 16
  %v413 = vrot.slane %v411, 1
  %v414 = vor.u32 %v409, %v413
  %v416 = vshrl.u32 %v309, 16
  %v418 = vshll.u32 %v309, 16
  %v420 = vrot.slane %v418, 1
  %v421 = vor.u32 %v416, %v420
  %v438 = vunpack.c.l.b16 %v102
  %v439 = vunpack.c.l.b16 %v104
  %v440 = vunpack.c.l.b16 %v106
  %v441 = vunpack.c.l.b16 %v108
  %v442 = vunpack.c.l.b16 %v110
  %v443 = vunpack.c.l.b16 %v112
  %v444 = vunpack.c.l.b16 %v114
  %v445 = vunpack.c.l.b16 %v116
  %v446 = vunpack.c.l.b16 %v118
  %v447 = vunpack.c.l.b16 %v120
  %v448 = vunpack.c.l.b16 %v122
  %v449 = vunpack.c.l.b16 %v124
  %v450 = vunpack.c.l.b16 %v126
  %v451 = vunpack.c.l.b16 %v128
  %v452 = vunpack.c.l.b16 %v130
  %v453 = vunpack.c.l.b16 %v132
  %v454 = vpack.c.b16 %v438, %v438
  %v455 = vpack.c.b16 %v439, %v439
  %v456 = vpack.c.b16 %v440, %v440
  %v457 = vpack.c.b16 %v441, %v441
  %v458 = vpack.c.b16 %v442, %v442
  %v459 = vpack.c.b16 %v443, %v443
  %v460 = vpack.c.b16 %v444, %v444
  %v461 = vpack.c.b16 %v445, %v445
  %v462 = vpack.c.b16 %v446, %v446
  %v463 = vpack.c.b16 %v447, %v447
  %v464 = vpack.c.b16 %v448, %v448
  %v465 = vpack.c.b16 %v449, %v449
  %v466 = vpack.c.b16 %v450, %v450
  %v467 = vpack.c.b16 %v451, %v451
  %v468 = vpack.c.b16 %v452, %v452
  %v469 = vpack.c.b16 %v453, %v453
  %470 = vrot.lane.b32.xlu0 %v454, 64
  %v471 = vpop.permute.xlu0 %470
  %472 = vrot.lane.b32.xlu0 %v455, 64
  %v473 = vpop.permute.xlu0 %472
  %474 = vrot.lane.b32.xlu0 %v456, 64
  %v475 = vpop.permute.xlu0 %474
  %476 = vrot.lane.b32.xlu0 %v457, 64
  %v477 = vpop.permute.xlu0 %476
  %478 = vrot.lane.b32.xlu0 %v458, 64
  %v479 = vpop.permute.xlu0 %478
  %480 = vrot.lane.b32.xlu0 %v459, 64
  %v481 = vpop.permute.xlu0 %480
  %482 = vrot.lane.b32.xlu0 %v460, 64
  %v483 = vpop.permute.xlu0 %482
  %484 = vrot.lane.b32.xlu0 %v461, 64
  %v485 = vpop.permute.xlu0 %484
  %486 = vrot.lane.b32.xlu0 %v462, 64
  %v487 = vpop.permute.xlu0 %486
  %488 = vrot.lane.b32.xlu0 %v463, 64
  %v489 = vpop.permute.xlu0 %488
  %490 = vrot.lane.b32.xlu0 %v464, 64
  %v491 = vpop.permute.xlu0 %490
  %492 = vrot.lane.b32.xlu0 %v465, 64
  %v493 = vpop.permute.xlu0 %492
  %494 = vrot.lane.b32.xlu0 %v466, 64
  %v495 = vpop.permute.xlu0 %494
  %496 = vrot.lane.b32.xlu0 %v467, 64
  %v497 = vpop.permute.xlu0 %496
  %498 = vrot.lane.b32.xlu0 %v468, 64
  %v499 = vpop.permute.xlu0 %498
  %500 = vrot.lane.b32.xlu0 %v469, 64
  %v501 = vpop.permute.xlu0 %500
  %v518 = vunpack.c.l.b16 %v103
  %v519 = vunpack.c.l.b16 %v105
  %v520 = vunpack.c.l.b16 %v107
  %v521 = vunpack.c.l.b16 %v109
  %v522 = vunpack.c.l.b16 %v111
  %v523 = vunpack.c.l.b16 %v113
  %v524 = vunpack.c.l.b16 %v115
  %v525 = vunpack.c.l.b16 %v117
  %v526 = vunpack.c.l.b16 %v119
  %v527 = vunpack.c.l.b16 %v121
  %v528 = vunpack.c.l.b16 %v123
  %v529 = vunpack.c.l.b16 %v125
  %v530 = vunpack.c.l.b16 %v127
  %v531 = vunpack.c.l.b16 %v129
  %v532 = vunpack.c.l.b16 %v131
  %v533 = vunpack.c.l.b16 %v133
  %v534 = vpack.c.b16 %v518, %v438
  %v535 = vpack.c.b16 %v519, %v439
  %v536 = vpack.c.b16 %v520, %v440
  %v537 = vpack.c.b16 %v521, %v441
  %v538 = vpack.c.b16 %v522, %v442
  %v539 = vpack.c.b16 %v523, %v443
  %v540 = vpack.c.b16 %v524, %v444
  %v541 = vpack.c.b16 %v525, %v445
  %v542 = vpack.c.b16 %v526, %v446
  %v543 = vpack.c.b16 %v527, %v447
  %v544 = vpack.c.b16 %v528, %v448
  %v545 = vpack.c.b16 %v529, %v449
  %v546 = vpack.c.b16 %v530, %v450
  %v547 = vpack.c.b16 %v531, %v451
  %v548 = vpack.c.b16 %v532, %v452
  %v549 = vpack.c.b16 %v533, %v453
  %v551 = vshrl.u32 %v534, 16
  %v553 = vshll.u32 %v534, 16
  %v555 = vrot.slane %v553, 1
  %v556 = vor.u32 %v551, %v555
  %v558 = vshrl.u32 %v535, 16
  %v560 = vshll.u32 %v535, 16
  %v562 = vrot.slane %v560, 1
  %v563 = vor.u32 %v558, %v562
  %v565 = vshrl.u32 %v536, 16
  %v567 = vshll.u32 %v536, 16
  %v569 = vrot.slane %v567, 1
  %v570 = vor.u32 %v565, %v569
  %v572 = vshrl.u32 %v537, 16
  %v574 = vshll.u32 %v537, 16
  %v576 = vrot.slane %v574, 1
  %v577 = vor.u32 %v572, %v576
  %v579 = vshrl.u32 %v538, 16
  %v581 = vshll.u32 %v538, 16
  %v583 = vrot.slane %v581, 1
  %v584 = vor.u32 %v579, %v583
  %v586 = vshrl.u32 %v539, 16
  %v588 = vshll.u32 %v539, 16
  %v590 = vrot.slane %v588, 1
  %v591 = vor.u32 %v586, %v590
  %v593 = vshrl.u32 %v540, 16
  %v595 = vshll.u32 %v540, 16
  %v597 = vrot.slane %v595, 1
  %v598 = vor.u32 %v593, %v597
  %v600 = vshrl.u32 %v541, 16
  %v602 = vshll.u32 %v541, 16
  %v604 = vrot.slane %v602, 1
  %v605 = vor.u32 %v600, %v604
  %v607 = vshrl.u32 %v542, 16
  %v609 = vshll.u32 %v542, 16
  %v611 = vrot.slane %v609, 1
  %v612 = vor.u32 %v607, %v611
  %v614 = vshrl.u32 %v543, 16
  %v616 = vshll.u32 %v543, 16
  %v618 = vrot.slane %v616, 1
  %v619 = vor.u32 %v614, %v618
  %v621 = vshrl.u32 %v544, 16
  %v623 = vshll.u32 %v544, 16
  %v625 = vrot.slane %v623, 1
  %v626 = vor.u32 %v621, %v625
  %v628 = vshrl.u32 %v545, 16
  %v630 = vshll.u32 %v545, 16
  %v632 = vrot.slane %v630, 1
  %v633 = vor.u32 %v628, %v632
  %v635 = vshrl.u32 %v546, 16
  %v637 = vshll.u32 %v546, 16
  %v639 = vrot.slane %v637, 1
  %v640 = vor.u32 %v635, %v639
  %v642 = vshrl.u32 %v547, 16
  %v644 = vshll.u32 %v547, 16
  %v646 = vrot.slane %v644, 1
  %v647 = vor.u32 %v642, %v646
  %v649 = vshrl.u32 %v548, 16
  %v651 = vshll.u32 %v548, 16
  %v653 = vrot.slane %v651, 1
  %v654 = vor.u32 %v649, %v653
  %v656 = vshrl.u32 %v549, 16
  %v658 = vshll.u32 %v549, 16
  %v660 = vrot.slane %v658, 1
  %v661 = vor.u32 %v656, %v660
  %662 = vrot.lane.b32.xlu0 %v556, 64
  %v663 = vpop.permute.xlu0 %662
  %664 = vrot.lane.b32.xlu0 %v563, 64
  %v665 = vpop.permute.xlu0 %664
  %666 = vrot.lane.b32.xlu0 %v570, 64
  %v667 = vpop.permute.xlu0 %666
  %668 = vrot.lane.b32.xlu0 %v577, 64
  %v669 = vpop.permute.xlu0 %668
  %670 = vrot.lane.b32.xlu0 %v584, 64
  %v671 = vpop.permute.xlu0 %670
  %672 = vrot.lane.b32.xlu0 %v591, 64
  %v673 = vpop.permute.xlu0 %672
  %674 = vrot.lane.b32.xlu0 %v598, 64
  %v675 = vpop.permute.xlu0 %674
  %676 = vrot.lane.b32.xlu0 %v605, 64
  %v677 = vpop.permute.xlu0 %676
  %678 = vrot.lane.b32.xlu0 %v612, 64
  %v679 = vpop.permute.xlu0 %678
  %680 = vrot.lane.b32.xlu0 %v619, 64
  %v681 = vpop.permute.xlu0 %680
  %682 = vrot.lane.b32.xlu0 %v626, 64
  %v683 = vpop.permute.xlu0 %682
  %684 = vrot.lane.b32.xlu0 %v633, 64
  %v685 = vpop.permute.xlu0 %684
  %686 = vrot.lane.b32.xlu0 %v640, 64
  %v687 = vpop.permute.xlu0 %686
  %688 = vrot.lane.b32.xlu0 %v647, 64
  %v689 = vpop.permute.xlu0 %688
  %690 = vrot.lane.b32.xlu0 %v654, 64
  %v691 = vpop.permute.xlu0 %690
  %692 = vrot.lane.b32.xlu0 %v661, 64
  %v693 = vpop.permute.xlu0 %692
  %v696 = vunpack.c.l.b16 %v92
  %v697 = vunpack.c.l.b16 %v101
  %v698 = vpack.c.b16 %v696, %v696
  %v699 = vpack.c.b16 %v697, %v697
  %700 = vrot.lane.b32.xlu0 %v698, 64
  %v701 = vpop.permute.xlu0 %700
  %702 = vrot.lane.b32.xlu0 %v699, 64
  %v703 = vpop.permute.xlu0 %702
  %v708 = vunpack.c.l.b16 %v64
  %v709 = vunpack.c.l.b16 %v65
  %v710 = vunpack.c.l.b16 %v82
  %v711 = vunpack.c.l.b16 %v83
  %v712 = vpack.c.b16 %v709, %v708
  %v713 = vpack.c.b16 %v711, %v710
  %v715 = vshrl.u32 %v712, 16
  %v717 = vshll.u32 %v712, 16
  %v719 = vrot.slane %v717, 1
  %v720 = vor.u32 %v715, %v719
  %v722 = vshrl.u32 %v713, 16
  %v724 = vshll.u32 %v713, 16
  %v726 = vrot.slane %v724, 1
  %v727 = vor.u32 %v722, %v726
  %vm728 = vcmask 523264
  %v731 = vsel %vm728, %v48, %v199
  %v734 = vsel %vm728, %v50, %v201
  %v737 = vsel %vm728, %v52, %v203
  %v740 = vsel %vm728, %v54, %v205
  %v743 = vsel %vm728, %v56, %v207
  %v746 = vsel %vm728, %v58, %v209
  %v749 = vsel %vm728, %v60, %v211
  %v752 = vsel %vm728, %v62, %v213
  %v755 = vsel %vm728, %v66, %v215
  %v758 = vsel %vm728, %v68, %v217
  %v761 = vsel %vm728, %v70, %v219
  %v764 = vsel %vm728, %v72, %v221
  %v767 = vsel %vm728, %v74, %v223
  %v770 = vsel %vm728, %v76, %v225
  %v773 = vsel %vm728, %v78, %v227
  %v776 = vsel %vm728, %v80, %v229
  %v779 = vsel %vm728, %v316, %v471
  %v782 = vsel %vm728, %v323, %v473
  %v785 = vsel %vm728, %v330, %v475
  %v788 = vsel %vm728, %v337, %v477
  %v791 = vsel %vm728, %v344, %v479
  %v794 = vsel %vm728, %v351, %v481
  %v797 = vsel %vm728, %v358, %v483
  %v800 = vsel %vm728, %v365, %v485
  %v803 = vsel %vm728, %v372, %v487
  %v806 = vsel %vm728, %v379, %v489
  %v809 = vsel %vm728, %v386, %v491
  %v812 = vsel %vm728, %v393, %v493
  %v815 = vsel %vm728, %v400, %v495
  %v818 = vsel %vm728, %v407, %v497
  %v821 = vsel %vm728, %v414, %v499
  %v824 = vsel %vm728, %v421, %v501
  %v827 = vsel %vm728, %v134, %v663
  %v830 = vsel %vm728, %v135, %v665
  %v833 = vsel %vm728, %v136, %v667
  %v836 = vsel %vm728, %v137, %v669
  %v839 = vsel %vm728, %v138, %v671
  %v842 = vsel %vm728, %v139, %v673
  %v845 = vsel %vm728, %v140, %v675
  %v848 = vsel %vm728, %v141, %v677
  %v851 = vsel %vm728, %v142, %v679
  %v854 = vsel %vm728, %v143, %v681
  %v857 = vsel %vm728, %v144, %v683
  %v860 = vsel %vm728, %v145, %v685
  %v863 = vsel %vm728, %v146, %v687
  %v866 = vsel %vm728, %v147, %v689
  %v869 = vsel %vm728, %v148, %v691
  %v872 = vsel %vm728, %v149, %v693
  %v875 = vsel %vm728, %v64, %v701
  %v878 = vsel %vm728, %v82, %v703
  %v929 = vunpack.c.l.b16 %v731
  %v930 = vunpack.c.l.b16 %v779
  %v931 = vunpack.c.l.b16 %v827
  %v932 = vunpack.c.l.b16 %v734
  %v933 = vunpack.c.l.b16 %v323
  %v934 = vunpack.c.l.b16 %v782
  %v935 = vunpack.c.l.b16 %v830
  %v936 = vunpack.c.l.b16 %v737
  %v937 = vunpack.c.l.b16 %v330
  %v938 = vunpack.c.l.b16 %v785
  %v939 = vunpack.c.l.b16 %v833
  %v940 = vunpack.c.l.b16 %v740
  %v941 = vunpack.c.l.b16 %v337
  %v942 = vunpack.c.l.b16 %v788
  %v943 = vunpack.c.l.b16 %v836
  %v944 = vunpack.c.l.b16 %v743
  %v945 = vunpack.c.l.b16 %v344
  %v946 = vunpack.c.l.b16 %v791
  %v947 = vunpack.c.l.b16 %v839
  %v948 = vunpack.c.l.b16 %v746
  %v949 = vunpack.c.l.b16 %v351
  %v950 = vunpack.c.l.b16 %v794
  %v951 = vunpack.c.l.b16 %v842
  %v952 = vunpack.c.l.b16 %v749
  %v953 = vunpack.c.l.b16 %v358
  %v954 = vunpack.c.l.b16 %v797
  %v955 = vunpack.c.l.b16 %v845
  %v956 = vunpack.c.l.b16 %v752
  %v957 = vunpack.c.l.b16 %v365
  %v958 = vunpack.c.l.b16 %v800
  %v959 = vunpack.c.l.b16 %v848
  %v960 = vunpack.c.l.b16 %v875
  %v961 = vunpack.c.l.b16 %v720
  %v962 = vunpack.c.l.b16 %v755
  %v963 = vunpack.c.l.b16 %v803
  %v964 = vunpack.c.l.b16 %v851
  %v965 = vunpack.c.l.b16 %v758
  %v966 = vunpack.c.l.b16 %v379
  %v967 = vunpack.c.l.b16 %v806
  %v968 = vunpack.c.l.b16 %v854
  %v969 = vunpack.c.l.b16 %v761
  %v970 = vunpack.c.l.b16 %v386
  %v971 = vunpack.c.l.b16 %v809
  %v972 = vunpack.c.l.b16 %v857
  %v973 = vunpack.c.l.b16 %v764
  %v974 = vunpack.c.l.b16 %v393
  %v975 = vunpack.c.l.b16 %v812
  %v976 = vunpack.c.l.b16 %v860
  %v977 = vunpack.c.l.b16 %v767
  %v978 = vunpack.c.l.b16 %v400
  %v979 = vunpack.c.l.b16 %v815
  %v980 = vunpack.c.l.b16 %v863
  %v981 = vunpack.c.l.b16 %v770
  %v982 = vunpack.c.l.b16 %v407
  %v983 = vunpack.c.l.b16 %v818
  %v984 = vunpack.c.l.b16 %v866
  %v985 = vunpack.c.l.b16 %v773
  %v986 = vunpack.c.l.b16 %v414
  %v987 = vunpack.c.l.b16 %v821
  %v988 = vunpack.c.l.b16 %v869
  %v989 = vunpack.c.l.b16 %v776
  %v990 = vunpack.c.l.b16 %v421
  %v991 = vunpack.c.l.b16 %v824
  %v992 = vunpack.c.l.b16 %v872
  %v993 = vunpack.c.l.b16 %v878
  %v994 = vunpack.c.l.b16 %v727
  %v995 = vld [vmem:[%s4] sm:$0xf]
  %v996 = vld [vmem:[%s4 + $0x4] sm:$0xf]
  %v997 = vld [vmem:[%s4 + $0x8] sm:$0xf]
  %v998 = vld [vmem:[%s4 + $0xc] sm:$0xf]
  %v999 = vld [vmem:[%s4 + $0x10] sm:$0xf]
  %v1000 = vld [vmem:[%s4 + $0x14] sm:$0xf]
  %v1001 = vld [vmem:[%s4 + $0x18] sm:$0xf]
  %v1002 = vld [vmem:[%s4 + $0x1c] sm:$0xf]
  %v1003 = vld [vmem:[%s4 + $0x20] sm:$0xf]
  %v1004 = vld [vmem:[%s4 + $0x24] sm:$0xf]
  %v1005 = vld [vmem:[%s4 + $0x28] sm:$0xf]
  %v1006 = vld [vmem:[%s4 + $0x2c] sm:$0xf]
  %v1007 = vld [vmem:[%s4 + $0x30] sm:$0xf]
  %v1008 = vld [vmem:[%s4 + $0x34] sm:$0xf]
  %v1009 = vld [vmem:[%s4 + $0x38] sm:$0xf]
  %v1010 = vld [vmem:[%s4 + $0x3c] sm:$0xf]
  %v1011 = vld [vmem:[%s4 + $0x40] sm:$0xf]
  %v1012 = vld [vmem:[%s4 + $0x44] sm:$0xf]
  %v1013 = vld [vmem:[%s4 + $0x48] sm:$0xf]
  %v1014 = vld [vmem:[%s4 + $0x4c] sm:$0xf]
  %v1015 = vld [vmem:[%s4 + $0x50] sm:$0xf]
  %v1016 = vld [vmem:[%s4 + $0x54] sm:$0xf]
  %v1017 = vld [vmem:[%s4 + $0x58] sm:$0xf]
  %v1018 = vld [vmem:[%s4 + $0x5c] sm:$0xf]
  %v1019 = vld [vmem:[%s4 + $0x60] sm:$0xf]
  %v1020 = vld [vmem:[%s4 + $0x64] sm:$0xf]
  %v1021 = vld [vmem:[%s4 + $0x68] sm:$0xf]
  %v1022 = vld [vmem:[%s4 + $0x6c] sm:$0xf]
  %v1023 = vld [vmem:[%s4 + $0x70] sm:$0xf]
  %v1024 = vld [vmem:[%s4 + $0x74] sm:$0xf]
  %v1025 = vld [vmem:[%s4 + $0x78] sm:$0xf]
  %v1026 = vld [vmem:[%s4 + $0x7c] sm:$0xf]
  %v1027 = vld [vmem:[%s4 + $0x80] sm:$0xf]
  %v1028 = vld [vmem:[%s4 + $0x84] sm:$0xf]
  %v1029 = vld [vmem:[%s4 + $0x88] sm:$0xf]
  %v1030 = vld [vmem:[%s4 + $0x8c] sm:$0xf]
  %v1031 = vld [vmem:[%s4 + $0x90] sm:$0xf]
  %v1032 = vld [vmem:[%s4 + $0x94] sm:$0xf]
  %v1033 = vld [vmem:[%s4 + $0x98] sm:$0xf]
  %v1034 = vld [vmem:[%s4 + $0x9c] sm:$0xf]
  %v1035 = vld [vmem:[%s4 + $0xa0] sm:$0xf]
  %v1036 = vld [vmem:[%s4 + $0xa4] sm:$0xf]
  %v1037 = vld [vmem:[%s4 + $0xa8] sm:$0xf]
  %v1038 = vld [vmem:[%s4 + $0xac] sm:$0xf]
  %v1039 = vld [vmem:[%s4 + $0xb0] sm:$0xf]
  %v1040 = vld [vmem:[%s4 + $0xb4] sm:$0xf]
  %v1041 = vld [vmem:[%s4 + $0xb8] sm:$0xf]
  %v1042 = vld [vmem:[%s4 + $0xbc] sm:$0xf]
  %v1043 = vld [vmem:[%s4 + $0xc0] sm:$0xf]
  %v1044 = vld [vmem:[%s4 + $0xc4] sm:$0xf]
  %v1045 = vld [vmem:[%s4 + $0xc8] sm:$0xf]
  %v1046 = vld [vmem:[%s4 + $0xcc] sm:$0xf]
  %v1047 = vld [vmem:[%s4 + $0xd0] sm:$0xf]
  %v1048 = vld [vmem:[%s4 + $0xd4] sm:$0xf]
  %v1049 = vld [vmem:[%s4 + $0xd8] sm:$0xf]
  %v1050 = vld [vmem:[%s4 + $0xdc] sm:$0xf]
  %v1051 = vld [vmem:[%s4 + $0xe0] sm:$0xf]
  %v1052 = vld [vmem:[%s4 + $0xe4] sm:$0xf]
  %v1053 = vld [vmem:[%s4 + $0xe8] sm:$0xf]
  %v1054 = vld [vmem:[%s4 + $0xec] sm:$0xf]
  %v1055 = vld [vmem:[%s4 + $0xf0] sm:$0xf]
  %v1056 = vld [vmem:[%s4 + $0xf4] sm:$0xf]
  %v1057 = vld [vmem:[%s4 + $0xf8] sm:$0xf]
  %v1058 = vld [vmem:[%s4 + $0xfc] sm:$0xf]
  %v1059 = vld [vmem:[%s4 + $0x100] sm:$0xf]
  %v1060 = vld [vmem:[%s4 + $0x104] sm:$0xf]
  %v1061 = vld [vmem:[%s4 + $0x108] sm:$0xf]
  %v1062 = vld [vmem:[%s4 + $0x10c] sm:$0xf]
  %v1063 = vld [vmem:[%s4 + $0x110] sm:$0xf]
  %v1064 = vld [vmem:[%s4 + $0x114] sm:$0xf]
  %v1065 = vld [vmem:[%s4 + $0x118] sm:$0xf]
  %v1066 = vld [vmem:[%s4 + $0x11c] sm:$0xf]
  %v1067 = vpack.c.b16 %v932, %v929
  %v1068 = vpack.c.b16 %v934, %v930
  %v1069 = vpack.c.b16 %v935, %v931
  %v1070 = vpack.c.b16 %v936, %v932
  %v1071 = vpack.c.b16 %v937, %v933
  %v1072 = vpack.c.b16 %v940, %v936
  %v1073 = vpack.c.b16 %v942, %v938
  %v1074 = vpack.c.b16 %v943, %v939
  %v1075 = vpack.c.b16 %v944, %v940
  %v1076 = vpack.c.b16 %v945, %v941
  %v1077 = vpack.c.b16 %v948, %v944
  %v1078 = vpack.c.b16 %v950, %v946
  %v1079 = vpack.c.b16 %v951, %v947
  %v1080 = vpack.c.b16 %v952, %v948
  %v1081 = vpack.c.b16 %v953, %v949
  %v1082 = vpack.c.b16 %v956, %v952
  %v1083 = vpack.c.b16 %v958, %v954
  %v1084 = vpack.c.b16 %v959, %v955
  %v1085 = vpack.c.b16 %v960, %v956
  %v1086 = vpack.c.b16 %v961, %v957
  %v1087 = vpack.c.b16 %v965, %v962
  %v1088 = vpack.c.b16 %v967, %v963
  %v1089 = vpack.c.b16 %v968, %v964
  %v1090 = vpack.c.b16 %v969, %v965
  %v1091 = vpack.c.b16 %v970, %v966
  %v1092 = vpack.c.b16 %v973, %v969
  %v1093 = vpack.c.b16 %v975, %v971
  %v1094 = vpack.c.b16 %v976, %v972
  %v1095 = vpack.c.b16 %v977, %v973
  %v1096 = vpack.c.b16 %v978, %v974
  %v1097 = vpack.c.b16 %v981, %v977
  %v1098 = vpack.c.b16 %v983, %v979
  %v1099 = vpack.c.b16 %v984, %v980
  %v1100 = vpack.c.b16 %v985, %v981
  %v1101 = vpack.c.b16 %v986, %v982
  %v1102 = vpack.c.b16 %v989, %v985
  %v1103 = vpack.c.b16 %v991, %v987
  %v1104 = vpack.c.b16 %v992, %v988
  %v1105 = vpack.c.b16 %v993, %v989
  %v1106 = vpack.c.b16 %v994, %v990
  %v1211 = vunpack.c.l.b16 %v995
  %v1212 = vunpack.c.l.b16 %v996
  %v1213 = vunpack.c.l.b16 %v997
  %v1214 = vunpack.c.l.b16 %v998
  %v1215 = vunpack.c.l.b16 %v999
  %v1216 = vunpack.c.l.b16 %v1000
  %v1217 = vunpack.c.l.b16 %v1001
  %v1218 = vunpack.c.l.b16 %v1002
  %v1219 = vunpack.c.l.b16 %v1003
  %v1220 = vunpack.c.l.b16 %v1004
  %v1221 = vunpack.c.l.b16 %v1005
  %v1222 = vunpack.c.l.b16 %v1006
  %v1223 = vunpack.c.l.b16 %v1007
  %v1224 = vunpack.c.l.b16 %v1008
  %v1225 = vunpack.c.l.b16 %v1009
  %v1226 = vunpack.c.l.b16 %v1010
  %v1227 = vunpack.c.l.b16 %v1011
  %v1228 = vunpack.c.l.b16 %v1012
  %v1229 = vunpack.c.l.b16 %v1013
  %v1230 = vunpack.c.l.b16 %v1014
  %v1231 = vunpack.c.l.b16 %v1015
  %v1232 = vunpack.c.l.b16 %v1016
  %v1233 = vunpack.c.l.b16 %v1017
  %v1234 = vunpack.c.l.b16 %v1018
  %v1235 = vunpack.c.l.b16 %v1019
  %v1236 = vunpack.c.l.b16 %v1020
  %v1237 = vunpack.c.l.b16 %v1021
  %v1238 = vunpack.c.l.b16 %v1022
  %v1239 = vunpack.c.l.b16 %v1023
  %v1240 = vunpack.c.l.b16 %v1024
  %v1241 = vunpack.c.l.b16 %v1025
  %v1242 = vunpack.c.l.b16 %v1026
  %v1243 = vunpack.c.l.b16 %v1027
  %v1244 = vunpack.c.l.b16 %v1028
  %v1245 = vunpack.c.l.b16 %v1029
  %v1246 = vunpack.c.l.b16 %v1030
  %v1247 = vunpack.c.l.b16 %v1031
  %v1248 = vunpack.c.l.b16 %v1032
  %v1249 = vunpack.c.l.b16 %v1033
  %v1250 = vunpack.c.l.b16 %v1034
  %v1251 = vunpack.c.l.b16 %v1035
  %v1252 = vunpack.c.l.b16 %v1036
  %v1253 = vunpack.c.l.b16 %v1037
  %v1254 = vunpack.c.l.b16 %v1038
  %v1255 = vunpack.c.l.b16 %v1039
  %v1256 = vunpack.c.l.b16 %v1040
  %v1257 = vunpack.c.l.b16 %v1041
  %v1258 = vunpack.c.l.b16 %v1042
  %v1259 = vunpack.c.l.b16 %v1043
  %v1260 = vunpack.c.l.b16 %v1044
  %v1261 = vunpack.c.l.b16 %v1045
  %v1262 = vunpack.c.l.b16 %v1046
  %v1263 = vunpack.c.l.b16 %v1047
  %v1264 = vunpack.c.l.b16 %v1048
  %v1265 = vunpack.c.l.b16 %v1049
  %v1266 = vunpack.c.l.b16 %v1050
  %v1267 = vunpack.c.l.b16 %v1051
  %v1268 = vunpack.c.l.b16 %v1052
  %v1269 = vunpack.c.l.b16 %v1053
  %v1270 = vunpack.c.l.b16 %v1054
  %v1271 = vunpack.c.l.b16 %v1055
  %v1272 = vunpack.c.l.b16 %v1056
  %v1273 = vunpack.c.l.b16 %v1057
  %v1274 = vunpack.c.l.b16 %v1058
  %v1275 = vunpack.c.l.b16 %v1059
  %v1276 = vunpack.c.l.b16 %v1060
  %v1277 = vunpack.c.l.b16 %v1061
  %v1278 = vunpack.c.l.b16 %v1062
  %v1279 = vunpack.c.l.b16 %v1063
  %v1280 = vunpack.c.l.b16 %v1064
  %v1281 = vunpack.c.l.b16 %v1065
  %v1282 = vunpack.c.l.b16 %v1066
  %v1283 = vpack.c.b16 %v1212, %v1211
  %v1284 = vpack.c.b16 %v1214, %v1213
  %v1285 = vpack.c.b16 %v1216, %v1215
  %v1286 = vpack.c.b16 %v1218, %v1217
  %v1287 = vpack.c.b16 %v1220, %v1219
  %v1288 = vpack.c.b16 %v1222, %v1221
  %v1289 = vpack.c.b16 %v1224, %v1223
  %v1290 = vpack.c.b16 %v1226, %v1225
  %v1291 = vpack.c.b16 %v1228, %v1227
  %v1292 = vpack.c.b16 %v1230, %v1229
  %v1293 = vpack.c.b16 %v1232, %v1231
  %v1294 = vpack.c.b16 %v1234, %v1233
  %v1295 = vpack.c.b16 %v1236, %v1235
  %v1296 = vpack.c.b16 %v1238, %v1237
  %v1297 = vpack.c.b16 %v1240, %v1239
  %v1298 = vpack.c.b16 %v1242, %v1241
  %v1299 = vpack.c.b16 %v1244, %v1243
  %v1300 = vpack.c.b16 %v1246, %v1245
  %v1301 = vpack.c.b16 %v1248, %v1247
  %v1302 = vpack.c.b16 %v1250, %v1249
  %v1303 = vpack.c.b16 %v1252, %v1251
  %v1304 = vpack.c.b16 %v1254, %v1253
  %v1305 = vpack.c.b16 %v1256, %v1255
  %v1306 = vpack.c.b16 %v1258, %v1257
  %v1307 = vpack.c.b16 %v1260, %v1259
  %v1308 = vpack.c.b16 %v1262, %v1261
  %v1309 = vpack.c.b16 %v1264, %v1263
  %v1310 = vpack.c.b16 %v1266, %v1265
  %v1311 = vpack.c.b16 %v1268, %v1267
  %v1312 = vpack.c.b16 %v1270, %v1269
  %v1313 = vpack.c.b16 %v1272, %v1271
  %v1314 = vpack.c.b16 %v1274, %v1273
  %v1315 = vpack.c.b16 %v1276, %v1275
  %v1316 = vpack.c.b16 %v1278, %v1277
  %v1317 = vpack.c.b16 %v1280, %v1279
  %v1318 = vpack.c.b16 %v1282, %v1281
  %v1356 = vsel %vm728, %v1071, 0
  %v1359 = vsel %vm728, %v1076, 0
  %v1362 = vsel %vm728, %v1081, 0
  %v1365 = vsel %vm728, %v1086, 0
  %v1368 = vsel %vm728, %v1091, 0
  %v1371 = vsel %vm728, %v1096, 0
  %v1374 = vsel %vm728, %v1101, 0
  %v1377 = vsel %vm728, %v1106, 0
  %1379 = vmatprep.subr.bf16.mxu0 0
  %1380 = vmatpush1.bf16.msra.mxu0 %v1290
  %1381 = vmatprep.subr.bf16.mxu0 0
  %1382 = vmatpush1.bf16.msra.mxu0 %v1289
  %1383 = vmatprep.subr.bf16.mxu0 0
  %1384 = vmatpush1.bf16.msra.mxu0 %v1288
  %1385 = vmatprep.subr.bf16.mxu0 0
  %1386 = vmatpush1.bf16.msra.mxu0 %v1287
  %1387 = vmatprep.subr.bf16.mxu0 0
  %1388 = vmatpush1.bf16.msra.mxu0 %v1286
  %1389 = vmatprep.subr.bf16.mxu0 0
  %1390 = vmatpush1.bf16.msra.mxu0 %v1285
  %1391 = vmatprep.subr.bf16.mxu0 0
  %1392 = vmatpush1.bf16.msra.mxu0 %v1284
  %1393 = vmatprep.subr.bf16.mxu0 0
  %1394 = vmatpush1.bf16.msra.mxu0 %v1283
  %1395 = vmatprep.subr.bf16.mxu0 0
  %1396 = vmatpush2.bf16.msra.mxu0 %v1298
  %1397 = vmatprep.subr.bf16.mxu0 0
  %1398 = vmatpush2.bf16.msra.mxu0 %v1297
  %1399 = vmatprep.subr.bf16.mxu0 0
  %1400 = vmatpush2.bf16.msra.mxu0 %v1296
  %1401 = vmatprep.subr.bf16.mxu0 0
  %1402 = vmatpush2.bf16.msra.mxu0 %v1295
  %1403 = vmatprep.subr.bf16.mxu0 0
  %1404 = vmatpush2.bf16.msra.mxu0 %v1294
  %1405 = vmatprep.subr.bf16.mxu0 0
  %1406 = vmatpush2.bf16.msra.mxu0 %v1293
  %1407 = vmatprep.subr.bf16.mxu0 0
  %1408 = vmatpush2.bf16.msra.mxu0 %v1292
  %1409 = vmatprep.subr.bf16.mxu0 0
  %1410 = vmatpush2.bf16.msra.mxu0 %v1291
  %1411 = vmatprep.mubr.bf16.mxu0 %v1068
  %1412 = vmatmul.mubr.bf16.gmra.mxu0 %v1067
  %v1413 = vpop.f32.mrf.mxu0
  %v1414 = vadd.f32 0.0, %v1413
  %v1415 = vpop.f32.mrf.mxu0
  %v1416 = vpop.f32.mrf.mxu0
  %v1417 = vadd.f32 0.0, %v1416
  %v1418 = vpop.f32.mrf.mxu0
  %1419 = vmatprep.mubr.bf16.mxu0 %v1073
  %1420 = vmatmul.mubr.bf16.gmra.mxu0 %v1072
  %v1421 = vpop.f32.mrf.mxu0
  %v1422 = vadd.f32 0.0, %v1421
  %v1423 = vpop.f32.mrf.mxu0
  %v1424 = vpop.f32.mrf.mxu0
  %v1425 = vadd.f32 0.0, %v1424
  %v1426 = vpop.f32.mrf.mxu0
  %1427 = vmatprep.mubr.bf16.mxu0 %v1078
  %1428 = vmatmul.mubr.bf16.gmra.mxu0 %v1077
  %v1429 = vpop.f32.mrf.mxu0
  %v1430 = vadd.f32 0.0, %v1429
  %v1431 = vpop.f32.mrf.mxu0
  %v1432 = vpop.f32.mrf.mxu0
  %v1433 = vadd.f32 0.0, %v1432
  %v1434 = vpop.f32.mrf.mxu0
  %1435 = vmatprep.mubr.bf16.mxu0 %v1083
  %1436 = vmatmul.mubr.bf16.gmra.mxu0 %v1082
  %v1437 = vpop.f32.mrf.mxu0
  %v1438 = vadd.f32 0.0, %v1437
  %v1439 = vpop.f32.mrf.mxu0
  %v1440 = vpop.f32.mrf.mxu0
  %v1441 = vadd.f32 0.0, %v1440
  %v1442 = vpop.f32.mrf.mxu0
  %1443 = vmatprep.mubr.bf16.mxu0 %v1088
  %1444 = vmatmul.mubr.bf16.gmra.mxu0 %v1087
  %v1445 = vpop.f32.mrf.mxu0
  %v1446 = vadd.f32 0.0, %v1445
  %v1447 = vpop.f32.mrf.mxu0
  %v1448 = vpop.f32.mrf.mxu0
  %v1449 = vadd.f32 0.0, %v1448
  %v1450 = vpop.f32.mrf.mxu0
  %1451 = vmatprep.mubr.bf16.mxu0 %v1093
  %1452 = vmatmul.mubr.bf16.gmra.mxu0 %v1092
  %v1453 = vpop.f32.mrf.mxu0
  %v1454 = vadd.f32 0.0, %v1453
  %v1455 = vpop.f32.mrf.mxu0
  %v1456 = vpop.f32.mrf.mxu0
  %v1457 = vadd.f32 0.0, %v1456
  %v1458 = vpop.f32.mrf.mxu0
  %1459 = vmatprep.mubr.bf16.mxu0 %v1098
  %1460 = vmatmul.mubr.bf16.gmra.mxu0 %v1097
  %v1461 = vpop.f32.mrf.mxu0
  %v1462 = vadd.f32 0.0, %v1461
  %v1463 = vpop.f32.mrf.mxu0
  %v1464 = vpop.f32.mrf.mxu0
  %v1465 = vadd.f32 0.0, %v1464
  %v1466 = vpop.f32.mrf.mxu0
  %1467 = vmatprep.mubr.bf16.mxu0 %v1103
  %1468 = vmatmul.mubr.bf16.gmra.mxu0 %v1102
  %v1469 = vpop.f32.mrf.mxu0
  %v1470 = vadd.f32 0.0, %v1469
  %v1471 = vpop.f32.mrf.mxu0
  %v1472 = vpop.f32.mrf.mxu0
  %v1473 = vadd.f32 0.0, %v1472
  %v1474 = vpop.f32.mrf.mxu0
  %1475 = vdwg.mxu0
  %1476 = vmatprep.subr.bf16.mxu0 0
  %1477 = vmatpush1.bf16.msra.mxu0 %v1306
  %1478 = vmatprep.subr.bf16.mxu0 0
  %1479 = vmatpush1.bf16.msra.mxu0 %v1305
  %1480 = vmatprep.subr.bf16.mxu0 0
  %1481 = vmatpush1.bf16.msra.mxu0 %v1304
  %1482 = vmatprep.subr.bf16.mxu0 0
  %1483 = vmatpush1.bf16.msra.mxu0 %v1303
  %1484 = vmatprep.subr.bf16.mxu0 0
  %1485 = vmatpush1.bf16.msra.mxu0 %v1302
  %1486 = vmatprep.subr.bf16.mxu0 0
  %1487 = vmatpush1.bf16.msra.mxu0 %v1301
  %1488 = vmatprep.subr.bf16.mxu0 0
  %1489 = vmatpush1.bf16.msra.mxu0 %v1300
  %1490 = vmatprep.subr.bf16.mxu0 0
  %1491 = vmatpush1.bf16.msra.mxu0 %v1299
  %1492 = vmatprep.subr.bf16.mxu0 0
  %1493 = vmatpush2.bf16.msra.mxu0 %v1314
  %1494 = vmatprep.subr.bf16.mxu0 0
  %1495 = vmatpush2.bf16.msra.mxu0 %v1313
  %1496 = vmatprep.subr.bf16.mxu0 0
  %1497 = vmatpush2.bf16.msra.mxu0 %v1312
  %1498 = vmatprep.subr.bf16.mxu0 0
  %1499 = vmatpush2.bf16.msra.mxu0 %v1311
  %1500 = vmatprep.subr.bf16.mxu0 0
  %1501 = vmatpush2.bf16.msra.mxu0 %v1310
  %1502 = vmatprep.subr.bf16.mxu0 0
  %1503 = vmatpush2.bf16.msra.mxu0 %v1309
  %1504 = vmatprep.subr.bf16.mxu0 0
  %1505 = vmatpush2.bf16.msra.mxu0 %v1308
  %1506 = vmatprep.subr.bf16.mxu0 0
  %1507 = vmatpush2.bf16.msra.mxu0 %v1307
  %1508 = vmatprep.mubr.bf16.mxu0 %v1070
  %1509 = vmatmul.mubr.bf16.gmra.mxu0 %v1069
  %v1510 = vpop.f32.mrf.mxu0
  %v1511 = vadd.f32 %v1414, %v1510
  %v1512 = vpop.f32.mrf.mxu0
  %v1513 = vpop.f32.mrf.mxu0
  %v1514 = vadd.f32 %v1417, %v1513
  %v1515 = vpop.f32.mrf.mxu0
  %1516 = vmatprep.mubr.bf16.mxu0 %v1075
  %1517 = vmatmul.mubr.bf16.gmra.mxu0 %v1074
  %v1518 = vpop.f32.mrf.mxu0
  %v1519 = vadd.f32 %v1422, %v1518
  %v1520 = vpop.f32.mrf.mxu0
  %v1521 = vpop.f32.mrf.mxu0
  %v1522 = vadd.f32 %v1425, %v1521
  %v1523 = vpop.f32.mrf.mxu0
  %1524 = vmatprep.mubr.bf16.mxu0 %v1080
  %1525 = vmatmul.mubr.bf16.gmra.mxu0 %v1079
  %v1526 = vpop.f32.mrf.mxu0
  %v1527 = vadd.f32 %v1430, %v1526
  %v1528 = vpop.f32.mrf.mxu0
  %v1529 = vpop.f32.mrf.mxu0
  %v1530 = vadd.f32 %v1433, %v1529
  %v1531 = vpop.f32.mrf.mxu0
  %1532 = vmatprep.mubr.bf16.mxu0 %v1085
  %1533 = vmatmul.mubr.bf16.gmra.mxu0 %v1084
  %v1534 = vpop.f32.mrf.mxu0
  %v1535 = vadd.f32 %v1438, %v1534
  %v1536 = vpop.f32.mrf.mxu0
  %v1537 = vpop.f32.mrf.mxu0
  %v1538 = vadd.f32 %v1441, %v1537
  %v1539 = vpop.f32.mrf.mxu0
  %1540 = vmatprep.mubr.bf16.mxu0 %v1090
  %1541 = vmatmul.mubr.bf16.gmra.mxu0 %v1089
  %v1542 = vpop.f32.mrf.mxu0
  %v1543 = vadd.f32 %v1446, %v1542
  %v1544 = vpop.f32.mrf.mxu0
  %v1545 = vpop.f32.mrf.mxu0
  %v1546 = vadd.f32 %v1449, %v1545
  %v1547 = vpop.f32.mrf.mxu0
  %1548 = vmatprep.mubr.bf16.mxu0 %v1095
  %1549 = vmatmul.mubr.bf16.gmra.mxu0 %v1094
  %v1550 = vpop.f32.mrf.mxu0
  %v1551 = vadd.f32 %v1454, %v1550
  %v1552 = vpop.f32.mrf.mxu0
  %v1553 = vpop.f32.mrf.mxu0
  %v1554 = vadd.f32 %v1457, %v1553
  %v1555 = vpop.f32.mrf.mxu0
  %1556 = vmatprep.mubr.bf16.mxu0 %v1100
  %1557 = vmatmul.mubr.bf16.gmra.mxu0 %v1099
  %v1558 = vpop.f32.mrf.mxu0
  %v1559 = vadd.f32 %v1462, %v1558
  %v1560 = vpop.f32.mrf.mxu0
  %v1561 = vpop.f32.mrf.mxu0
  %v1562 = vadd.f32 %v1465, %v1561
  %v1563 = vpop.f32.mrf.mxu0
  %1564 = vmatprep.mubr.bf16.mxu0 %v1105
  %1565 = vmatmul.mubr.bf16.gmra.mxu0 %v1104
  %v1566 = vpop.f32.mrf.mxu0
  %v1567 = vadd.f32 %v1470, %v1566
  %v1568 = vpop.f32.mrf.mxu0
  %v1569 = vpop.f32.mrf.mxu0
  %v1570 = vadd.f32 %v1473, %v1569
  %v1571 = vpop.f32.mrf.mxu0
  %1572 = vdwg.mxu0
  %1573 = vmatprep.subr.bf16.mxu0 0
  %1574 = vmatpush1.bf16.msra.mxu0 0
  %1575 = vmatprep.subr.bf16.mxu0 0
  %1576 = vmatpush1.bf16.msra.mxu0 0
  %1577 = vmatprep.subr.bf16.mxu0 0
  %1578 = vmatpush1.bf16.msra.mxu0 0
  %1579 = vmatprep.subr.bf16.mxu0 0
  %1580 = vmatpush1.bf16.msra.mxu0 0
  %1581 = vmatprep.subr.bf16.mxu0 0
  %1582 = vmatpush1.bf16.msra.mxu0 %v1318
  %1583 = vmatprep.subr.bf16.mxu0 0
  %1584 = vmatpush1.bf16.msra.mxu0 %v1317
  %1585 = vmatprep.subr.bf16.mxu0 0
  %1586 = vmatpush1.bf16.msra.mxu0 %v1316
  %1587 = vmatprep.subr.bf16.mxu0 0
  %1588 = vmatpush1.bf16.msra.mxu0 %v1315
  %1589 = vmatprep.subr.bf16.mxu0 0
  %1590 = vmatpush2.bf16.msra.mxu0 0
  %1591 = vmatprep.subr.bf16.mxu0 0
  %1592 = vmatpush2.bf16.msra.mxu0 0
  %1593 = vmatprep.subr.bf16.mxu0 0
  %1594 = vmatpush2.bf16.msra.mxu0 0
  %1595 = vmatprep.subr.bf16.mxu0 0
  %1596 = vmatpush2.bf16.msra.mxu0 0
  %1597 = vmatprep.subr.bf16.mxu0 0
  %1598 = vmatpush2.bf16.msra.mxu0 0
  %1599 = vmatprep.subr.bf16.mxu0 0
  %1600 = vmatpush2.bf16.msra.mxu0 0
  %1601 = vmatprep.subr.bf16.mxu0 0
  %1602 = vmatpush2.bf16.msra.mxu0 0
  %1603 = vmatprep.subr.bf16.mxu0 0
  %1604 = vmatpush2.bf16.msra.mxu0 0
  %1605 = vmatprep.mubr.bf16.mxu0 0
  %1606 = vmatmul.mubr.bf16.gmra.mxu0 %v1356
  %v1607 = vpop.f32.mrf.mxu0
  %v1608 = vadd.f32 %v1511, %v1607
  %v1609 = vpop.f32.mrf.mxu0
  %v1610 = vpop.f32.mrf.mxu0
  %v1611 = vadd.f32 %v1514, %v1610
  %v1612 = vpop.f32.mrf.mxu0
  %1613 = vmatprep.mubr.bf16.mxu0 0
  %1614 = vmatmul.mubr.bf16.gmra.mxu0 %v1359
  %v1615 = vpop.f32.mrf.mxu0
  %v1616 = vadd.f32 %v1519, %v1615
  %v1617 = vpop.f32.mrf.mxu0
  %v1618 = vpop.f32.mrf.mxu0
  %v1619 = vadd.f32 %v1522, %v1618
  %v1620 = vpop.f32.mrf.mxu0
  %1621 = vmatprep.mubr.bf16.mxu0 0
  %1622 = vmatmul.mubr.bf16.gmra.mxu0 %v1362
  %v1623 = vpop.f32.mrf.mxu0
  %v1624 = vadd.f32 %v1527, %v1623
  %v1625 = vpop.f32.mrf.mxu0
  %v1626 = vpop.f32.mrf.mxu0
  %v1627 = vadd.f32 %v1530, %v1626
  %v1628 = vpop.f32.mrf.mxu0
  %1629 = vmatprep.mubr.bf16.mxu0 0
  %1630 = vmatmul.mubr.bf16.gmra.mxu0 %v1365
  %v1631 = vpop.f32.mrf.mxu0
  %v1632 = vadd.f32 %v1535, %v1631
  %v1633 = vpop.f32.mrf.mxu0
  %v1634 = vpop.f32.mrf.mxu0
  %v1635 = vadd.f32 %v1538, %v1634
  %v1636 = vpop.f32.mrf.mxu0
  %1637 = vmatprep.mubr.bf16.mxu0 0
  %1638 = vmatmul.mubr.bf16.gmra.mxu0 %v1368
  %v1639 = vpop.f32.mrf.mxu0
  %v1640 = vadd.f32 %v1543, %v1639
  %v1641 = vpop.f32.mrf.mxu0
  %v1642 = vpop.f32.mrf.mxu0
  %v1643 = vadd.f32 %v1546, %v1642
  %v1644 = vpop.f32.mrf.mxu0
  %1645 = vmatprep.mubr.bf16.mxu0 0
  %1646 = vmatmul.mubr.bf16.gmra.mxu0 %v1371
  %v1647 = vpop.f32.mrf.mxu0
  %v1648 = vadd.f32 %v1551, %v1647
  %v1649 = vpop.f32.mrf.mxu0
  %v1650 = vpop.f32.mrf.mxu0
  %v1651 = vadd.f32 %v1554, %v1650
  %v1652 = vpop.f32.mrf.mxu0
  %1653 = vmatprep.mubr.bf16.mxu0 0
  %1654 = vmatmul.mubr.bf16.gmra.mxu0 %v1374
  %v1655 = vpop.f32.mrf.mxu0
  %v1656 = vadd.f32 %v1559, %v1655
  %v1657 = vpop.f32.mrf.mxu0
  %v1658 = vpop.f32.mrf.mxu0
  %v1659 = vadd.f32 %v1562, %v1658
  %v1660 = vpop.f32.mrf.mxu0
  %1661 = vmatprep.mubr.bf16.mxu0 0
  %1662 = vmatmul.mubr.bf16.gmra.mxu0 %v1377
  %v1663 = vpop.f32.mrf.mxu0
  %v1664 = vadd.f32 %v1567, %v1663
  %v1665 = vpop.f32.mrf.mxu0
  %v1666 = vpop.f32.mrf.mxu0
  %v1667 = vadd.f32 %v1570, %v1666
  %v1668 = vpop.f32.mrf.mxu0
  %1669 = vdwg.mxu0
  %v1670 = vld [vmem:[%s5] sm:$0x1]
  %v1671 = vld [vmem:[%s6] sm:$0x1]
  %v1672 = vadd.f32 %v1608, %v1611
  %v1673 = vadd.f32 %v1672, %v1616
  %v1674 = vadd.f32 %v1673, %v1619
  %v1675 = vadd.f32 %v1674, %v1624
  %v1676 = vadd.f32 %v1675, %v1627
  %v1677 = vadd.f32 %v1676, %v1632
  %v1678 = vadd.f32 %v1677, %v1635
  %v1679 = vadd.f32 %v1678, %v1640
  %v1680 = vadd.f32 %v1679, %v1643
  %v1681 = vadd.f32 %v1680, %v1648
  %v1682 = vadd.f32 %v1681, %v1651
  %v1683 = vadd.f32 %v1682, %v1656
  %v1684 = vadd.f32 %v1683, %v1659
  %v1685 = vadd.f32 %v1684, %v1664
  %v1686 = vadd.f32 %v1685, %v1667
  %v1687 = vrot.slane %v1686, 4
  %v1688 = vadd.f32 %v1686, %v1687
  %v1689 = vrot.slane %v1688, 2
  %v1690 = vadd.f32 %v1688, %v1689
  %v1691 = vrot.slane %v1690, 1
  %v1692 = vadd.f32 %v1690, %v1691
  %v1693 = vrcp.pop 128.0
  %v1694 = vmul.f32 %v1692, %v1693
  %v1695 = vsub.f32 %v1608, %v1694
  %v1696 = vsub.f32 %v1611, %v1694
  %v1697 = vsub.f32 %v1616, %v1694
  %v1698 = vsub.f32 %v1619, %v1694
  %v1699 = vsub.f32 %v1624, %v1694
  %v1700 = vsub.f32 %v1627, %v1694
  %v1701 = vsub.f32 %v1632, %v1694
  %v1702 = vsub.f32 %v1635, %v1694
  %v1703 = vsub.f32 %v1640, %v1694
  %v1704 = vsub.f32 %v1643, %v1694
  %v1705 = vsub.f32 %v1648, %v1694
  %v1706 = vsub.f32 %v1651, %v1694
  %v1707 = vsub.f32 %v1656, %v1694
  %v1708 = vsub.f32 %v1659, %v1694
  %v1709 = vsub.f32 %v1664, %v1694
  %v1710 = vsub.f32 %v1667, %v1694
  %v1711 = vmul.f32 %v1695, %v1695
  %v1712 = vmul.f32 %v1696, %v1696
  %v1713 = vmul.f32 %v1697, %v1697
  %v1714 = vmul.f32 %v1698, %v1698
  %v1715 = vmul.f32 %v1699, %v1699
  %v1716 = vmul.f32 %v1700, %v1700
  %v1717 = vmul.f32 %v1701, %v1701
  %v1718 = vmul.f32 %v1702, %v1702
  %v1719 = vmul.f32 %v1703, %v1703
  %v1720 = vmul.f32 %v1704, %v1704
  %v1721 = vmul.f32 %v1705, %v1705
  %v1722 = vmul.f32 %v1706, %v1706
  %v1723 = vmul.f32 %v1707, %v1707
  %v1724 = vmul.f32 %v1708, %v1708
  %v1725 = vmul.f32 %v1709, %v1709
  %v1726 = vmul.f32 %v1710, %v1710
  %v1727 = vadd.f32 %v1711, %v1712
  %v1728 = vadd.f32 %v1727, %v1713
  %v1729 = vadd.f32 %v1728, %v1714
  %v1730 = vadd.f32 %v1729, %v1715
  %v1731 = vadd.f32 %v1730, %v1716
  %v1732 = vadd.f32 %v1731, %v1717
  %v1733 = vadd.f32 %v1732, %v1718
  %v1734 = vadd.f32 %v1733, %v1719
  %v1735 = vadd.f32 %v1734, %v1720
  %v1736 = vadd.f32 %v1735, %v1721
  %v1737 = vadd.f32 %v1736, %v1722
  %v1738 = vadd.f32 %v1737, %v1723
  %v1739 = vadd.f32 %v1738, %v1724
  %v1740 = vadd.f32 %v1739, %v1725
  %v1741 = vadd.f32 %v1740, %v1726
  %v1742 = vrot.slane %v1741, 4
  %v1743 = vadd.f32 %v1741, %v1742
  %v1744 = vrot.slane %v1743, 2
  %v1745 = vadd.f32 %v1743, %v1744
  %v1746 = vrot.slane %v1745, 1
  %v1747 = vadd.f32 %v1745, %v1746
  %v1748 = vmul.f32 %v1747, %v1693
  %v1749 = vmax.f32 %v1748, 0.0
  %v1750 = vadd.f32 %v1749, 1e-05
  %v1751 = vrsqrt.pop %v1750
  %v1752 = vmul.f32 %v1670, %v1751
  %v1754 = vlaneseq
  %v1755 = vshrl.u32 %v1754, 7
  %v1756 = vsub.s32 0, %v1755
  %v1757 = vrot.slane %v1752, %v1756
  %v1759 = vmul.f32 %v1695, %v1757
  %v1760 = vmul.f32 %v1696, %v1757
  %v1761 = vmul.f32 %v1697, %v1757
  %v1762 = vmul.f32 %v1698, %v1757
  %v1763 = vmul.f32 %v1699, %v1757
  %v1764 = vmul.f32 %v1700, %v1757
  %v1765 = vmul.f32 %v1701, %v1757
  %v1766 = vmul.f32 %v1702, %v1757
  %v1767 = vmul.f32 %v1703, %v1757
  %v1768 = vmul.f32 %v1704, %v1757
  %v1769 = vmul.f32 %v1705, %v1757
  %v1770 = vmul.f32 %v1706, %v1757
  %v1771 = vmul.f32 %v1707, %v1757
  %v1772 = vmul.f32 %v1708, %v1757
  %v1773 = vmul.f32 %v1709, %v1757
  %v1774 = vmul.f32 %v1710, %v1757
  %v1776 = vlaneseq
  %v1777 = vshrl.u32 %v1776, 7
  %v1778 = vsub.s32 0, %v1777
  %v1779 = vrot.slane %v1671, %v1778
  %v1781 = vadd.f32 %v1759, %v1779
  %v1782 = vadd.f32 %v1760, %v1779
  %v1783 = vadd.f32 %v1761, %v1779
  %v1784 = vadd.f32 %v1762, %v1779
  %v1785 = vadd.f32 %v1763, %v1779
  %v1786 = vadd.f32 %v1764, %v1779
  %v1787 = vadd.f32 %v1765, %v1779
  %v1788 = vadd.f32 %v1766, %v1779
  %v1789 = vadd.f32 %v1767, %v1779
  %v1790 = vadd.f32 %v1768, %v1779
  %v1791 = vadd.f32 %v1769, %v1779
  %v1792 = vadd.f32 %v1770, %v1779
  %v1793 = vadd.f32 %v1771, %v1779
  %v1794 = vadd.f32 %v1772, %v1779
  %v1795 = vadd.f32 %v1773, %v1779
  %v1796 = vadd.f32 %v1774, %v1779
  %v1797 = vmax.f32 %v1781, 0.0
  %v1798 = vmax.f32 %v1782, 0.0
  %v1799 = vmax.f32 %v1783, 0.0
  %v1800 = vmax.f32 %v1784, 0.0
  %v1801 = vmax.f32 %v1785, 0.0
  %v1802 = vmax.f32 %v1786, 0.0
  %v1803 = vmax.f32 %v1787, 0.0
  %v1804 = vmax.f32 %v1788, 0.0
  %v1805 = vmax.f32 %v1789, 0.0
  %v1806 = vmax.f32 %v1790, 0.0
  %v1807 = vmax.f32 %v1791, 0.0
  %v1808 = vmax.f32 %v1792, 0.0
  %v1809 = vmax.f32 %v1793, 0.0
  %v1810 = vmax.f32 %v1794, 0.0
  %v1811 = vmax.f32 %v1795, 0.0
  %v1812 = vmax.f32 %v1796, 0.0
  %v1813 = vpack.c.bf16 %v1797, %v1797
  %v1814 = vpack.c.bf16 %v1798, %v1798
  %v1815 = vpack.c.bf16 %v1799, %v1799
  %v1816 = vpack.c.bf16 %v1800, %v1800
  %v1817 = vpack.c.bf16 %v1801, %v1801
  %v1818 = vpack.c.bf16 %v1802, %v1802
  %v1819 = vpack.c.bf16 %v1803, %v1803
  %v1820 = vpack.c.bf16 %v1804, %v1804
  %v1821 = vpack.c.bf16 %v1805, %v1805
  %v1822 = vpack.c.bf16 %v1806, %v1806
  %v1823 = vpack.c.bf16 %v1807, %v1807
  %v1824 = vpack.c.bf16 %v1808, %v1808
  %v1825 = vpack.c.bf16 %v1809, %v1809
  %v1826 = vpack.c.bf16 %v1810, %v1810
  %v1827 = vpack.c.bf16 %v1811, %v1811
  %v1828 = vpack.c.bf16 %v1812, %v1812
  %v1830 = vshrl.u32 %v1813, 16
  %v1832 = vrot.slane %v1830, 7
  %v1833 = vshll.u32 %v1813, 16
  %v1835 = vor.u32 %v1832, %v1833
  %v1837 = vshrl.u32 %v1814, 16
  %v1839 = vrot.slane %v1837, 7
  %v1840 = vshll.u32 %v1814, 16
  %v1842 = vor.u32 %v1839, %v1840
  %v1844 = vshrl.u32 %v1815, 16
  %v1846 = vrot.slane %v1844, 7
  %v1847 = vshll.u32 %v1815, 16
  %v1849 = vor.u32 %v1846, %v1847
  %v1851 = vshrl.u32 %v1816, 16
  %v1853 = vrot.slane %v1851, 7
  %v1854 = vshll.u32 %v1816, 16
  %v1856 = vor.u32 %v1853, %v1854
  %v1858 = vshrl.u32 %v1817, 16
  %v1860 = vrot.slane %v1858, 7
  %v1861 = vshll.u32 %v1817, 16
  %v1863 = vor.u32 %v1860, %v1861
  %v1865 = vshrl.u32 %v1818, 16
  %v1867 = vrot.slane %v1865, 7
  %v1868 = vshll.u32 %v1818, 16
  %v1870 = vor.u32 %v1867, %v1868
  %v1872 = vshrl.u32 %v1819, 16
  %v1874 = vrot.slane %v1872, 7
  %v1875 = vshll.u32 %v1819, 16
  %v1877 = vor.u32 %v1874, %v1875
  %v1879 = vshrl.u32 %v1820, 16
  %v1881 = vrot.slane %v1879, 7
  %v1882 = vshll.u32 %v1820, 16
  %v1884 = vor.u32 %v1881, %v1882
  %v1886 = vshrl.u32 %v1821, 16
  %v1888 = vrot.slane %v1886, 7
  %v1889 = vshll.u32 %v1821, 16
  %v1891 = vor.u32 %v1888, %v1889
  %v1893 = vshrl.u32 %v1822, 16
  %v1895 = vrot.slane %v1893, 7
  %v1896 = vshll.u32 %v1822, 16
  %v1898 = vor.u32 %v1895, %v1896
  %v1900 = vshrl.u32 %v1823, 16
  %v1902 = vrot.slane %v1900, 7
  %v1903 = vshll.u32 %v1823, 16
  %v1905 = vor.u32 %v1902, %v1903
  %v1907 = vshrl.u32 %v1824, 16
  %v1909 = vrot.slane %v1907, 7
  %v1910 = vshll.u32 %v1824, 16
  %v1912 = vor.u32 %v1909, %v1910
  %v1914 = vshrl.u32 %v1825, 16
  %v1916 = vrot.slane %v1914, 7
  %v1917 = vshll.u32 %v1825, 16
  %v1919 = vor.u32 %v1916, %v1917
  %v1921 = vshrl.u32 %v1826, 16
  %v1923 = vrot.slane %v1921, 7
  %v1924 = vshll.u32 %v1826, 16
  %v1926 = vor.u32 %v1923, %v1924
  %v1928 = vshrl.u32 %v1827, 16
  %v1930 = vrot.slane %v1928, 7
  %v1931 = vshll.u32 %v1827, 16
  %v1933 = vor.u32 %v1930, %v1931
  %v1935 = vshrl.u32 %v1828, 16
  %v1937 = vrot.slane %v1935, 7
  %v1938 = vshll.u32 %v1828, 16
  %v1940 = vor.u32 %v1937, %v1938
  %vm1957 = vcmask 1040384
  %vm1958 = vsmask.f32 256
  %vm1959 = vmand %vm1957, %vm1958
  %v1960 = vsel %vm1959, 0, %v1835
  %v1961 = vsel %vm1959, 0, %v1842
  %v1962 = vsel %vm1959, 0, %v1849
  %v1963 = vsel %vm1959, 0, %v1856
  %v1964 = vsel %vm1959, 0, %v1863
  %v1965 = vsel %vm1959, 0, %v1870
  %v1966 = vsel %vm1959, 0, %v1877
  %v1967 = vsel %vm1959, 0, %v1884
  %v1968 = vsel %vm1959, 0, %v1891
  %v1969 = vsel %vm1959, 0, %v1898
  %v1970 = vsel %vm1959, 0, %v1905
  %v1971 = vsel %vm1959, 0, %v1912
  %v1972 = vsel %vm1959, 0, %v1919
  %v1973 = vsel %vm1959, 0, %v1926
  %v1974 = vsel %vm1959, 0, %v1933
  %v1975 = vsel %vm1959, 0, %v1940
  %vm1976 = vcmask 1044480
  %vm1977 = vsmask.f32 4352
  %vm1978 = vmand %vm1976, %vm1977
  %v1979 = vsel %vm1978, %v1960, 0
  %v1980 = vsel %vm1978, %v1961, 0
  %v1981 = vsel %vm1978, %v1962, 0
  %v1982 = vsel %vm1978, %v1963, 0
  %v1983 = vsel %vm1978, %v1964, 0
  %v1984 = vsel %vm1978, %v1965, 0
  %v1985 = vsel %vm1978, %v1966, 0
  %v1986 = vsel %vm1978, %v1967, 0
  %v1987 = vsel %vm1978, %v1968, 0
  %v1988 = vsel %vm1978, %v1969, 0
  %v1989 = vsel %vm1978, %v1970, 0
  %v1990 = vsel %vm1978, %v1971, 0
  %v1991 = vsel %vm1978, %v1972, 0
  %v1992 = vsel %vm1978, %v1973, 0
  %v1993 = vsel %vm1978, %v1974, 0
  %v1994 = vsel %vm1978, %v1975, 0
  %v1996 = vshrl.u32 0, 16
  %v1998 = vshll.u32 0, 16
  %v2000 = vrot.slane %v1998, 1
  %v2001 = vor.u32 %v1996, %v2000
  %v2003 = vshrl.u32 %v1979, 16
  %v2005 = vshll.u32 %v1979, 16
  %v2007 = vrot.slane %v2005, 1
  %v2008 = vor.u32 %v2003, %v2007
  %v2010 = vshrl.u32 %v1980, 16
  %v2012 = vshll.u32 %v1980, 16
  %v2014 = vrot.slane %v2012, 1
  %v2015 = vor.u32 %v2010, %v2014
  %v2017 = vshrl.u32 %v1981, 16
  %v2019 = vshll.u32 %v1981, 16
  %v2021 = vrot.slane %v2019, 1
  %v2022 = vor.u32 %v2017, %v2021
  %v2024 = vshrl.u32 %v1982, 16
  %v2026 = vshll.u32 %v1982, 16
  %v2028 = vrot.slane %v2026, 1
  %v2029 = vor.u32 %v2024, %v2028
  %v2031 = vshrl.u32 %v1983, 16
  %v2033 = vshll.u32 %v1983, 16
  %v2035 = vrot.slane %v2033, 1
  %v2036 = vor.u32 %v2031, %v2035
  %v2038 = vshrl.u32 %v1984, 16
  %v2040 = vshll.u32 %v1984, 16
  %v2042 = vrot.slane %v2040, 1
  %v2043 = vor.u32 %v2038, %v2042
  %v2045 = vshrl.u32 %v1985, 16
  %v2047 = vshll.u32 %v1985, 16
  %v2049 = vrot.slane %v2047, 1
  %v2050 = vor.u32 %v2045, %v2049
  %v2052 = vshrl.u32 %v1987, 16
  %v2054 = vshll.u32 %v1987, 16
  %v2056 = vrot.slane %v2054, 1
  %v2057 = vor.u32 %v2052, %v2056
  %v2059 = vshrl.u32 %v1988, 16
  %v2061 = vshll.u32 %v1988, 16
  %v2063 = vrot.slane %v2061, 1
  %v2064 = vor.u32 %v2059, %v2063
  %v2066 = vshrl.u32 %v1989, 16
  %v2068 = vshll.u32 %v1989, 16
  %v2070 = vrot.slane %v2068, 1
  %v2071 = vor.u32 %v2066, %v2070
  %v2073 = vshrl.u32 %v1990, 16
  %v2075 = vshll.u32 %v1990, 16
  %v2077 = vrot.slane %v2075, 1
  %v2078 = vor.u32 %v2073, %v2077
  %v2080 = vshrl.u32 %v1991, 16
  %v2082 = vshll.u32 %v1991, 16
  %v2084 = vrot.slane %v2082, 1
  %v2085 = vor.u32 %v2080, %v2084
  %v2087 = vshrl.u32 %v1992, 16
  %v2089 = vshll.u32 %v1992, 16
  %v2091 = vrot.slane %v2089, 1
  %v2092 = vor.u32 %v2087, %v2091
  %v2094 = vshrl.u32 %v1993, 16
  %v2096 = vshll.u32 %v1993, 16
  %v2098 = vrot.slane %v2096, 1
  %v2099 = vor.u32 %v2094, %v2098
  %v2115 = vrot.slane 0, 1
  %v2116 = vrot.slane %v1979, 1
  %v2117 = vrot.slane %v1980, 1
  %v2118 = vrot.slane %v1981, 1
  %v2119 = vrot.slane %v1982, 1
  %v2120 = vrot.slane %v1983, 1
  %v2121 = vrot.slane %v1984, 1
  %v2122 = vrot.slane %v1985, 1
  %v2123 = vrot.slane %v1987, 1
  %v2124 = vrot.slane %v1988, 1
  %v2125 = vrot.slane %v1989, 1
  %v2126 = vrot.slane %v1990, 1
  %v2127 = vrot.slane %v1991, 1
  %v2128 = vrot.slane %v1992, 1
  %v2129 = vrot.slane %v1993, 1
  %v2131 = vshrl.u32 %v1986, 16
  %v2133 = vshll.u32 %v1986, 16
  %v2135 = vrot.slane %v2133, 1
  %v2136 = vor.u32 %v2131, %v2135
  %v2138 = vshrl.u32 %v1994, 16
  %v2140 = vshll.u32 %v1994, 16
  %v2142 = vrot.slane %v2140, 1
  %v2143 = vor.u32 %v2138, %v2142
  %v2146 = vrot.slane %v1986, 1
  %v2147 = vrot.slane %v1994, 1
  %v2148 = vunpack.c.l.b16 0
  %v2149 = vunpack.c.l.b16 %v2001
  %v2150 = vunpack.c.l.b16 %v2115
  %v2151 = vunpack.c.l.b16 %v1979
  %v2152 = vunpack.c.l.b16 %v2008
  %v2153 = vunpack.c.l.b16 %v2116
  %v2154 = vunpack.c.l.b16 %v1980
  %v2155 = vunpack.c.l.b16 %v2015
  %v2156 = vunpack.c.l.b16 %v2117
  %v2157 = vunpack.c.l.b16 %v1981
  %v2158 = vunpack.c.l.b16 %v2022
  %v2159 = vunpack.c.l.b16 %v2118
  %v2160 = vunpack.c.l.b16 %v1982
  %v2161 = vunpack.c.l.b16 %v2029
  %v2162 = vunpack.c.l.b16 %v2119
  %v2163 = vunpack.c.l.b16 %v1983
  %v2164 = vunpack.c.l.b16 %v2036
  %v2165 = vunpack.c.l.b16 %v2120
  %v2166 = vunpack.c.l.b16 %v1984
  %v2167 = vunpack.c.l.b16 %v2043
  %v2168 = vunpack.c.l.b16 %v2121
  %v2169 = vunpack.c.l.b16 %v1985
  %v2170 = vunpack.c.l.b16 %v2050
  %v2171 = vunpack.c.l.b16 %v2122
  %v2172 = vunpack.c.l.b16 %v1986
  %v2173 = vunpack.c.l.b16 %v2136
  %v2174 = vunpack.c.l.b16 %v2146
  %v2175 = vunpack.c.l.b16 %v1987
  %v2176 = vunpack.c.l.b16 %v2057
  %v2177 = vunpack.c.l.b16 %v2123
  %v2178 = vunpack.c.l.b16 %v1988
  %v2179 = vunpack.c.l.b16 %v2064
  %v2180 = vunpack.c.l.b16 %v2124
  %v2181 = vunpack.c.l.b16 %v1989
  %v2182 = vunpack.c.l.b16 %v2071
  %v2183 = vunpack.c.l.b16 %v2125
  %v2184 = vunpack.c.l.b16 %v1990
  %v2185 = vunpack.c.l.b16 %v2078
  %v2186 = vunpack.c.l.b16 %v2126
  %v2187 = vunpack.c.l.b16 %v1991
  %v2188 = vunpack.c.l.b16 %v2085
  %v2189 = vunpack.c.l.b16 %v2127
  %v2190 = vunpack.c.l.b16 %v1992
  %v2191 = vunpack.c.l.b16 %v2092
  %v2192 = vunpack.c.l.b16 %v2128
  %v2193 = vunpack.c.l.b16 %v1993
  %v2194 = vunpack.c.l.b16 %v2099
  %v2195 = vunpack.c.l.b16 %v2129
  %v2196 = vunpack.c.l.b16 %v1994
  %v2197 = vunpack.c.l.b16 %v2143
  %v2198 = vunpack.c.l.b16 %v2147
  %v2199 = vld [vmem:[%s7] sm:$0xf]
  %v2200 = vld [vmem:[%s7 + $0x4] sm:$0xf]
  %v2201 = vld [vmem:[%s7 + $0x8] sm:$0xf]
  %v2202 = vld [vmem:[%s7 + $0xc] sm:$0xf]
  %v2203 = vld [vmem:[%s7 + $0x10] sm:$0xf]
  %v2204 = vld [vmem:[%s7 + $0x14] sm:$0xf]
  %v2205 = vld [vmem:[%s7 + $0x18] sm:$0xf]
  %v2206 = vld [vmem:[%s7 + $0x1c] sm:$0xf]
  %v2207 = vld [vmem:[%s7 + $0x20] sm:$0xf]
  %v2208 = vld [vmem:[%s7 + $0x24] sm:$0xf]
  %v2209 = vld [vmem:[%s7 + $0x28] sm:$0xf]
  %v2210 = vld [vmem:[%s7 + $0x2c] sm:$0xf]
  %v2211 = vld [vmem:[%s7 + $0x30] sm:$0xf]
  %v2212 = vld [vmem:[%s7 + $0x34] sm:$0xf]
  %v2213 = vld [vmem:[%s7 + $0x38] sm:$0xf]
  %v2214 = vld [vmem:[%s7 + $0x3c] sm:$0xf]
  %v2215 = vld [vmem:[%s7 + $0x40] sm:$0xf]
  %v2216 = vld [vmem:[%s7 + $0x44] sm:$0xf]
  %v2217 = vld [vmem:[%s7 + $0x48] sm:$0xf]
  %v2218 = vld [vmem:[%s7 + $0x4c] sm:$0xf]
  %v2219 = vld [vmem:[%s7 + $0x50] sm:$0xf]
  %v2220 = vld [vmem:[%s7 + $0x54] sm:$0xf]
  %v2221 = vld [vmem:[%s7 + $0x58] sm:$0xf]
  %v2222 = vld [vmem:[%s7 + $0x5c] sm:$0xf]
  %v2223 = vld [vmem:[%s7 + $0x60] sm:$0xf]
  %v2224 = vld [vmem:[%s7 + $0x64] sm:$0xf]
  %v2225 = vld [vmem:[%s7 + $0x68] sm:$0xf]
  %v2226 = vld [vmem:[%s7 + $0x6c] sm:$0xf]
  %v2227 = vld [vmem:[%s7 + $0x70] sm:$0xf]
  %v2228 = vld [vmem:[%s7 + $0x74] sm:$0xf]
  %v2229 = vld [vmem:[%s7 + $0x78] sm:$0xf]
  %v2230 = vld [vmem:[%s7 + $0x7c] sm:$0xf]
  %v2231 = vld [vmem:[%s7 + $0x80] sm:$0xf]
  %v2232 = vld [vmem:[%s7 + $0x84] sm:$0xf]
  %v2233 = vld [vmem:[%s7 + $0x88] sm:$0xf]
  %v2234 = vld [vmem:[%s7 + $0x8c] sm:$0xf]
  %v2235 = vld [vmem:[%s7 + $0x90] sm:$0xf]
  %v2236 = vld [vmem:[%s7 + $0x94] sm:$0xf]
  %v2237 = vld [vmem:[%s7 + $0x98] sm:$0xf]
  %v2238 = vld [vmem:[%s7 + $0x9c] sm:$0xf]
  %v2239 = vld [vmem:[%s7 + $0xa0] sm:$0xf]
  %v2240 = vld [vmem:[%s7 + $0xa4] sm:$0xf]
  %v2241 = vld [vmem:[%s7 + $0xa8] sm:$0xf]
  %v2242 = vld [vmem:[%s7 + $0xac] sm:$0xf]
  %v2243 = vld [vmem:[%s7 + $0xb0] sm:$0xf]
  %v2244 = vld [vmem:[%s7 + $0xb4] sm:$0xf]
  %v2245 = vld [vmem:[%s7 + $0xb8] sm:$0xf]
  %v2246 = vld [vmem:[%s7 + $0xbc] sm:$0xf]
  %v2247 = vld [vmem:[%s7 + $0xc0] sm:$0xf]
  %v2248 = vld [vmem:[%s7 + $0xc4] sm:$0xf]
  %v2249 = vld [vmem:[%s7 + $0xc8] sm:$0xf]
  %v2250 = vld [vmem:[%s7 + $0xcc] sm:$0xf]
  %v2251 = vld [vmem:[%s7 + $0xd0] sm:$0xf]
  %v2252 = vld [vmem:[%s7 + $0xd4] sm:$0xf]
  %v2253 = vld [vmem:[%s7 + $0xd8] sm:$0xf]
  %v2254 = vld [vmem:[%s7 + $0xdc] sm:$0xf]
  %v2255 = vld [vmem:[%s7 + $0xe0] sm:$0xf]
  %v2256 = vld [vmem:[%s7 + $0xe4] sm:$0xf]
  %v2257 = vld [vmem:[%s7 + $0xe8] sm:$0xf]
  %v2258 = vld [vmem:[%s7 + $0xec] sm:$0xf]
  %v2259 = vld [vmem:[%s7 + $0xf0] sm:$0xf]
  %v2260 = vld [vmem:[%s7 + $0xf4] sm:$0xf]
  %v2261 = vld [vmem:[%s7 + $0xf8] sm:$0xf]
  %v2262 = vld [vmem:[%s7 + $0xfc] sm:$0xf]
  %v2263 = vld [vmem:[%s7 + $0x100] sm:$0xf]
  %v2264 = vld [vmem:[%s7 + $0x104] sm:$0xf]
  %v2265 = vld [vmem:[%s7 + $0x108] sm:$0xf]
  %v2266 = vld [vmem:[%s7 + $0x10c] sm:$0xf]
  %v2267 = vld [vmem:[%s7 + $0x110] sm:$0xf]
  %v2268 = vld [vmem:[%s7 + $0x114] sm:$0xf]
  %v2269 = vld [vmem:[%s7 + $0x118] sm:$0xf]
  %v2270 = vld [vmem:[%s7 + $0x11c] sm:$0xf]
  %v2271 = vld [vmem:[%s7 + $0x120] sm:$0xf]
  %v2272 = vld [vmem:[%s7 + $0x124] sm:$0xf]
  %v2273 = vld [vmem:[%s7 + $0x128] sm:$0xf]
  %v2274 = vld [vmem:[%s7 + $0x12c] sm:$0xf]
  %v2275 = vld [vmem:[%s7 + $0x130] sm:$0xf]
  %v2276 = vld [vmem:[%s7 + $0x134] sm:$0xf]
  %v2277 = vld [vmem:[%s7 + $0x138] sm:$0xf]
  %v2278 = vld [vmem:[%s7 + $0x13c] sm:$0xf]
  %v2279 = vld [vmem:[%s7 + $0x140] sm:$0xf]
  %v2280 = vld [vmem:[%s7 + $0x144] sm:$0xf]
  %v2281 = vld [vmem:[%s7 + $0x148] sm:$0xf]
  %v2282 = vld [vmem:[%s7 + $0x14c] sm:$0xf]
  %v2283 = vld [vmem:[%s7 + $0x150] sm:$0xf]
  %v2284 = vld [vmem:[%s7 + $0x154] sm:$0xf]
  %v2285 = vld [vmem:[%s7 + $0x158] sm:$0xf]
  %v2286 = vld [vmem:[%s7 + $0x15c] sm:$0xf]
  %v2287 = vld [vmem:[%s7 + $0x160] sm:$0xf]
  %v2288 = vld [vmem:[%s7 + $0x164] sm:$0xf]
  %v2289 = vld [vmem:[%s7 + $0x168] sm:$0xf]
  %v2290 = vld [vmem:[%s7 + $0x16c] sm:$0xf]
  %v2291 = vld [vmem:[%s7 + $0x170] sm:$0xf]
  %v2292 = vld [vmem:[%s7 + $0x174] sm:$0xf]
  %v2293 = vld [vmem:[%s7 + $0x178] sm:$0xf]
  %v2294 = vld [vmem:[%s7 + $0x17c] sm:$0xf]
  %v2295 = vld [vmem:[%s7 + $0x180] sm:$0xf]
  %v2296 = vld [vmem:[%s7 + $0x184] sm:$0xf]
  %v2297 = vld [vmem:[%s7 + $0x188] sm:$0xf]
  %v2298 = vld [vmem:[%s7 + $0x18c] sm:$0xf]
  %v2299 = vld [vmem:[%s7 + $0x190] sm:$0xf]
  %v2300 = vld [vmem:[%s7 + $0x194] sm:$0xf]
  %v2301 = vld [vmem:[%s7 + $0x198] sm:$0xf]
  %v2302 = vld [vmem:[%s7 + $0x19c] sm:$0xf]
  %v2303 = vld [vmem:[%s7 + $0x1a0] sm:$0xf]
  %v2304 = vld [vmem:[%s7 + $0x1a4] sm:$0xf]
  %v2305 = vld [vmem:[%s7 + $0x1a8] sm:$0xf]
  %v2306 = vld [vmem:[%s7 + $0x1ac] sm:$0xf]
  %v2307 = vld [vmem:[%s7 + $0x1b0] sm:$0xf]
  %v2308 = vld [vmem:[%s7 + $0x1b4] sm:$0xf]
  %v2309 = vld [vmem:[%s7 + $0x1b8] sm:$0xf]
  %v2310 = vld [vmem:[%s7 + $0x1bc] sm:$0xf]
  %v2311 = vld [vmem:[%s7 + $0x1c0] sm:$0xf]
  %v2312 = vld [vmem:[%s7 + $0x1c4] sm:$0xf]
  %v2313 = vld [vmem:[%s7 + $0x1c8] sm:$0xf]
  %v2314 = vld [vmem:[%s7 + $0x1cc] sm:$0xf]
  %v2315 = vld [vmem:[%s7 + $0x1d0] sm:$0xf]
  %v2316 = vld [vmem:[%s7 + $0x1d4] sm:$0xf]
  %v2317 = vld [vmem:[%s7 + $0x1d8] sm:$0xf]
  %v2318 = vld [vmem:[%s7 + $0x1dc] sm:$0xf]
  %v2319 = vld [vmem:[%s7 + $0x1e0] sm:$0xf]
  %v2320 = vld [vmem:[%s7 + $0x1e4] sm:$0xf]
  %v2321 = vld [vmem:[%s7 + $0x1e8] sm:$0xf]
  %v2322 = vld [vmem:[%s7 + $0x1ec] sm:$0xf]
  %v2323 = vld [vmem:[%s7 + $0x1f0] sm:$0xf]
  %v2324 = vld [vmem:[%s7 + $0x1f4] sm:$0xf]
  %v2325 = vld [vmem:[%s7 + $0x1f8] sm:$0xf]
  %v2326 = vld [vmem:[%s7 + $0x1fc] sm:$0xf]
  %v2327 = vld [vmem:[%s7 + $0x200] sm:$0xf]
  %v2328 = vld [vmem:[%s7 + $0x204] sm:$0xf]
  %v2329 = vld [vmem:[%s7 + $0x208] sm:$0xf]
  %v2330 = vld [vmem:[%s7 + $0x20c] sm:$0xf]
  %v2331 = vld [vmem:[%s7 + $0x210] sm:$0xf]
  %v2332 = vld [vmem:[%s7 + $0x214] sm:$0xf]
  %v2333 = vld [vmem:[%s7 + $0x218] sm:$0xf]
  %v2334 = vld [vmem:[%s7 + $0x21c] sm:$0xf]
  %v2335 = vld [vmem:[%s7 + $0x220] sm:$0xf]
  %v2336 = vld [vmem:[%s7 + $0x224] sm:$0xf]
  %v2337 = vld [vmem:[%s7 + $0x228] sm:$0xf]
  %v2338 = vld [vmem:[%s7 + $0x22c] sm:$0xf]
  %v2339 = vld [vmem:[%s7 + $0x230] sm:$0xf]
  %v2340 = vld [vmem:[%s7 + $0x234] sm:$0xf]
  %v2341 = vld [vmem:[%s7 + $0x238] sm:$0xf]
  %v2342 = vld [vmem:[%s7 + $0x23c] sm:$0xf]
  %v2343 = vpack.c.b16 %v2151, %v2148
  %v2344 = vpack.c.b16 %v2152, %v2149
  %v2345 = vpack.c.b16 %v2153, %v2150
  %v2346 = vpack.c.b16 %v2154, %v2151
  %v2347 = vpack.c.b16 %v2155, %v2152
  %v2348 = vpack.c.b16 %v2156, %v2153
  %v2349 = vpack.c.b16 %v2157, %v2154
  %v2350 = vpack.c.b16 %v2158, %v2155
  %v2351 = vpack.c.b16 %v2159, %v2156
  %v2352 = vpack.c.b16 %v2160, %v2157
  %v2353 = vpack.c.b16 %v2161, %v2158
  %v2354 = vpack.c.b16 %v2162, %v2159
  %v2355 = vpack.c.b16 %v2163, %v2160
  %v2356 = vpack.c.b16 %v2164, %v2161
  %v2357 = vpack.c.b16 %v2165, %v2162
  %v2358 = vpack.c.b16 %v2166, %v2163
  %v2359 = vpack.c.b16 %v2167, %v2164
  %v2360 = vpack.c.b16 %v2168, %v2165
  %v2361 = vpack.c.b16 %v2169, %v2166
  %v2362 = vpack.c.b16 %v2170, %v2167
  %v2363 = vpack.c.b16 %v2171, %v2168
  %v2364 = vpack.c.b16 %v2172, %v2169
  %v2365 = vpack.c.b16 %v2173, %v2170
  %v2366 = vpack.c.b16 %v2174, %v2171
  %v2367 = vpack.c.b16 %v2148, %v2172
  %v2368 = vpack.c.b16 %v2149, %v2173
  %v2369 = vpack.c.b16 %v2150, %v2174
  %v2370 = vpack.c.b16 %v2175, %v2148
  %v2371 = vpack.c.b16 %v2176, %v2149
  %v2372 = vpack.c.b16 %v2177, %v2150
  %v2373 = vpack.c.b16 %v2178, %v2175
  %v2374 = vpack.c.b16 %v2179, %v2176
  %v2375 = vpack.c.b16 %v2180, %v2177
  %v2376 = vpack.c.b16 %v2181, %v2178
  %v2377 = vpack.c.b16 %v2182, %v2179
  %v2378 = vpack.c.b16 %v2183, %v2180
  %v2379 = vpack.c.b16 %v2184, %v2181
  %v2380 = vpack.c.b16 %v2185, %v2182
  %v2381 = vpack.c.b16 %v2186, %v2183
  %v2382 = vpack.c.b16 %v2187, %v2184
  %v2383 = vpack.c.b16 %v2188, %v2185
  %v2384 = vpack.c.b16 %v2189, %v2186
  %v2385 = vpack.c.b16 %v2190, %v2187
  %v2386 = vpack.c.b16 %v2191, %v2188
  %v2387 = vpack.c.b16 %v2192, %v2189
  %v2388 = vpack.c.b16 %v2193, %v2190
  %v2389 = vpack.c.b16 %v2194, %v2191
  %v2390 = vpack.c.b16 %v2195, %v2192
  %v2391 = vpack.c.b16 %v2196, %v2193
  %v2392 = vpack.c.b16 %v2197, %v2194
  %v2393 = vpack.c.b16 %v2198, %v2195
  %v2394 = vpack.c.b16 %v2148, %v2196
  %v2395 = vpack.c.b16 %v2149, %v2197
  %v2396 = vpack.c.b16 %v2150, %v2198
  %v2595 = vunpack.c.l.b16 %v2199
  %v2596 = vunpack.c.l.b16 %v2200
  %v2597 = vunpack.c.l.b16 %v2201
  %v2598 = vunpack.c.l.b16 %v2202
  %v2599 = vunpack.c.l.b16 %v2203
  %v2600 = vunpack.c.l.b16 %v2204
  %v2601 = vunpack.c.l.b16 %v2205
  %v2602 = vunpack.c.l.b16 %v2206
  %v2603 = vunpack.c.l.b16 %v2207
  %v2604 = vunpack.c.l.b16 %v2208
  %v2605 = vunpack.c.l.b16 %v2209
  %v2606 = vunpack.c.l.b16 %v2210
  %v2607 = vunpack.c.l.b16 %v2211
  %v2608 = vunpack.c.l.b16 %v2212
  %v2609 = vunpack.c.l.b16 %v2213
  %v2610 = vunpack.c.l.b16 %v2214
  %v2611 = vunpack.c.l.b16 %v2215
  %v2612 = vunpack.c.l.b16 %v2216
  %v2613 = vunpack.c.l.b16 %v2217
  %v2614 = vunpack.c.l.b16 %v2218
  %v2615 = vunpack.c.l.b16 %v2219
  %v2616 = vunpack.c.l.b16 %v2220
  %v2617 = vunpack.c.l.b16 %v2221
  %v2618 = vunpack.c.l.b16 %v2222
  %v2619 = vunpack.c.l.b16 %v2223
  %v2620 = vunpack.c.l.b16 %v2224
  %v2621 = vunpack.c.l.b16 %v2225
  %v2622 = vunpack.c.l.b16 %v2226
  %v2623 = vunpack.c.l.b16 %v2227
  %v2624 = vunpack.c.l.b16 %v2228
  %v2625 = vunpack.c.l.b16 %v2229
  %v2626 = vunpack.c.l.b16 %v2230
  %v2627 = vunpack.c.l.b16 %v2231
  %v2628 = vunpack.c.l.b16 %v2232
  %v2629 = vunpack.c.l.b16 %v2233
  %v2630 = vunpack.c.l.b16 %v2234
  %v2631 = vunpack.c.l.b16 %v2235
  %v2632 = vunpack.c.l.b16 %v2236
  %v2633 = vunpack.c.l.b16 %v2237
  %v2634 = vunpack.c.l.b16 %v2238
  %v2635 = vunpack.c.l.b16 %v2239
  %v2636 = vunpack.c.l.b16 %v2240
  %v2637 = vunpack.c.l.b16 %v2241
  %v2638 = vunpack.c.l.b16 %v2242
  %v2639 = vunpack.c.l.b16 %v2243
  %v2640 = vunpack.c.l.b16 %v2244
  %v2641 = vunpack.c.l.b16 %v2245
  %v2642 = vunpack.c.l.b16 %v2246
  %v2643 = vunpack.c.l.b16 %v2247
  %v2644 = vunpack.c.l.b16 %v2248
  %v2645 = vunpack.c.l.b16 %v2249
  %v2646 = vunpack.c.l.b16 %v2250
  %v2647 = vunpack.c.l.b16 %v2251
  %v2648 = vunpack.c.l.b16 %v2252
  %v2649 = vunpack.c.l.b16 %v2253
  %v2650 = vunpack.c.l.b16 %v2254
  %v2651 = vunpack.c.l.b16 %v2255
  %v2652 = vunpack.c.l.b16 %v2256
  %v2653 = vunpack.c.l.b16 %v2257
  %v2654 = vunpack.c.l.b16 %v2258
  %v2655 = vunpack.c.l.b16 %v2259
  %v2656 = vunpack.c.l.b16 %v2260
  %v2657 = vunpack.c.l.b16 %v2261
  %v2658 = vunpack.c.l.b16 %v2262
  %v2659 = vunpack.c.l.b16 %v2263
  %v2660 = vunpack.c.l.b16 %v2264
  %v2661 = vunpack.c.l.b16 %v2265
  %v2662 = vunpack.c.l.b16 %v2266
  %v2663 = vunpack.c.l.b16 %v2267
  %v2664 = vunpack.c.l.b16 %v2268
  %v2665 = vunpack.c.l.b16 %v2269
  %v2666 = vunpack.c.l.b16 %v2270
  %v2667 = vunpack.c.l.b16 %v2271
  %v2668 = vunpack.c.l.b16 %v2272
  %v2669 = vunpack.c.l.b16 %v2273
  %v2670 = vunpack.c.l.b16 %v2274
  %v2671 = vunpack.c.l.b16 %v2275
  %v2672 = vunpack.c.l.b16 %v2276
  %v2673 = vunpack.c.l.b16 %v2277
  %v2674 = vunpack.c.l.b16 %v2278
  %v2675 = vunpack.c.l.b16 %v2279
  %v2676 = vunpack.c.l.b16 %v2280
  %v2677 = vunpack.c.l.b16 %v2281
  %v2678 = vunpack.c.l.b16 %v2282
  %v2679 = vunpack.c.l.b16 %v2283
  %v2680 = vunpack.c.l.b16 %v2284
  %v2681 = vunpack.c.l.b16 %v2285
  %v2682 = vunpack.c.l.b16 %v2286
  %v2683 = vunpack.c.l.b16 %v2287
  %v2684 = vunpack.c.l.b16 %v2288
  %v2685 = vunpack.c.l.b16 %v2289
  %v2686 = vunpack.c.l.b16 %v2290
  %v2687 = vunpack.c.l.b16 %v2291
  %v2688 = vunpack.c.l.b16 %v2292
  %v2689 = vunpack.c.l.b16 %v2293
  %v2690 = vunpack.c.l.b16 %v2294
  %v2691 = vunpack.c.l.b16 %v2295
  %v2692 = vunpack.c.l.b16 %v2296
  %v2693 = vunpack.c.l.b16 %v2297
  %v2694 = vunpack.c.l.b16 %v2298
  %v2695 = vunpack.c.l.b16 %v2299
  %v2696 = vunpack.c.l.b16 %v2300
  %v2697 = vunpack.c.l.b16 %v2301
  %v2698 = vunpack.c.l.b16 %v2302
  %v2699 = vunpack.c.l.b16 %v2303
  %v2700 = vunpack.c.l.b16 %v2304
  %v2701 = vunpack.c.l.b16 %v2305
  %v2702 = vunpack.c.l.b16 %v2306
  %v2703 = vunpack.c.l.b16 %v2307
  %v2704 = vunpack.c.l.b16 %v2308
  %v2705 = vunpack.c.l.b16 %v2309
  %v2706 = vunpack.c.l.b16 %v2310
  %v2707 = vunpack.c.l.b16 %v2311
  %v2708 = vunpack.c.l.b16 %v2312
  %v2709 = vunpack.c.l.b16 %v2313
  %v2710 = vunpack.c.l.b16 %v2314
  %v2711 = vunpack.c.l.b16 %v2315
  %v2712 = vunpack.c.l.b16 %v2316
  %v2713 = vunpack.c.l.b16 %v2317
  %v2714 = vunpack.c.l.b16 %v2318
  %v2715 = vunpack.c.l.b16 %v2319
  %v2716 = vunpack.c.l.b16 %v2320
  %v2717 = vunpack.c.l.b16 %v2321
  %v2718 = vunpack.c.l.b16 %v2322
  %v2719 = vunpack.c.l.b16 %v2323
  %v2720 = vunpack.c.l.b16 %v2324
  %v2721 = vunpack.c.l.b16 %v2325
  %v2722 = vunpack.c.l.b16 %v2326
  %v2723 = vunpack.c.l.b16 %v2327
  %v2724 = vunpack.c.l.b16 %v2328
  %v2725 = vunpack.c.l.b16 %v2329
  %v2726 = vunpack.c.l.b16 %v2330
  %v2727 = vunpack.c.l.b16 %v2331
  %v2728 = vunpack.c.l.b16 %v2332
  %v2729 = vunpack.c.l.b16 %v2333
  %v2730 = vunpack.c.l.b16 %v2334
  %v2731 = vunpack.c.l.b16 %v2335
  %v2732 = vunpack.c.l.b16 %v2336
  %v2733 = vunpack.c.l.b16 %v2337
  %v2734 = vunpack.c.l.b16 %v2338
  %v2735 = vunpack.c.l.b16 %v2339
  %v2736 = vunpack.c.l.b16 %v2340
  %v2737 = vunpack.c.l.b16 %v2341
  %v2738 = vunpack.c.l.b16 %v2342
  %v2739 = vpack.c.b16 %v2596, %v2595
  %v2740 = vpack.c.b16 %v2598, %v2597
  %v2741 = vpack.c.b16 %v2600, %v2599
  %v2742 = vpack.c.b16 %v2602, %v2601
  %v2743 = vpack.c.b16 %v2604, %v2603
  %v2744 = vpack.c.b16 %v2606, %v2605
  %v2745 = vpack.c.b16 %v2608, %v2607
  %v2746 = vpack.c.b16 %v2610, %v2609
  %v2747 = vpack.c.b16 %v2612, %v2611
  %v2748 = vpack.c.b16 %v2614, %v2613
  %v2749 = vpack.c.b16 %v2616, %v2615
  %v2750 = vpack.c.b16 %v2618, %v2617
  %v2751 = vpack.c.b16 %v2620, %v2619
  %v2752 = vpack.c.b16 %v2622, %v2621
  %v2753 = vpack.c.b16 %v2624, %v2623
  %v2754 = vpack.c.b16 %v2626, %v2625
  %v2755 = vpack.c.b16 %v2628, %v2627
  %v2756 = vpack.c.b16 %v2630, %v2629
  %v2757 = vpack.c.b16 %v2632, %v2631
  %v2758 = vpack.c.b16 %v2634, %v2633
  %v2759 = vpack.c.b16 %v2636, %v2635
  %v2760 = vpack.c.b16 %v2638, %v2637
  %v2761 = vpack.c.b16 %v2640, %v2639
  %v2762 = vpack.c.b16 %v2642, %v2641
  %v2763 = vpack.c.b16 %v2644, %v2643
  %v2764 = vpack.c.b16 %v2646, %v2645
  %v2765 = vpack.c.b16 %v2648, %v2647
  %v2766 = vpack.c.b16 %v2650, %v2649
  %v2767 = vpack.c.b16 %v2652, %v2651
  %v2768 = vpack.c.b16 %v2654, %v2653
  %v2769 = vpack.c.b16 %v2656, %v2655
  %v2770 = vpack.c.b16 %v2658, %v2657
  %v2771 = vpack.c.b16 %v2660, %v2659
  %v2772 = vpack.c.b16 %v2662, %v2661
  %v2773 = vpack.c.b16 %v2664, %v2663
  %v2774 = vpack.c.b16 %v2666, %v2665
  %v2775 = vpack.c.b16 %v2668, %v2667
  %v2776 = vpack.c.b16 %v2670, %v2669
  %v2777 = vpack.c.b16 %v2672, %v2671
  %v2778 = vpack.c.b16 %v2674, %v2673
  %v2779 = vpack.c.b16 %v2676, %v2675
  %v2780 = vpack.c.b16 %v2678, %v2677
  %v2781 = vpack.c.b16 %v2680, %v2679
  %v2782 = vpack.c.b16 %v2682, %v2681
  %v2783 = vpack.c.b16 %v2684, %v2683
  %v2784 = vpack.c.b16 %v2686, %v2685
  %v2785 = vpack.c.b16 %v2688, %v2687
  %v2786 = vpack.c.b16 %v2690, %v2689
  %v2787 = vpack.c.b16 %v2692, %v2691
  %v2788 = vpack.c.b16 %v2694, %v2693
  %v2789 = vpack.c.b16 %v2696, %v2695
  %v2790 = vpack.c.b16 %v2698, %v2697
  %v2791 = vpack.c.b16 %v2700, %v2699
  %v2792 = vpack.c.b16 %v2702, %v2701
  %v2793 = vpack.c.b16 %v2704, %v2703
  %v2794 = vpack.c.b16 %v2706, %v2705
  %v2795 = vpack.c.b16 %v2708, %v2707
  %v2796 = vpack.c.b16 %v2710, %v2709
  %v2797 = vpack.c.b16 %v2712, %v2711
  %v2798 = vpack.c.b16 %v2714, %v2713
  %v2799 = vpack.c.b16 %v2716, %v2715
  %v2800 = vpack.c.b16 %v2718, %v2717
  %v2801 = vpack.c.b16 %v2720, %v2719
  %v2802 = vpack.c.b16 %v2722, %v2721
  %v2803 = vpack.c.b16 %v2724, %v2723
  %v2804 = vpack.c.b16 %v2726, %v2725
  %v2805 = vpack.c.b16 %v2728, %v2727
  %v2806 = vpack.c.b16 %v2730, %v2729
  %v2807 = vpack.c.b16 %v2732, %v2731
  %v2808 = vpack.c.b16 %v2734, %v2733
  %v2809 = vpack.c.b16 %v2736, %v2735
  %v2810 = vpack.c.b16 %v2738, %v2737
  %2883 = vmatprep.subr.bf16.mxu0 0
  %2884 = vmatpush1.bf16.msra.mxu0 %v2746
  %2885 = vmatprep.subr.bf16.mxu0 0
  %2886 = vmatpush1.bf16.msra.mxu0 %v2745
  %2887 = vmatprep.subr.bf16.mxu0 0
  %2888 = vmatpush1.bf16.msra.mxu0 %v2744
  %2889 = vmatprep.subr.bf16.mxu0 0
  %2890 = vmatpush1.bf16.msra.mxu0 %v2743
  %2891 = vmatprep.subr.bf16.mxu0 0
  %2892 = vmatpush1.bf16.msra.mxu0 %v2742
  %2893 = vmatprep.subr.bf16.mxu0 0
  %2894 = vmatpush1.bf16.msra.mxu0 %v2741
  %2895 = vmatprep.subr.bf16.mxu0 0
  %2896 = vmatpush1.bf16.msra.mxu0 %v2740
  %2897 = vmatprep.subr.bf16.mxu0 0
  %2898 = vmatpush1.bf16.msra.mxu0 %v2739
  %2899 = vmatprep.subr.bf16.mxu0 0
  %2900 = vmatpush2.bf16.msra.mxu0 %v2754
  %2901 = vmatprep.subr.bf16.mxu0 0
  %2902 = vmatpush2.bf16.msra.mxu0 %v2753
  %2903 = vmatprep.subr.bf16.mxu0 0
  %2904 = vmatpush2.bf16.msra.mxu0 %v2752
  %2905 = vmatprep.subr.bf16.mxu0 0
  %2906 = vmatpush2.bf16.msra.mxu0 %v2751
  %2907 = vmatprep.subr.bf16.mxu0 0
  %2908 = vmatpush2.bf16.msra.mxu0 %v2750
  %2909 = vmatprep.subr.bf16.mxu0 0
  %2910 = vmatpush2.bf16.msra.mxu0 %v2749
  %2911 = vmatprep.subr.bf16.mxu0 0
  %2912 = vmatpush2.bf16.msra.mxu0 %v2748
  %2913 = vmatprep.subr.bf16.mxu0 0
  %2914 = vmatpush2.bf16.msra.mxu0 %v2747
  %2915 = vmatprep.mubr.bf16.mxu0 %v2344
  %2916 = vmatmul.mubr.bf16.gmra.mxu0 %v2343
  %v2917 = vpop.f32.mrf.mxu0
  %v2918 = vadd.f32 0.0, %v2917
  %v2919 = vpop.f32.mrf.mxu0
  %v2920 = vpop.f32.mrf.mxu0
  %v2921 = vadd.f32 0.0, %v2920
  %v2922 = vpop.f32.mrf.mxu0
  %2923 = vmatprep.mubr.bf16.mxu0 %v2350
  %2924 = vmatmul.mubr.bf16.gmra.mxu0 %v2349
  %v2925 = vpop.f32.mrf.mxu0
  %v2926 = vadd.f32 0.0, %v2925
  %v2927 = vpop.f32.mrf.mxu0
  %v2928 = vpop.f32.mrf.mxu0
  %v2929 = vadd.f32 0.0, %v2928
  %v2930 = vpop.f32.mrf.mxu0
  %2931 = vmatprep.mubr.bf16.mxu0 %v2356
  %2932 = vmatmul.mubr.bf16.gmra.mxu0 %v2355
  %v2933 = vpop.f32.mrf.mxu0
  %v2934 = vadd.f32 0.0, %v2933
  %v2935 = vpop.f32.mrf.mxu0
  %v2936 = vpop.f32.mrf.mxu0
  %v2937 = vadd.f32 0.0, %v2936
  %v2938 = vpop.f32.mrf.mxu0
  %2939 = vmatprep.mubr.bf16.mxu0 %v2362
  %2940 = vmatmul.mubr.bf16.gmra.mxu0 %v2361
  %v2941 = vpop.f32.mrf.mxu0
  %v2942 = vadd.f32 0.0, %v2941
  %v2943 = vpop.f32.mrf.mxu0
  %v2944 = vpop.f32.mrf.mxu0
  %v2945 = vadd.f32 0.0, %v2944
  %v2946 = vpop.f32.mrf.mxu0
  %2947 = vmatprep.mubr.bf16.mxu0 %v2371
  %2948 = vmatmul.mubr.bf16.gmra.mxu0 %v2370
  %v2949 = vpop.f32.mrf.mxu0
  %v2950 = vadd.f32 0.0, %v2949
  %v2951 = vpop.f32.mrf.mxu0
  %v2952 = vpop.f32.mrf.mxu0
  %v2953 = vadd.f32 0.0, %v2952
  %v2954 = vpop.f32.mrf.mxu0
  %2955 = vmatprep.mubr.bf16.mxu0 %v2377
  %2956 = vmatmul.mubr.bf16.gmra.mxu0 %v2376
  %v2957 = vpop.f32.mrf.mxu0
  %v2958 = vadd.f32 0.0, %v2957
  %v2959 = vpop.f32.mrf.mxu0
  %v2960 = vpop.f32.mrf.mxu0
  %v2961 = vadd.f32 0.0, %v2960
  %v2962 = vpop.f32.mrf.mxu0
  %2963 = vmatprep.mubr.bf16.mxu0 %v2383
  %2964 = vmatmul.mubr.bf16.gmra.mxu0 %v2382
  %v2965 = vpop.f32.mrf.mxu0
  %v2966 = vadd.f32 0.0, %v2965
  %v2967 = vpop.f32.mrf.mxu0
  %v2968 = vpop.f32.mrf.mxu0
  %v2969 = vadd.f32 0.0, %v2968
  %v2970 = vpop.f32.mrf.mxu0
  %2971 = vmatprep.mubr.bf16.mxu0 %v2389
  %2972 = vmatmul.mubr.bf16.gmra.mxu0 %v2388
  %v2973 = vpop.f32.mrf.mxu0
  %v2974 = vadd.f32 0.0, %v2973
  %v2975 = vpop.f32.mrf.mxu0
  %v2976 = vpop.f32.mrf.mxu0
  %v2977 = vadd.f32 0.0, %v2976
  %v2978 = vpop.f32.mrf.mxu0
  %2979 = vdwg.mxu0
  %2980 = vmatprep.subr.bf16.mxu0 0
  %2981 = vmatpush1.bf16.msra.mxu0 %v2762
  %2982 = vmatprep.subr.bf16.mxu0 0
  %2983 = vmatpush1.bf16.msra.mxu0 %v2761
  %2984 = vmatprep.subr.bf16.mxu0 0
  %2985 = vmatpush1.bf16.msra.mxu0 %v2760
  %2986 = vmatprep.subr.bf16.mxu0 0
  %2987 = vmatpush1.bf16.msra.mxu0 %v2759
  %2988 = vmatprep.subr.bf16.mxu0 0
  %2989 = vmatpush1.bf16.msra.mxu0 %v2758
  %2990 = vmatprep.subr.bf16.mxu0 0
  %2991 = vmatpush1.bf16.msra.mxu0 %v2757
  %2992 = vmatprep.subr.bf16.mxu0 0
  %2993 = vmatpush1.bf16.msra.mxu0 %v2756
  %2994 = vmatprep.subr.bf16.mxu0 0
  %2995 = vmatpush1.bf16.msra.mxu0 %v2755
  %2996 = vmatprep.subr.bf16.mxu0 0
  %2997 = vmatpush2.bf16.msra.mxu0 %v2770
  %2998 = vmatprep.subr.bf16.mxu0 0
  %2999 = vmatpush2.bf16.msra.mxu0 %v2769
  %3000 = vmatprep.subr.bf16.mxu0 0
  %3001 = vmatpush2.bf16.msra.mxu0 %v2768
  %3002 = vmatprep.subr.bf16.mxu0 0
  %3003 = vmatpush2.bf16.msra.mxu0 %v2767
  %3004 = vmatprep.subr.bf16.mxu0 0
  %3005 = vmatpush2.bf16.msra.mxu0 %v2766
  %3006 = vmatprep.subr.bf16.mxu0 0
  %3007 = vmatpush2.bf16.msra.mxu0 %v2765
  %3008 = vmatprep.subr.bf16.mxu0 0
  %3009 = vmatpush2.bf16.msra.mxu0 %v2764
  %3010 = vmatprep.subr.bf16.mxu0 0
  %3011 = vmatpush2.bf16.msra.mxu0 %v2763
  %3012 = vmatprep.mubr.bf16.mxu0 %v2346
  %3013 = vmatmul.mubr.bf16.gmra.mxu0 %v2345
  %v3014 = vpop.f32.mrf.mxu0
  %v3015 = vadd.f32 %v2918, %v3014
  %v3016 = vpop.f32.mrf.mxu0
  %v3017 = vpop.f32.mrf.mxu0
  %v3018 = vadd.f32 %v2921, %v3017
  %v3019 = vpop.f32.mrf.mxu0
  %3020 = vmatprep.mubr.bf16.mxu0 %v2352
  %3021 = vmatmul.mubr.bf16.gmra.mxu0 %v2351
  %v3022 = vpop.f32.mrf.mxu0
  %v3023 = vadd.f32 %v2926, %v3022
  %v3024 = vpop.f32.mrf.mxu0
  %v3025 = vpop.f32.mrf.mxu0
  %v3026 = vadd.f32 %v2929, %v3025
  %v3027 = vpop.f32.mrf.mxu0
  %3028 = vmatprep.mubr.bf16.mxu0 %v2358
  %3029 = vmatmul.mubr.bf16.gmra.mxu0 %v2357
  %v3030 = vpop.f32.mrf.mxu0
  %v3031 = vadd.f32 %v2934, %v3030
  %v3032 = vpop.f32.mrf.mxu0
  %v3033 = vpop.f32.mrf.mxu0
  %v3034 = vadd.f32 %v2937, %v3033
  %v3035 = vpop.f32.mrf.mxu0
  %3036 = vmatprep.mubr.bf16.mxu0 %v2364
  %3037 = vmatmul.mubr.bf16.gmra.mxu0 %v2363
  %v3038 = vpop.f32.mrf.mxu0
  %v3039 = vadd.f32 %v2942, %v3038
  %v3040 = vpop.f32.mrf.mxu0
  %v3041 = vpop.f32.mrf.mxu0
  %v3042 = vadd.f32 %v2945, %v3041
  %v3043 = vpop.f32.mrf.mxu0
  %3044 = vmatprep.mubr.bf16.mxu0 %v2373
  %3045 = vmatmul.mubr.bf16.gmra.mxu0 %v2372
  %v3046 = vpop.f32.mrf.mxu0
  %v3047 = vadd.f32 %v2950, %v3046
  %v3048 = vpop.f32.mrf.mxu0
  %v3049 = vpop.f32.mrf.mxu0
  %v3050 = vadd.f32 %v2953, %v3049
  %v3051 = vpop.f32.mrf.mxu0
  %3052 = vmatprep.mubr.bf16.mxu0 %v2379
  %3053 = vmatmul.mubr.bf16.gmra.mxu0 %v2378
  %v3054 = vpop.f32.mrf.mxu0
  %v3055 = vadd.f32 %v2958, %v3054
  %v3056 = vpop.f32.mrf.mxu0
  %v3057 = vpop.f32.mrf.mxu0
  %v3058 = vadd.f32 %v2961, %v3057
  %v3059 = vpop.f32.mrf.mxu0
  %3060 = vmatprep.mubr.bf16.mxu0 %v2385
  %3061 = vmatmul.mubr.bf16.gmra.mxu0 %v2384
  %v3062 = vpop.f32.mrf.mxu0
  %v3063 = vadd.f32 %v2966, %v3062
  %v3064 = vpop.f32.mrf.mxu0
  %v3065 = vpop.f32.mrf.mxu0
  %v3066 = vadd.f32 %v2969, %v3065
  %v3067 = vpop.f32.mrf.mxu0
  %3068 = vmatprep.mubr.bf16.mxu0 %v2391
  %3069 = vmatmul.mubr.bf16.gmra.mxu0 %v2390
  %v3070 = vpop.f32.mrf.mxu0
  %v3071 = vadd.f32 %v2974, %v3070
  %v3072 = vpop.f32.mrf.mxu0
  %v3073 = vpop.f32.mrf.mxu0
  %v3074 = vadd.f32 %v2977, %v3073
  %v3075 = vpop.f32.mrf.mxu0
  %3076 = vdwg.mxu0
  %3077 = vmatprep.subr.bf16.mxu0 0
  %3078 = vmatpush1.bf16.msra.mxu0 %v2778
  %3079 = vmatprep.subr.bf16.mxu0 0
  %3080 = vmatpush1.bf16.msra.mxu0 %v2777
  %3081 = vmatprep.subr.bf16.mxu0 0
  %3082 = vmatpush1.bf16.msra.mxu0 %v2776
  %3083 = vmatprep.subr.bf16.mxu0 0
  %3084 = vmatpush1.bf16.msra.mxu0 %v2775
  %3085 = vmatprep.subr.bf16.mxu0 0
  %3086 = vmatpush1.bf16.msra.mxu0 %v2774
  %3087 = vmatprep.subr.bf16.mxu0 0
  %3088 = vmatpush1.bf16.msra.mxu0 %v2773
  %3089 = vmatprep.subr.bf16.mxu0 0
  %3090 = vmatpush1.bf16.msra.mxu0 %v2772
  %3091 = vmatprep.subr.bf16.mxu0 0
  %3092 = vmatpush1.bf16.msra.mxu0 %v2771
  %3093 = vmatprep.subr.bf16.mxu0 0
  %3094 = vmatpush2.bf16.msra.mxu0 %v2786
  %3095 = vmatprep.subr.bf16.mxu0 0
  %3096 = vmatpush2.bf16.msra.mxu0 %v2785
  %3097 = vmatprep.subr.bf16.mxu0 0
  %3098 = vmatpush2.bf16.msra.mxu0 %v2784
  %3099 = vmatprep.subr.bf16.mxu0 0
  %3100 = vmatpush2.bf16.msra.mxu0 %v2783
  %3101 = vmatprep.subr.bf16.mxu0 0
  %3102 = vmatpush2.bf16.msra.mxu0 %v2782
  %3103 = vmatprep.subr.bf16.mxu0 0
  %3104 = vmatpush2.bf16.msra.mxu0 %v2781
  %3105 = vmatprep.subr.bf16.mxu0 0
  %3106 = vmatpush2.bf16.msra.mxu0 %v2780
  %3107 = vmatprep.subr.bf16.mxu0 0
  %3108 = vmatpush2.bf16.msra.mxu0 %v2779
  %3109 = vmatprep.mubr.bf16.mxu0 %v2348
  %3110 = vmatmul.mubr.bf16.gmra.mxu0 %v2347
  %v3111 = vpop.f32.mrf.mxu0
  %v3112 = vadd.f32 %v3015, %v3111
  %v3113 = vpop.f32.mrf.mxu0
  %v3114 = vpop.f32.mrf.mxu0
  %v3115 = vadd.f32 %v3018, %v3114
  %v3116 = vpop.f32.mrf.mxu0
  %3117 = vmatprep.mubr.bf16.mxu0 %v2354
  %3118 = vmatmul.mubr.bf16.gmra.mxu0 %v2353
  %v3119 = vpop.f32.mrf.mxu0
  %v3120 = vadd.f32 %v3023, %v3119
  %v3121 = vpop.f32.mrf.mxu0
  %v3122 = vpop.f32.mrf.mxu0
  %v3123 = vadd.f32 %v3026, %v3122
  %v3124 = vpop.f32.mrf.mxu0
  %3125 = vmatprep.mubr.bf16.mxu0 %v2360
  %3126 = vmatmul.mubr.bf16.gmra.mxu0 %v2359
  %v3127 = vpop.f32.mrf.mxu0
  %v3128 = vadd.f32 %v3031, %v3127
  %v3129 = vpop.f32.mrf.mxu0
  %v3130 = vpop.f32.mrf.mxu0
  %v3131 = vadd.f32 %v3034, %v3130
  %v3132 = vpop.f32.mrf.mxu0
  %3133 = vmatprep.mubr.bf16.mxu0 %v2366
  %3134 = vmatmul.mubr.bf16.gmra.mxu0 %v2365
  %v3135 = vpop.f32.mrf.mxu0
  %v3136 = vadd.f32 %v3039, %v3135
  %v3137 = vpop.f32.mrf.mxu0
  %v3138 = vpop.f32.mrf.mxu0
  %v3139 = vadd.f32 %v3042, %v3138
  %v3140 = vpop.f32.mrf.mxu0
  %3141 = vmatprep.mubr.bf16.mxu0 %v2375
  %3142 = vmatmul.mubr.bf16.gmra.mxu0 %v2374
  %v3143 = vpop.f32.mrf.mxu0
  %v3144 = vadd.f32 %v3047, %v3143
  %v3145 = vpop.f32.mrf.mxu0
  %v3146 = vpop.f32.mrf.mxu0
  %v3147 = vadd.f32 %v3050, %v3146
  %v3148 = vpop.f32.mrf.mxu0
  %3149 = vmatprep.mubr.bf16.mxu0 %v2381
  %3150 = vmatmul.mubr.bf16.gmra.mxu0 %v2380
  %v3151 = vpop.f32.mrf.mxu0
  %v3152 = vadd.f32 %v3055, %v3151
  %v3153 = vpop.f32.mrf.mxu0
  %v3154 = vpop.f32.mrf.mxu0
  %v3155 = vadd.f32 %v3058, %v3154
  %v3156 = vpop.f32.mrf.mxu0
  %3157 = vmatprep.mubr.bf16.mxu0 %v2387
  %3158 = vmatmul.mubr.bf16.gmra.mxu0 %v2386
  %v3159 = vpop.f32.mrf.mxu0
  %v3160 = vadd.f32 %v3063, %v3159
  %v3161 = vpop.f32.mrf.mxu0
  %v3162 = vpop.f32.mrf.mxu0
  %v3163 = vadd.f32 %v3066, %v3162
  %v3164 = vpop.f32.mrf.mxu0
  %3165 = vmatprep.mubr.bf16.mxu0 %v2393
  %3166 = vmatmul.mubr.bf16.gmra.mxu0 %v2392
  %v3167 = vpop.f32.mrf.mxu0
  %v3168 = vadd.f32 %v3071, %v3167
  %v3169 = vpop.f32.mrf.mxu0
  %v3170 = vpop.f32.mrf.mxu0
  %v3171 = vadd.f32 %v3074, %v3170
  %v3172 = vpop.f32.mrf.mxu0
  %3173 = vdwg.mxu0
  %3174 = vmatprep.subr.bf16.mxu0 0
  %3175 = vmatpush1.bf16.msra.mxu0 %v2794
  %3176 = vmatprep.subr.bf16.mxu0 0
  %3177 = vmatpush1.bf16.msra.mxu0 %v2793
  %3178 = vmatprep.subr.bf16.mxu0 0
  %3179 = vmatpush1.bf16.msra.mxu0 %v2792
  %3180 = vmatprep.subr.bf16.mxu0 0
  %3181 = vmatpush1.bf16.msra.mxu0 %v2791
  %3182 = vmatprep.subr.bf16.mxu0 0
  %3183 = vmatpush1.bf16.msra.mxu0 %v2790
  %3184 = vmatprep.subr.bf16.mxu0 0
  %3185 = vmatpush1.bf16.msra.mxu0 %v2789
  %3186 = vmatprep.subr.bf16.mxu0 0
  %3187 = vmatpush1.bf16.msra.mxu0 %v2788
  %3188 = vmatprep.subr.bf16.mxu0 0
  %3189 = vmatpush1.bf16.msra.mxu0 %v2787
  %3190 = vmatprep.subr.bf16.mxu0 0
  %3191 = vmatpush2.bf16.msra.mxu0 %v2802
  %3192 = vmatprep.subr.bf16.mxu0 0
  %3193 = vmatpush2.bf16.msra.mxu0 %v2801
  %3194 = vmatprep.subr.bf16.mxu0 0
  %3195 = vmatpush2.bf16.msra.mxu0 %v2800
  %3196 = vmatprep.subr.bf16.mxu0 0
  %3197 = vmatpush2.bf16.msra.mxu0 %v2799
  %3198 = vmatprep.subr.bf16.mxu0 0
  %3199 = vmatpush2.bf16.msra.mxu0 %v2798
  %3200 = vmatprep.subr.bf16.mxu0 0
  %3201 = vmatpush2.bf16.msra.mxu0 %v2797
  %3202 = vmatprep.subr.bf16.mxu0 0
  %3203 = vmatpush2.bf16.msra.mxu0 %v2796
  %3204 = vmatprep.subr.bf16.mxu0 0
  %3205 = vmatpush2.bf16.msra.mxu0 %v2795
  %3206 = vmatprep.mubr.bf16.mxu0 %v2350
  %3207 = vmatmul.mubr.bf16.gmra.mxu0 %v2349
  %v3208 = vpop.f32.mrf.mxu0
  %v3209 = vadd.f32 %v3112, %v3208
  %v3210 = vpop.f32.mrf.mxu0
  %v3211 = vpop.f32.mrf.mxu0
  %v3212 = vadd.f32 %v3115, %v3211
  %v3213 = vpop.f32.mrf.mxu0
  %3214 = vmatprep.mubr.bf16.mxu0 %v2356
  %3215 = vmatmul.mubr.bf16.gmra.mxu0 %v2355
  %v3216 = vpop.f32.mrf.mxu0
  %v3217 = vadd.f32 %v3120, %v3216
  %v3218 = vpop.f32.mrf.mxu0
  %v3219 = vpop.f32.mrf.mxu0
  %v3220 = vadd.f32 %v3123, %v3219
  %v3221 = vpop.f32.mrf.mxu0
  %3222 = vmatprep.mubr.bf16.mxu0 %v2362
  %3223 = vmatmul.mubr.bf16.gmra.mxu0 %v2361
  %v3224 = vpop.f32.mrf.mxu0
  %v3225 = vadd.f32 %v3128, %v3224
  %v3226 = vpop.f32.mrf.mxu0
  %v3227 = vpop.f32.mrf.mxu0
  %v3228 = vadd.f32 %v3131, %v3227
  %v3229 = vpop.f32.mrf.mxu0
  %3230 = vmatprep.mubr.bf16.mxu0 %v2368
  %3231 = vmatmul.mubr.bf16.gmra.mxu0 %v2367
  %v3232 = vpop.f32.mrf.mxu0
  %v3233 = vadd.f32 %v3136, %v3232
  %v3234 = vpop.f32.mrf.mxu0
  %v3235 = vpop.f32.mrf.mxu0
  %v3236 = vadd.f32 %v3139, %v3235
  %v3237 = vpop.f32.mrf.mxu0
  %3238 = vmatprep.mubr.bf16.mxu0 %v2377
  %3239 = vmatmul.mubr.bf16.gmra.mxu0 %v2376
  %v3240 = vpop.f32.mrf.mxu0
  %v3241 = vadd.f32 %v3144, %v3240
  %v3242 = vpop.f32.mrf.mxu0
  %v3243 = vpop.f32.mrf.mxu0
  %v3244 = vadd.f32 %v3147, %v3243
  %v3245 = vpop.f32.mrf.mxu0
  %3246 = vmatprep.mubr.bf16.mxu0 %v2383
  %3247 = vmatmul.mubr.bf16.gmra.mxu0 %v2382
  %v3248 = vpop.f32.mrf.mxu0
  %v3249 = vadd.f32 %v3152, %v3248
  %v3250 = vpop.f32.mrf.mxu0
  %v3251 = vpop.f32.mrf.mxu0
  %v3252 = vadd.f32 %v3155, %v3251
  %v3253 = vpop.f32.mrf.mxu0
  %3254 = vmatprep.mubr.bf16.mxu0 %v2389
  %3255 = vmatmul.mubr.bf16.gmra.mxu0 %v2388
  %v3256 = vpop.f32.mrf.mxu0
  %v3257 = vadd.f32 %v3160, %v3256
  %v3258 = vpop.f32.mrf.mxu0
  %v3259 = vpop.f32.mrf.mxu0
  %v3260 = vadd.f32 %v3163, %v3259
  %v3261 = vpop.f32.mrf.mxu0
  %3262 = vmatprep.mubr.bf16.mxu0 %v2395
  %3263 = vmatmul.mubr.bf16.gmra.mxu0 %v2394
  %v3264 = vpop.f32.mrf.mxu0
  %v3265 = vadd.f32 %v3168, %v3264
  %v3266 = vpop.f32.mrf.mxu0
  %v3267 = vpop.f32.mrf.mxu0
  %v3268 = vadd.f32 %v3171, %v3267
  %v3269 = vpop.f32.mrf.mxu0
  %3270 = vdwg.mxu0
  %3271 = vmatprep.subr.bf16.mxu0 0
  %3272 = vmatpush1.bf16.msra.mxu0 %v2810
  %3273 = vmatprep.subr.bf16.mxu0 0
  %3274 = vmatpush1.bf16.msra.mxu0 %v2809
  %3275 = vmatprep.subr.bf16.mxu0 0
  %3276 = vmatpush1.bf16.msra.mxu0 %v2808
  %3277 = vmatprep.subr.bf16.mxu0 0
  %3278 = vmatpush1.bf16.msra.mxu0 %v2807
  %3279 = vmatprep.subr.bf16.mxu0 0
  %3280 = vmatpush1.bf16.msra.mxu0 %v2806
  %3281 = vmatprep.subr.bf16.mxu0 0
  %3282 = vmatpush1.bf16.msra.mxu0 %v2805
  %3283 = vmatprep.subr.bf16.mxu0 0
  %3284 = vmatpush1.bf16.msra.mxu0 %v2804
  %3285 = vmatprep.subr.bf16.mxu0 0
  %3286 = vmatpush1.bf16.msra.mxu0 %v2803
  %3287 = vmatprep.subr.bf16.mxu0 0
  %3288 = vmatpush2.bf16.msra.mxu0 0
  %3289 = vmatprep.subr.bf16.mxu0 0
  %3290 = vmatpush2.bf16.msra.mxu0 0
  %3291 = vmatprep.subr.bf16.mxu0 0
  %3292 = vmatpush2.bf16.msra.mxu0 0
  %3293 = vmatprep.subr.bf16.mxu0 0
  %3294 = vmatpush2.bf16.msra.mxu0 0
  %3295 = vmatprep.subr.bf16.mxu0 0
  %3296 = vmatpush2.bf16.msra.mxu0 0
  %3297 = vmatprep.subr.bf16.mxu0 0
  %3298 = vmatpush2.bf16.msra.mxu0 0
  %3299 = vmatprep.subr.bf16.mxu0 0
  %3300 = vmatpush2.bf16.msra.mxu0 0
  %3301 = vmatprep.subr.bf16.mxu0 0
  %3302 = vmatpush2.bf16.msra.mxu0 0
  %3303 = vmatprep.mubr.bf16.mxu0 0
  %3304 = vmatmul.mubr.bf16.gmra.mxu0 %v2351
  %v3305 = vpop.f32.mrf.mxu0
  %v3306 = vadd.f32 %v3209, %v3305
  %v3307 = vpop.f32.mrf.mxu0
  %v3308 = vpop.f32.mrf.mxu0
  %v3309 = vadd.f32 %v3212, %v3308
  %v3310 = vpop.f32.mrf.mxu0
  %3311 = vmatprep.mubr.bf16.mxu0 0
  %3312 = vmatmul.mubr.bf16.gmra.mxu0 %v2357
  %v3313 = vpop.f32.mrf.mxu0
  %v3314 = vadd.f32 %v3217, %v3313
  %v3315 = vpop.f32.mrf.mxu0
  %v3316 = vpop.f32.mrf.mxu0
  %v3317 = vadd.f32 %v3220, %v3316
  %v3318 = vpop.f32.mrf.mxu0
  %3319 = vmatprep.mubr.bf16.mxu0 0
  %3320 = vmatmul.mubr.bf16.gmra.mxu0 %v2363
  %v3321 = vpop.f32.mrf.mxu0
  %v3322 = vadd.f32 %v3225, %v3321
  %v3323 = vpop.f32.mrf.mxu0
  %v3324 = vpop.f32.mrf.mxu0
  %v3325 = vadd.f32 %v3228, %v3324
  %v3326 = vpop.f32.mrf.mxu0
  %3327 = vmatprep.mubr.bf16.mxu0 0
  %3328 = vmatmul.mubr.bf16.gmra.mxu0 %v2369
  %v3329 = vpop.f32.mrf.mxu0
  %v3330 = vadd.f32 %v3233, %v3329
  %v3331 = vpop.f32.mrf.mxu0
  %v3332 = vpop.f32.mrf.mxu0
  %v3333 = vadd.f32 %v3236, %v3332
  %v3334 = vpop.f32.mrf.mxu0
  %3335 = vmatprep.mubr.bf16.mxu0 0
  %3336 = vmatmul.mubr.bf16.gmra.mxu0 %v2378
  %v3337 = vpop.f32.mrf.mxu0
  %v3338 = vadd.f32 %v3241, %v3337
  %v3339 = vpop.f32.mrf.mxu0
  %v3340 = vpop.f32.mrf.mxu0
  %v3341 = vadd.f32 %v3244, %v3340
  %v3342 = vpop.f32.mrf.mxu0
  %3343 = vmatprep.mubr.bf16.mxu0 0
  %3344 = vmatmul.mubr.bf16.gmra.mxu0 %v2384
  %v3345 = vpop.f32.mrf.mxu0
  %v3346 = vadd.f32 %v3249, %v3345
  %v3347 = vpop.f32.mrf.mxu0
  %v3348 = vpop.f32.mrf.mxu0
  %v3349 = vadd.f32 %v3252, %v3348
  %v3350 = vpop.f32.mrf.mxu0
  %3351 = vmatprep.mubr.bf16.mxu0 0
  %3352 = vmatmul.mubr.bf16.gmra.mxu0 %v2390
  %v3353 = vpop.f32.mrf.mxu0
  %v3354 = vadd.f32 %v3257, %v3353
  %v3355 = vpop.f32.mrf.mxu0
  %v3356 = vpop.f32.mrf.mxu0
  %v3357 = vadd.f32 %v3260, %v3356
  %v3358 = vpop.f32.mrf.mxu0
  %3359 = vmatprep.mubr.bf16.mxu0 0
  %3360 = vmatmul.mubr.bf16.gmra.mxu0 %v2396
  %v3361 = vpop.f32.mrf.mxu0
  %v3362 = vadd.f32 %v3265, %v3361
  %v3363 = vpop.f32.mrf.mxu0
  %v3364 = vpop.f32.mrf.mxu0
  %v3365 = vadd.f32 %v3268, %v3364
  %v3366 = vpop.f32.mrf.mxu0
  %3367 = vdwg.mxu0
  %v3368 = vld [vmem:[%s8] sm:$0x1]
  %v3369 = vld [vmem:[%s9] sm:$0x1]
  %v3370 = vadd.f32 %v3306, %v3309
  %v3371 = vadd.f32 %v3370, %v3314
  %v3372 = vadd.f32 %v3371, %v3317
  %v3373 = vadd.f32 %v3372, %v3322
  %v3374 = vadd.f32 %v3373, %v3325
  %v3375 = vadd.f32 %v3374, %v3330
  %v3376 = vadd.f32 %v3375, %v3333
  %v3377 = vadd.f32 %v3376, %v3338
  %v3378 = vadd.f32 %v3377, %v3341
  %v3379 = vadd.f32 %v3378, %v3346
  %v3380 = vadd.f32 %v3379, %v3349
  %v3381 = vadd.f32 %v3380, %v3354
  %v3382 = vadd.f32 %v3381, %v3357
  %v3383 = vadd.f32 %v3382, %v3362
  %v3384 = vadd.f32 %v3383, %v3365
  %v3385 = vrot.slane %v3384, 4
  %v3386 = vadd.f32 %v3384, %v3385
  %v3387 = vrot.slane %v3386, 2
  %v3388 = vadd.f32 %v3386, %v3387
  %v3389 = vrot.slane %v3388, 1
  %v3390 = vadd.f32 %v3388, %v3389
  %v3391 = vmul.f32 %v3390, %v1693
  %v3392 = vsub.f32 %v3306, %v3391
  %v3393 = vsub.f32 %v3309, %v3391
  %v3394 = vsub.f32 %v3314, %v3391
  %v3395 = vsub.f32 %v3317, %v3391
  %v3396 = vsub.f32 %v3322, %v3391
  %v3397 = vsub.f32 %v3325, %v3391
  %v3398 = vsub.f32 %v3330, %v3391
  %v3399 = vsub.f32 %v3333, %v3391
  %v3400 = vsub.f32 %v3338, %v3391
  %v3401 = vsub.f32 %v3341, %v3391
  %v3402 = vsub.f32 %v3346, %v3391
  %v3403 = vsub.f32 %v3349, %v3391
  %v3404 = vsub.f32 %v3354, %v3391
  %v3405 = vsub.f32 %v3357, %v3391
  %v3406 = vsub.f32 %v3362, %v3391
  %v3407 = vsub.f32 %v3365, %v3391
  %v3408 = vmul.f32 %v3392, %v3392
  %v3409 = vmul.f32 %v3393, %v3393
  %v3410 = vmul.f32 %v3394, %v3394
  %v3411 = vmul.f32 %v3395, %v3395
  %v3412 = vmul.f32 %v3396, %v3396
  %v3413 = vmul.f32 %v3397, %v3397
  %v3414 = vmul.f32 %v3398, %v3398
  %v3415 = vmul.f32 %v3399, %v3399
  %v3416 = vmul.f32 %v3400, %v3400
  %v3417 = vmul.f32 %v3401, %v3401
  %v3418 = vmul.f32 %v3402, %v3402
  %v3419 = vmul.f32 %v3403, %v3403
  %v3420 = vmul.f32 %v3404, %v3404
  %v3421 = vmul.f32 %v3405, %v3405
  %v3422 = vmul.f32 %v3406, %v3406
  %v3423 = vmul.f32 %v3407, %v3407
  %v3424 = vadd.f32 %v3408, %v3409
  %v3425 = vadd.f32 %v3424, %v3410
  %v3426 = vadd.f32 %v3425, %v3411
  %v3427 = vadd.f32 %v3426, %v3412
  %v3428 = vadd.f32 %v3427, %v3413
  %v3429 = vadd.f32 %v3428, %v3414
  %v3430 = vadd.f32 %v3429, %v3415
  %v3431 = vadd.f32 %v3430, %v3416
  %v3432 = vadd.f32 %v3431, %v3417
  %v3433 = vadd.f32 %v3432, %v3418
  %v3434 = vadd.f32 %v3433, %v3419
  %v3435 = vadd.f32 %v3434, %v3420
  %v3436 = vadd.f32 %v3435, %v3421
  %v3437 = vadd.f32 %v3436, %v3422
  %v3438 = vadd.f32 %v3437, %v3423
  %v3439 = vrot.slane %v3438, 4
  %v3440 = vadd.f32 %v3438, %v3439
  %v3441 = vrot.slane %v3440, 2
  %v3442 = vadd.f32 %v3440, %v3441
  %v3443 = vrot.slane %v3442, 1
  %v3444 = vadd.f32 %v3442, %v3443
  %v3445 = vmul.f32 %v3444, %v1693
  %v3446 = vmax.f32 %v3445, 0.0
  %v3447 = vadd.f32 %v3446, 1e-05
  %v3448 = vrsqrt.pop %v3447
  %v3449 = vmul.f32 %v3368, %v3448
  %v3451 = vlaneseq
  %v3452 = vshrl.u32 %v3451, 7
  %v3453 = vsub.s32 0, %v3452
  %v3454 = vrot.slane %v3449, %v3453
  %v3456 = vmul.f32 %v3392, %v3454
  %v3457 = vmul.f32 %v3393, %v3454
  %v3458 = vmul.f32 %v3394, %v3454
  %v3459 = vmul.f32 %v3395, %v3454
  %v3460 = vmul.f32 %v3396, %v3454
  %v3461 = vmul.f32 %v3397, %v3454
  %v3462 = vmul.f32 %v3398, %v3454
  %v3463 = vmul.f32 %v3399, %v3454
  %v3464 = vmul.f32 %v3400, %v3454
  %v3465 = vmul.f32 %v3401, %v3454
  %v3466 = vmul.f32 %v3402, %v3454
  %v3467 = vmul.f32 %v3403, %v3454
  %v3468 = vmul.f32 %v3404, %v3454
  %v3469 = vmul.f32 %v3405, %v3454
  %v3470 = vmul.f32 %v3406, %v3454
  %v3471 = vmul.f32 %v3407, %v3454
  %v3473 = vlaneseq
  %v3474 = vshrl.u32 %v3473, 7
  %v3475 = vsub.s32 0, %v3474
  %v3476 = vrot.slane %v3369, %v3475
  %v3478 = vadd.f32 %v3456, %v3476
  %v3479 = vadd.f32 %v3457, %v3476
  %v3480 = vadd.f32 %v3458, %v3476
  %v3481 = vadd.f32 %v3459, %v3476
  %v3482 = vadd.f32 %v3460, %v3476
  %v3483 = vadd.f32 %v3461, %v3476
  %v3484 = vadd.f32 %v3462, %v3476
  %v3485 = vadd.f32 %v3463, %v3476
  %v3486 = vadd.f32 %v3464, %v3476
  %v3487 = vadd.f32 %v3465, %v3476
  %v3488 = vadd.f32 %v3466, %v3476
  %v3489 = vadd.f32 %v3467, %v3476
  %v3490 = vadd.f32 %v3468, %v3476
  %v3491 = vadd.f32 %v3469, %v3476
  %v3492 = vadd.f32 %v3470, %v3476
  %v3493 = vadd.f32 %v3471, %v3476
  %v3494 = vld [vmem:[%s10] sm:$0xf]
  %v3495 = vld [vmem:[%s10 + $0x4] sm:$0xf]
  %v3496 = vld [vmem:[%s10 + $0x8] sm:$0xf]
  %v3497 = vld [vmem:[%s10 + $0xc] sm:$0xf]
  %v3498 = vld [vmem:[%s10 + $0x10] sm:$0xf]
  %v3499 = vld [vmem:[%s10 + $0x14] sm:$0xf]
  %v3500 = vld [vmem:[%s10 + $0x18] sm:$0xf]
  %v3501 = vld [vmem:[%s10 + $0x1c] sm:$0xf]
  %v3502 = vld [vmem:[%s10 + $0x20] sm:$0xf]
  %v3503 = vld [vmem:[%s10 + $0x24] sm:$0xf]
  %v3504 = vld [vmem:[%s10 + $0x28] sm:$0xf]
  %v3505 = vld [vmem:[%s10 + $0x2c] sm:$0xf]
  %v3506 = vld [vmem:[%s10 + $0x30] sm:$0xf]
  %v3507 = vld [vmem:[%s10 + $0x34] sm:$0xf]
  %v3508 = vld [vmem:[%s10 + $0x38] sm:$0xf]
  %v3509 = vld [vmem:[%s10 + $0x3c] sm:$0xf]
  %v3510 = vld [vmem:[%s11] sm:$0xf]
  %v3511 = vld [vmem:[%s11 + $0x4] sm:$0xf]
  %v3512 = vld [vmem:[%s11 + $0x8] sm:$0xf]
  %v3513 = vld [vmem:[%s11 + $0xc] sm:$0xf]
  %v3514 = vld [vmem:[%s11 + $0x10] sm:$0xf]
  %v3515 = vld [vmem:[%s11 + $0x14] sm:$0xf]
  %v3516 = vld [vmem:[%s11 + $0x18] sm:$0xf]
  %v3517 = vld [vmem:[%s11 + $0x1c] sm:$0xf]
  %v3534 = vunpack.c.l.b16 %v3494
  %v3535 = vunpack.c.l.b16 %v3495
  %v3536 = vunpack.c.l.b16 %v3496
  %v3537 = vunpack.c.l.b16 %v3497
  %v3538 = vunpack.c.l.b16 %v3498
  %v3539 = vunpack.c.l.b16 %v3499
  %v3540 = vunpack.c.l.b16 %v3500
  %v3541 = vunpack.c.l.b16 %v3501
  %v3542 = vunpack.c.l.b16 %v3502
  %v3543 = vunpack.c.l.b16 %v3503
  %v3544 = vunpack.c.l.b16 %v3504
  %v3545 = vunpack.c.l.b16 %v3505
  %v3546 = vunpack.c.l.b16 %v3506
  %v3547 = vunpack.c.l.b16 %v3507
  %v3548 = vunpack.c.l.b16 %v3508
  %v3549 = vunpack.c.l.b16 %v3509
  %v3550 = vpack.c.b16 %v3535, %v3534
  %v3551 = vpack.c.b16 %v3537, %v3536
  %v3552 = vpack.c.b16 %v3539, %v3538
  %v3553 = vpack.c.b16 %v3541, %v3540
  %v3554 = vpack.c.b16 %v3543, %v3542
  %v3555 = vpack.c.b16 %v3545, %v3544
  %v3556 = vpack.c.b16 %v3547, %v3546
  %v3557 = vpack.c.b16 %v3549, %v3548
  %v3566 = vunpack.c.l.b16 %v3510
  %v3567 = vunpack.c.l.b16 %v3511
  %v3568 = vunpack.c.l.b16 %v3512
  %v3569 = vunpack.c.l.b16 %v3513
  %v3570 = vunpack.c.l.b16 %v3514
  %v3571 = vunpack.c.l.b16 %v3515
  %v3572 = vunpack.c.l.b16 %v3516
  %v3573 = vunpack.c.l.b16 %v3517
  %v3574 = vpack.c.b16 %v3567, %v3566
  %v3575 = vpack.c.b16 %v3569, %v3568
  %v3576 = vpack.c.b16 %v3571, %v3570
  %v3577 = vpack.c.b16 %v3573, %v3572
  %v3583 = vsel %vm728, %v3550, 0
  %v3586 = vsel %vm728, %v3551, 0
  %v3589 = vsel %vm728, %v3552, 0
  %v3592 = vsel %vm728, %v3553, 0
  %v3595 = vsel %vm728, %v3554, 0
  %v3598 = vsel %vm728, %v3555, 0
  %v3601 = vsel %vm728, %v3556, 0
  %v3604 = vsel %vm728, %v3557, 0
  %3606 = vmatprep.subr.bf16.mxu0 0
  %3607 = vmatpush1.bf16.msra.mxu0 0
  %3608 = vmatprep.subr.bf16.mxu0 0
  %3609 = vmatpush1.bf16.msra.mxu0 0
  %3610 = vmatprep.subr.bf16.mxu0 0
  %3611 = vmatpush1.bf16.msra.mxu0 0
  %3612 = vmatprep.subr.bf16.mxu0 0
  %3613 = vmatpush1.bf16.msra.mxu0 0
  %3614 = vmatprep.subr.bf16.mxu0 0
  %3615 = vmatpush1.bf16.msra.mxu0 %v3577
  %3616 = vmatprep.subr.bf16.mxu0 0
  %3617 = vmatpush1.bf16.msra.mxu0 %v3576
  %3618 = vmatprep.subr.bf16.mxu0 0
  %3619 = vmatpush1.bf16.msra.mxu0 %v3575
  %3620 = vmatprep.subr.bf16.mxu0 0
  %3621 = vmatpush1.bf16.msra.mxu0 %v3574
  %3622 = vmatprep.subr.bf16.mxu0 0
  %3623 = vmatpush2.bf16.msra.mxu0 0
  %3624 = vmatprep.subr.bf16.mxu0 0
  %3625 = vmatpush2.bf16.msra.mxu0 0
  %3626 = vmatprep.subr.bf16.mxu0 0
  %3627 = vmatpush2.bf16.msra.mxu0 0
  %3628 = vmatprep.subr.bf16.mxu0 0
  %3629 = vmatpush2.bf16.msra.mxu0 0
  %3630 = vmatprep.subr.bf16.mxu0 0
  %3631 = vmatpush2.bf16.msra.mxu0 0
  %3632 = vmatprep.subr.bf16.mxu0 0
  %3633 = vmatpush2.bf16.msra.mxu0 0
  %3634 = vmatprep.subr.bf16.mxu0 0
  %3635 = vmatpush2.bf16.msra.mxu0 0
  %3636 = vmatprep.subr.bf16.mxu0 0
  %3637 = vmatpush2.bf16.msra.mxu0 0
  %3638 = vmatprep.mubr.bf16.mxu0 0
  %3639 = vmatmul.mubr.bf16.gmra.mxu0 %v3583
  %v3640 = vpop.f32.mrf.mxu0
  %v3641 = vadd.f32 0.0, %v3640
  %v3642 = vpop.f32.mrf.mxu0
  %v3643 = vpop.f32.mrf.mxu0
  %v3644 = vadd.f32 0.0, %v3643
  %v3645 = vpop.f32.mrf.mxu0
  %3646 = vmatprep.mubr.bf16.mxu0 0
  %3647 = vmatmul.mubr.bf16.gmra.mxu0 %v3586
  %v3648 = vpop.f32.mrf.mxu0
  %v3649 = vadd.f32 0.0, %v3648
  %v3650 = vpop.f32.mrf.mxu0
  %v3651 = vpop.f32.mrf.mxu0
  %v3652 = vadd.f32 0.0, %v3651
  %v3653 = vpop.f32.mrf.mxu0
  %3654 = vmatprep.mubr.bf16.mxu0 0
  %3655 = vmatmul.mubr.bf16.gmra.mxu0 %v3589
  %v3656 = vpop.f32.mrf.mxu0
  %v3657 = vadd.f32 0.0, %v3656
  %v3658 = vpop.f32.mrf.mxu0
  %v3659 = vpop.f32.mrf.mxu0
  %v3660 = vadd.f32 0.0, %v3659
  %v3661 = vpop.f32.mrf.mxu0
  %3662 = vmatprep.mubr.bf16.mxu0 0
  %3663 = vmatmul.mubr.bf16.gmra.mxu0 %v3592
  %v3664 = vpop.f32.mrf.mxu0
  %v3665 = vadd.f32 0.0, %v3664
  %v3666 = vpop.f32.mrf.mxu0
  %v3667 = vpop.f32.mrf.mxu0
  %v3668 = vadd.f32 0.0, %v3667
  %v3669 = vpop.f32.mrf.mxu0
  %3670 = vmatprep.mubr.bf16.mxu0 0
  %3671 = vmatmul.mubr.bf16.gmra.mxu0 %v3595
  %v3672 = vpop.f32.mrf.mxu0
  %v3673 = vadd.f32 0.0, %v3672
  %v3674 = vpop.f32.mrf.mxu0
  %v3675 = vpop.f32.mrf.mxu0
  %v3676 = vadd.f32 0.0, %v3675
  %v3677 = vpop.f32.mrf.mxu0
  %3678 = vmatprep.mubr.bf16.mxu0 0
  %3679 = vmatmul.mubr.bf16.gmra.mxu0 %v3598
  %v3680 = vpop.f32.mrf.mxu0
  %v3681 = vadd.f32 0.0, %v3680
  %v3682 = vpop.f32.mrf.mxu0
  %v3683 = vpop.f32.mrf.mxu0
  %v3684 = vadd.f32 0.0, %v3683
  %v3685 = vpop.f32.mrf.mxu0
  %3686 = vmatprep.mubr.bf16.mxu0 0
  %3687 = vmatmul.mubr.bf16.gmra.mxu0 %v3601
  %v3688 = vpop.f32.mrf.mxu0
  %v3689 = vadd.f32 0.0, %v3688
  %v3690 = vpop.f32.mrf.mxu0
  %v3691 = vpop.f32.mrf.mxu0
  %v3692 = vadd.f32 0.0, %v3691
  %v3693 = vpop.f32.mrf.mxu0
  %3694 = vmatprep.mubr.bf16.mxu0 0
  %3695 = vmatmul.mubr.bf16.gmra.mxu0 %v3604
  %v3696 = vpop.f32.mrf.mxu0
  %v3697 = vadd.f32 0.0, %v3696
  %v3698 = vpop.f32.mrf.mxu0
  %v3699 = vpop.f32.mrf.mxu0
  %v3700 = vadd.f32 0.0, %v3699
  %v3701 = vpop.f32.mrf.mxu0
  %3702 = vdwg.mxu0
  %v3703 = vld [vmem:[%s12] sm:$0x1]
  %v3704 = vld [vmem:[%s13] sm:$0x1]
  %v3705 = vadd.f32 %v3641, %v3644
  %v3706 = vadd.f32 %v3705, %v3649
  %v3707 = vadd.f32 %v3706, %v3652
  %v3708 = vadd.f32 %v3707, %v3657
  %v3709 = vadd.f32 %v3708, %v3660
  %v3710 = vadd.f32 %v3709, %v3665
  %v3711 = vadd.f32 %v3710, %v3668
  %v3712 = vadd.f32 %v3711, %v3673
  %v3713 = vadd.f32 %v3712, %v3676
  %v3714 = vadd.f32 %v3713, %v3681
  %v3715 = vadd.f32 %v3714, %v3684
  %v3716 = vadd.f32 %v3715, %v3689
  %v3717 = vadd.f32 %v3716, %v3692
  %v3718 = vadd.f32 %v3717, %v3697
  %v3719 = vadd.f32 %v3718, %v3700
  %v3720 = vrot.slane %v3719, 4
  %v3721 = vadd.f32 %v3719, %v3720
  %v3722 = vrot.slane %v3721, 2
  %v3723 = vadd.f32 %v3721, %v3722
  %v3724 = vrot.slane %v3723, 1
  %v3725 = vadd.f32 %v3723, %v3724
  %v3726 = vmul.f32 %v3725, %v1693
  %v3727 = vsub.f32 %v3641, %v3726
  %v3728 = vsub.f32 %v3644, %v3726
  %v3729 = vsub.f32 %v3649, %v3726
  %v3730 = vsub.f32 %v3652, %v3726
  %v3731 = vsub.f32 %v3657, %v3726
  %v3732 = vsub.f32 %v3660, %v3726
  %v3733 = vsub.f32 %v3665, %v3726
  %v3734 = vsub.f32 %v3668, %v3726
  %v3735 = vsub.f32 %v3673, %v3726
  %v3736 = vsub.f32 %v3676, %v3726
  %v3737 = vsub.f32 %v3681, %v3726
  %v3738 = vsub.f32 %v3684, %v3726
  %v3739 = vsub.f32 %v3689, %v3726
  %v3740 = vsub.f32 %v3692, %v3726
  %v3741 = vsub.f32 %v3697, %v3726
  %v3742 = vsub.f32 %v3700, %v3726
  %v3743 = vmul.f32 %v3727, %v3727
  %v3744 = vmul.f32 %v3728, %v3728
  %v3745 = vmul.f32 %v3729, %v3729
  %v3746 = vmul.f32 %v3730, %v3730
  %v3747 = vmul.f32 %v3731, %v3731
  %v3748 = vmul.f32 %v3732, %v3732
  %v3749 = vmul.f32 %v3733, %v3733
  %v3750 = vmul.f32 %v3734, %v3734
  %v3751 = vmul.f32 %v3735, %v3735
  %v3752 = vmul.f32 %v3736, %v3736
  %v3753 = vmul.f32 %v3737, %v3737
  %v3754 = vmul.f32 %v3738, %v3738
  %v3755 = vmul.f32 %v3739, %v3739
  %v3756 = vmul.f32 %v3740, %v3740
  %v3757 = vmul.f32 %v3741, %v3741
  %v3758 = vmul.f32 %v3742, %v3742
  %v3759 = vadd.f32 %v3743, %v3744
  %v3760 = vadd.f32 %v3759, %v3745
  %v3761 = vadd.f32 %v3760, %v3746
  %v3762 = vadd.f32 %v3761, %v3747
  %v3763 = vadd.f32 %v3762, %v3748
  %v3764 = vadd.f32 %v3763, %v3749
  %v3765 = vadd.f32 %v3764, %v3750
  %v3766 = vadd.f32 %v3765, %v3751
  %v3767 = vadd.f32 %v3766, %v3752
  %v3768 = vadd.f32 %v3767, %v3753
  %v3769 = vadd.f32 %v3768, %v3754
  %v3770 = vadd.f32 %v3769, %v3755
  %v3771 = vadd.f32 %v3770, %v3756
  %v3772 = vadd.f32 %v3771, %v3757
  %v3773 = vadd.f32 %v3772, %v3758
  %v3774 = vrot.slane %v3773, 4
  %v3775 = vadd.f32 %v3773, %v3774
  %v3776 = vrot.slane %v3775, 2
  %v3777 = vadd.f32 %v3775, %v3776
  %v3778 = vrot.slane %v3777, 1
  %v3779 = vadd.f32 %v3777, %v3778
  %v3780 = vmul.f32 %v3779, %v1693
  %v3781 = vmax.f32 %v3780, 0.0
  %v3782 = vadd.f32 %v3781, 1e-05
  %v3783 = vrsqrt.pop %v3782
  %v3784 = vmul.f32 %v3703, %v3783
  %v3786 = vlaneseq
  %v3787 = vshrl.u32 %v3786, 7
  %v3788 = vsub.s32 0, %v3787
  %v3789 = vrot.slane %v3784, %v3788
  %v3791 = vmul.f32 %v3727, %v3789
  %v3792 = vmul.f32 %v3728, %v3789
  %v3793 = vmul.f32 %v3729, %v3789
  %v3794 = vmul.f32 %v3730, %v3789
  %v3795 = vmul.f32 %v3731, %v3789
  %v3796 = vmul.f32 %v3732, %v3789
  %v3797 = vmul.f32 %v3733, %v3789
  %v3798 = vmul.f32 %v3734, %v3789
  %v3799 = vmul.f32 %v3735, %v3789
  %v3800 = vmul.f32 %v3736, %v3789
  %v3801 = vmul.f32 %v3737, %v3789
  %v3802 = vmul.f32 %v3738, %v3789
  %v3803 = vmul.f32 %v3739, %v3789
  %v3804 = vmul.f32 %v3740, %v3789
  %v3805 = vmul.f32 %v3741, %v3789
  %v3806 = vmul.f32 %v3742, %v3789
  %v3808 = vlaneseq
  %v3809 = vshrl.u32 %v3808, 7
  %v3810 = vsub.s32 0, %v3809
  %v3811 = vrot.slane %v3704, %v3810
  %v3813 = vadd.f32 %v3791, %v3811
  %v3814 = vadd.f32 %v3792, %v3811
  %v3815 = vadd.f32 %v3793, %v3811
  %v3816 = vadd.f32 %v3794, %v3811
  %v3817 = vadd.f32 %v3795, %v3811
  %v3818 = vadd.f32 %v3796, %v3811
  %v3819 = vadd.f32 %v3797, %v3811
  %v3820 = vadd.f32 %v3798, %v3811
  %v3821 = vadd.f32 %v3799, %v3811
  %v3822 = vadd.f32 %v3800, %v3811
  %v3823 = vadd.f32 %v3801, %v3811
  %v3824 = vadd.f32 %v3802, %v3811
  %v3825 = vadd.f32 %v3803, %v3811
  %v3826 = vadd.f32 %v3804, %v3811
  %v3827 = vadd.f32 %v3805, %v3811
  %v3828 = vadd.f32 %v3806, %v3811
  %v3829 = vadd.f32 %v3478, %v3813
  %v3830 = vadd.f32 %v3479, %v3814
  %v3831 = vadd.f32 %v3480, %v3815
  %v3832 = vadd.f32 %v3481, %v3816
  %v3833 = vadd.f32 %v3482, %v3817
  %v3834 = vadd.f32 %v3483, %v3818
  %v3835 = vadd.f32 %v3484, %v3819
  %v3836 = vadd.f32 %v3485, %v3820
  %v3837 = vadd.f32 %v3486, %v3821
  %v3838 = vadd.f32 %v3487, %v3822
  %v3839 = vadd.f32 %v3488, %v3823
  %v3840 = vadd.f32 %v3489, %v3824
  %v3841 = vadd.f32 %v3490, %v3825
  %v3842 = vadd.f32 %v3491, %v3826
  %v3843 = vadd.f32 %v3492, %v3827
  %v3844 = vadd.f32 %v3493, %v3828
  %v3845 = vmax.f32 %v3829, 0.0
  %v3846 = vmax.f32 %v3830, 0.0
  %v3847 = vmax.f32 %v3831, 0.0
  %v3848 = vmax.f32 %v3832, 0.0
  %v3849 = vmax.f32 %v3833, 0.0
  %v3850 = vmax.f32 %v3834, 0.0
  %v3851 = vmax.f32 %v3835, 0.0
  %v3852 = vmax.f32 %v3836, 0.0
  %v3853 = vmax.f32 %v3837, 0.0
  %v3854 = vmax.f32 %v3838, 0.0
  %v3855 = vmax.f32 %v3839, 0.0
  %v3856 = vmax.f32 %v3840, 0.0
  %v3857 = vmax.f32 %v3841, 0.0
  %v3858 = vmax.f32 %v3842, 0.0
  %v3859 = vmax.f32 %v3843, 0.0
  %v3860 = vmax.f32 %v3844, 0.0
  %3861 = vst [vmem:[%s14] sm:$0xff] %v3845
  %3862 = vst [vmem:[%s14 + $0x8] sm:$0xff] %v3846
  %3863 = vst [vmem:[%s14 + $0x10] sm:$0xff] %v3847
  %3864 = vst [vmem:[%s14 + $0x18] sm:$0xff] %v3848
  %3865 = vst [vmem:[%s14 + $0x20] sm:$0xff] %v3849
  %3866 = vst [vmem:[%s14 + $0x28] sm:$0xff] %v3850
  %3867 = vst [vmem:[%s14 + $0x30] sm:$0xff] %v3851
  %3868 = vst [vmem:[%s14 + $0x38] sm:$0xff] %v3852
  %3869 = vst [vmem:[%s14 + $0x40] sm:$0xff] %v3853
  %3870 = vst [vmem:[%s14 + $0x48] sm:$0xff] %v3854
  %3871 = vst [vmem:[%s14 + $0x50] sm:$0xff] %v3855
  %3872 = vst [vmem:[%s14 + $0x58] sm:$0xff] %v3856
  %3873 = vst [vmem:[%s14 + $0x60] sm:$0xff] %v3857
  %3874 = vst [vmem:[%s14 + $0x68] sm:$0xff] %v3858
  %3875 = vst [vmem:[%s14 + $0x70] sm:$0xff] %v3859
  %3876 = vst [vmem:[%s14 + $0x78] sm:$0xff] %v3860
  // Predicated region
  $region58: #{forward.2} parent=0 // pred_check
    _
  $region59: #{forward.2} parent=0 // pred_check_branch
    %3878 = sbr.rel (0) target = $region61
  $region60: #{forward.2} parent=0 // pred_region
    _
  $region61: #{forward.2} parent=0 // pred_fallthru
    _
  // Predicated region
  $region62: #{forward.2} parent=0 // pred_check
    _
  $region63: #{forward.2} parent=0 // pred_check_branch
    %3880 = sbr.rel (0) target = $region65
  $region64: #{forward.2} parent=0 // pred_region
    _
  $region65: #{forward.2} parent=0 // pred_fallthru
    _

</llo_original>
